<compile_context>
chip_gen: v7x
topology: tpu7x:2x2x1
jax: 0.10.0
libtpu: 0.0.40
codegen_flags: <defaults>
</compile_context>

<pallas_src>
import functools

import jax
import jax.numpy as jnp
import numpy as np
from jax.experimental import pallas as pl
from jax.experimental.pallas import tpu as pltpu


# ----------------------------------------------------------------------------------
# Kernel
# ----------------------------------------------------------------------------------
def td_resblock_kernel(x_ref, wx_ref, wy_ref, w3_ref, b1_ref, b2_ref, b3_ref,
                       out_ref, xpad_ref, y1pad_ref, res_ref, *, s):
    # x_ref   : (Cin, L)            one sample, lane = t*s + spatial (native NCTHW order)
    # wx_ref  : (4*Cout, Cin)       [conv1 tap(t-2); tap(t); tap(t+2); 1x1 shortcut] (BN-scaled)
    # wy_ref  : (3*Cout, Cout)      [conv2 tap(t-1); tap(t); tap(t+1)]               (BN-scaled)
    # w3_ref  : (Cout, Cout)        conv3 (BN-scaled)
    # b*_ref  : (Cout, 1) f32       remaining per-channel shifts (BN shift + conv bias)
    # xpad_ref: (Cin, (T+4)*s)      x zero-padded by 2 frames per side       (compute dtype)
    # y1pad_ref:(Cout,(T+2)*s)      y1 zero-padded by 1 frame per side       (compute dtype)
    # res_ref : (Cout, L) f32       shortcut stash (lets the conv1 result die early)
    Cout, L = out_ref.shape
    T = L // s
    Cin = xpad_ref.shape[0]
    cdt = x_ref.dtype                              # MXU operand dtype (bf16 or f32)
    f32 = jnp.float32

    # ---- stage x into the 2-frame padded slab: taps become pure static slices ----
    xpad_ref[:, :2 * s] = jnp.zeros((Cin, 2 * s), cdt)
    xpad_ref[:, (T + 2) * s:(T + 4) * s] = jnp.zeros((Cin, 2 * s), cdt)
    xpad_ref[:, 2 * s:(T + 2) * s] = x_ref[...]

    # ---- conv1 (TD weights, kT=3, dilation=2, pad=2) + 1x1 shortcut: ONE MXU pass ----
    zx = jnp.dot(wx_ref[...], xpad_ref[...],
                 preferred_element_type=f32)                      # (4*Cout, (T+4)*s)
    res_ref[...] = zx[3 * Cout:4 * Cout, 2 * s:2 * s + L]         # shortcut; zx can now die
    y1 = jnp.maximum(
        zx[0 * Cout:1 * Cout, 0:L]                                # x[t-2] tap
        + zx[1 * Cout:2 * Cout, 2 * s:2 * s + L]                  # x[t]   tap
        + zx[2 * Cout:3 * Cout, 4 * s:4 * s + L]                  # x[t+2] tap
        + b1_ref[...], 0.0)

    # ---- conv2 (kT=3, dilation=1, pad=1): y1 staged into 1-frame padded slab ----
    y1pad_ref[:, :s] = jnp.zeros((Cout, s), cdt)
    y1pad_ref[:, (T + 1) * s:(T + 2) * s] = jnp.zeros((Cout, s), cdt)
    y1pad_ref[:, s:(T + 1) * s] = y1.astype(cdt)
    zy = jnp.dot(wy_ref[...], y1pad_ref[...],
                 preferred_element_type=f32)                      # (3*Cout, (T+2)*s)
    y2 = jnp.maximum(
        zy[0 * Cout:1 * Cout, 0:L]                                # y1[t-1] tap
        + zy[1 * Cout:2 * Cout, s:s + L]                          # y1[t]   tap
        + zy[2 * Cout:3 * Cout, 2 * s:2 * s + L]                  # y1[t+1] tap
        + b2_ref[...], 0.0)

    # ---- conv3 (1x1) + bn3 + residual add + final ReLU ----
    y3 = jnp.dot(w3_ref[...], y2.astype(cdt), preferred_element_type=f32)
    out_ref[...] = jnp.maximum(y3 + res_ref[...] + b3_ref[...], 0.0).astype(out_ref.dtype)


# ----------------------------------------------------------------------------------
# Wrapper
# ----------------------------------------------------------------------------------
def td_resblock(x, params, *, compute_dtype=jnp.bfloat16, out_dtype=None):
    """x: (N, Cin, T, H, W) PyTorch NCTHW layout.  Returns (N, Cout, T, H, W)."""
    if out_dtype is None:
        out_dtype = compute_dtype
    N, Cin, T, H, W = x.shape
    s = H * W
    L = T * s
    Cout = params['W3'].shape[0]

    # Free views: (T, H, W) is contiguous per (n, c), so no HBM relayout is performed.
    x_flat = x.reshape(N, Cin, L)
    if x_flat.dtype != compute_dtype:
        # TODO(synk): in a real model the producer should already emit compute_dtype.
        x_flat = x_flat.astype(compute_dtype)

    bpe_c = np.dtype(compute_dtype).itemsize
    bpe_o = np.dtype(out_dtype).itemsize
    weight_bytes = sum(int(v.size) * v.dtype.itemsize for v in params.values())

    # --- honest per-step VMEM need (double-buffered blocks, scratch, f32 intermediates) ---
    Lp1, Lp2 = (T + 4) * s, (T + 2) * s
    vmem_need = (
        2 * Cin * L * bpe_c                      # input blocks (double-buffered)
        + 2 * Cout * L * bpe_o                   # output blocks (double-buffered)
        + 2 * weight_bytes                       # resident weights / biases
        + Cin * Lp1 * bpe_c                      # padded-x scratch
        + Cout * Lp2 * bpe_c                     # padded-y1 scratch
        + Cout * L * 4                           # shortcut stash
        + 4 * (4 * Cout * Lp1 + 3 * Cout * Lp2 + 3 * Cout * L)  # zx, zy, y1/y2/y3 peak
    )
    try:
        phys_vmem = int(pltpu.get_tpu_info().vmem_capacity_bytes)
    except Exception:
        phys_vmem = 64 << 20                     # conservative default = v7x per-core VMEM
    vmem_cap = (phys_vmem * 3) // 4              # headroom for compiler scratch
    vmem_limit = int(min(vmem_cap, max(32 << 20, vmem_need + vmem_need // 4)))

    P = N * L                                    # output positions = N*T*H*W
    cost = pl.CostEstimate(
        flops=int(2 * P * Cout * (4 * Cin + 3 * Cout + Cout)),
        transcendentals=0,
        bytes_accessed=int(P * Cin * bpe_c + P * Cout * bpe_o + weight_bytes))

    def full2d(shape):
        return pl.BlockSpec(shape, lambda n: (0, 0))

    out_flat = pl.pallas_call(
        functools.partial(td_resblock_kernel, s=s),
        out_shape=jax.ShapeDtypeStruct((N, Cout, L), out_dtype),
        grid=(N,),
        in_specs=[
            pl.BlockSpec((None, Cin, L), lambda n: (n, 0, 0)),   # native-order sample slab
            full2d(params['Wx'].shape),
            full2d(params['Wy'].shape),
            full2d(params['W3'].shape),
            full2d(params['b1'].shape),
            full2d(params['b2'].shape),
            full2d(params['b3s'].shape),
        ],
        out_specs=pl.BlockSpec((None, Cout, L), lambda n: (n, 0, 0)),
        scratch_shapes=[
            pltpu.VMEM((Cin, Lp1), compute_dtype),    # padded x
            pltpu.VMEM((Cout, Lp2), compute_dtype),   # padded y1
            pltpu.VMEM((Cout, L), jnp.float32),       # shortcut stash
        ],
        compiler_params=pltpu.CompilerParams(
            dimension_semantics=("parallel",),
            vmem_limit_bytes=vmem_limit),
        cost_estimate=cost,
    )(x_flat, params['Wx'], params['Wy'], params['W3'],
      params['b1'], params['b2'], params['b3s'])

    return out_flat.reshape(N, Cout, T, H, W)    # free view back to NCTHW


# ----------------------------------------------------------------------------------
# Parameters: raw PyTorch-style params and BN-folded kernel params
# ----------------------------------------------------------------------------------
def make_raw_params(key, Cin, Cout):
    ks = jax.random.split(key, 12)

    def u(k, shape, lo=-0.3, hi=0.3):
        return jax.random.uniform(k, shape, jnp.float32, lo, hi)

    def bn(k):  # (gamma, beta, running_mean, running_var)
        kk = jax.random.split(k, 4)
        return (jax.random.uniform(kk[0], (Cout,), jnp.float32, 0.5, 1.5),
                u(kk[1], (Cout,)),
                u(kk[2], (Cout,), -0.1, 0.1),
                jax.random.uniform(kk[3], (Cout,), jnp.float32, 0.5, 1.5))

    return {
        'w1': u(ks[0], (Cout, Cin, 3)),  'b1': u(ks[1], (Cout,)),
        'w2': u(ks[2], (Cout, Cout, 3)), 'b2': u(ks[3], (Cout,)),
        'w3': u(ks[4], (Cout, Cout)),    'b3': u(ks[5], (Cout,)),
        'ws': u(ks[6], (Cout, Cin)),     'bs': u(ks[7], (Cout,)),
        'bn1': bn(ks[8]), 'bn2': bn(ks[9]), 'bn3': bn(ks[10]), 'bns': bn(ks[11]),
    }


def fuse_params(raw, *, eps=1e-5, compute_dtype=jnp.bfloat16):
    """Fold eval-mode BN scales into conv weights; produce stacked kernel weights."""
    def bn_fold(p):
        g, b, m, v = p
        scale = g / jnp.sqrt(v + eps)
        return scale, b - m * scale

    s1, t1 = bn_fold(raw['bn1'])
    s2, t2 = bn_fold(raw['bn2'])
    s3, t3 = bn_fold(raw['bn3'])
    ss, ts = bn_fold(raw['bns'])

    w1 = raw['w1']                                        # (Cout, Cin, 3)
    # TDifferenceConv weight transform (kT = 3)
    w1_td = jnp.stack([w1[..., 0] - w1[..., 1],
                       2.0 * w1[..., 1] - w1[..., 0] - w1[..., 2],
                       w1[..., 2] - w1[..., 1]], axis=0)  # (3, Cout, Cin)
    w2 = jnp.transpose(raw['w2'], (2, 0, 1))              # (3, Cout, Cout)

    Cout = w1.shape[0]
    Wx = jnp.concatenate([s1[None, :, None] * w1_td,
                          (ss[:, None] * raw['ws'])[None]], axis=0).reshape(4 * Cout, -1)
    Wy = (s2[None, :, None] * w2).reshape(3 * Cout, Cout)
    W3 = s3[:, None] * raw['w3']

    b1 = (s1 * raw['b1'] + t1).reshape(Cout, 1)
    b2 = (s2 * raw['b2'] + t2).reshape(Cout, 1)
    b3s = (s3 * raw['b3'] + t3 + ss * raw['bs'] + ts).reshape(Cout, 1)

    return {'Wx': Wx.astype(compute_dtype), 'Wy': Wy.astype(compute_dtype),
            'W3': W3.astype(compute_dtype),
            'b1': b1.astype(jnp.float32), 'b2': b2.astype(jnp.float32),
            'b3s': b3s.astype(jnp.float32)}


# ----------------------------------------------------------------------------------
# Independent pure-JAX reference (module math directly from raw params, eval-mode BN)
# ----------------------------------------------------------------------------------
def ref_forward(x, raw, *, eps=1e-5):
    def bn(z, p):
        g, b, m, v = p
        inv = (g / jnp.sqrt(v + eps))[None, :, None, None, None]
        return (z - m[None, :, None, None, None]) * inv + b[None, :, None, None, None]

    def td_weight(w):   # TDifferenceConv.forward weight transform for kT=3
        return jnp.stack([2 * w[..., t] - w[..., min(t + 1, 2)] - w[..., max(t - 1, 0)]
                          for t in range(3)], axis=-1)

    def tconv(z, w, b, pad, dil):   # kernel (3,1,1): temporal-only conv
        T_ = z.shape[2]
        zp = jnp.pad(z, ((0, 0), (0, 0), (pad, pad), (0, 0), (0, 0)))
        out = sum(jnp.einsum('oc,ncthw->nothw', w[..., k], zp[:, :, k * dil:k * dil + T_],
                             precision=jax.lax.Precision.HIGHEST) for k in range(3))
        return out + b[None, :, None, None, None]

    def conv1x1(z, w, b):
        return (jnp.einsum('oc,ncthw->nothw', w, z, precision=jax.lax.Precision.HIGHEST)
                + b[None, :, None, None, None])

    y = jnp.maximum(bn(tconv(x, td_weight(raw['w1']), raw['b1'], pad=2, dil=2), raw['bn1']), 0.0)
    y = jnp.maximum(bn(tconv(y, raw['w2'], raw['b2'], pad=1, dil=1), raw['bn2']), 0.0)
    y = bn(conv1x1(y, raw['w3'], raw['b3']), raw['bn3'])
    res = bn(conv1x1(x, raw['ws'], raw['bs']), raw['bns'])
    return jnp.maximum(y + res, 0.0)


# ----------------------------------------------------------------------------------
if __name__ == "__main__":
    key = jax.random.PRNGKey(0)
    kx, kp = jax.random.split(key)

    # Small shapes consistent with the module (toy; production uses Cin/Cout >= 64).
    N, Cin, Cout, T, H, W = 2, 4, 8, 8, 16, 16
    x = jax.random.normal(kx, (N, Cin, T, H, W), jnp.float32)
    raw = make_raw_params(kp, Cin, Cout)
    ref = np.asarray(jax.block_until_ready(ref_forward(x, raw)))

    # f32 datapath: tight validation of the fused-block semantics vs the module math.
    p32 = fuse_params(raw, compute_dtype=jnp.float32)
    out32 = jax.block_until_ready(
        td_resblock(x, p32, compute_dtype=jnp.float32, out_dtype=jnp.float32))
    assert out32.shape == (N, Cout, T, H, W)
    np.testing.assert_allclose(np.asarray(out32), ref, rtol=1e-4, atol=1e-4)

    # bf16 MXU datapath (production default): halved HBM streams, native MXU rate.
    pbf = fuse_params(raw, compute_dtype=jnp.bfloat16)
    outbf = jax.block_until_ready(
        td_resblock(x, pbf, compute_dtype=jnp.bfloat16, out_dtype=jnp.bfloat16))
    tol = 3e-2 * float(np.max(np.abs(ref))) + 1e-2
    np.testing.assert_allclose(np.asarray(outbf.astype(jnp.float32)), ref, atol=tol, rtol=0)

    print("KERNEL_OK")
</pallas_src>

<mosaic_0001>
module attributes {stable_mosaic.version = 11 : i64} {
  func.func @td_resblock_kernel(%arg0: i32, %arg1: memref<1x4x2048xf32, #tpu.memory_space<vmem>>, %arg2: memref<32x4xf32, #tpu.memory_space<vmem>>, %arg3: memref<24x8xf32, #tpu.memory_space<vmem>>, %arg4: memref<8x8xf32, #tpu.memory_space<vmem>>, %arg5: memref<8x1xf32, #tpu.memory_space<vmem>>, %arg6: memref<8x1xf32, #tpu.memory_space<vmem>>, %arg7: memref<8x1xf32, #tpu.memory_space<vmem>>, %arg8: memref<1x8x2048xf32, #tpu.memory_space<vmem>>, %arg9: memref<4x3072xf32, #tpu.memory_space<vmem>>, %arg10: memref<8x2560xf32, #tpu.memory_space<vmem>>, %arg11: memref<8x2048xf32, #tpu.memory_space<vmem>>) attributes {dimension_semantics = [#tpu.dimension_semantics<parallel>], iteration_bounds = array<i64: 2>, scalar_prefetch = 0 : i64, scratch_operands = 3 : i64, tpu.core_type = #tpu.core_type<tc>, window_params = [{transform_indices = @transform_0, window_bounds = array<i64: 1, 4, 2048>}, {pipeline_mode = #tpu.pipeline_mode<synchronous>, transform_indices = @transform_1, window_bounds = array<i64: 32, 4>}, {pipeline_mode = #tpu.pipeline_mode<synchronous>, transform_indices = @transform_2, window_bounds = array<i64: 24, 8>}, {pipeline_mode = #tpu.pipeline_mode<synchronous>, transform_indices = @transform_3, window_bounds = array<i64: 8, 8>}, {pipeline_mode = #tpu.pipeline_mode<synchronous>, transform_indices = @transform_4, window_bounds = array<i64: 8, 1>}, {pipeline_mode = #tpu.pipeline_mode<synchronous>, transform_indices = @transform_5, window_bounds = array<i64: 8, 1>}, {pipeline_mode = #tpu.pipeline_mode<synchronous>, transform_indices = @transform_6, window_bounds = array<i64: 8, 1>}, {transform_indices = @transform_7, window_bounds = array<i64: 1, 8, 2048>}]} {
    %cst = arith.constant 0.000000e+00 : f32
    %0 = vector.broadcast %cst : f32 to vector<4x512xf32>
    %c0 = arith.constant 0 : index
    %c0_0 = arith.constant 0 : index
    %1 = vector.load %arg9[%c0, %c0_0] : memref<4x3072xf32, #tpu.memory_space<vmem>>, vector<4x512xf32>
    tpu.vector_store %arg9[%c0, %c0_0], %0 {strides = array<i32>} : memref<4x3072xf32, #tpu.memory_space<vmem>>, vector<4x512xf32>,
    %cst_1 = arith.constant 0.000000e+00 : f32
    %2 = vector.broadcast %cst_1 : f32 to vector<4x512xf32>
    %c0_2 = arith.constant 0 : index
    %c2560 = arith.constant 2560 : index
    %3 = vector.load %arg9[%c0_2, %c2560] : memref<4x3072xf32, #tpu.memory_space<vmem>>, vector<4x512xf32>
    tpu.vector_store %arg9[%c0_2, %c2560], %2 {strides = array<i32>} : memref<4x3072xf32, #tpu.memory_space<vmem>>, vector<4x512xf32>,
    %c0_3 = arith.constant 0 : index
    %c0_4 = arith.constant 0 : index
    %c0_5 = arith.constant 0 : index
    %4 = vector.load %arg1[%c0_3, %c0_4, %c0_5] : memref<1x4x2048xf32, #tpu.memory_space<vmem>>, vector<1x4x2048xf32>
    %5 = vector.shape_cast %4 : vector<1x4x2048xf32> to vector<4x2048xf32>
    %c0_6 = arith.constant 0 : index
    %c512 = arith.constant 512 : index
    %6 = vector.load %arg9[%c0_6, %c512] : memref<4x3072xf32, #tpu.memory_space<vmem>>, vector<4x2048xf32>
    tpu.vector_store %arg9[%c0_6, %c512], %5 {strides = array<i32>} : memref<4x3072xf32, #tpu.memory_space<vmem>>, vector<4x2048xf32>,
    %c0_7 = arith.constant 0 : index
    %c0_8 = arith.constant 0 : index
    %7 = vector.load %arg2[%c0_7, %c0_8] : memref<32x4xf32, #tpu.memory_space<vmem>>, vector<32x4xf32>
    %c0_9 = arith.constant 0 : index
    %c0_10 = arith.constant 0 : index
    %8 = vector.load %arg9[%c0_9, %c0_10] : memref<4x3072xf32, #tpu.memory_space<vmem>>, vector<4x3072xf32>
    %cst_11 = arith.constant dense<0.000000e+00> : vector<32x3072xf32>
    %9 = tpu.matmul %7, %8, %cst_11 {dimension_numbers = #tpu.dot_dimension_numbers<[1], [0], [0], [1], [0, 0, 1, 1], [], []>} : vector<32x4xf32>, vector<4x3072xf32>, vector<32x3072xf32> -> vector<32x3072xf32>
    %10 = vector.extract_strided_slice %9 {offsets = [24, 512], sizes = [8, 2048], strides = [1, 1]} : vector<32x3072xf32> to vector<8x2048xf32>
    %c0_12 = arith.constant 0 : index
    %c0_13 = arith.constant 0 : index
    %11 = vector.load %arg11[%c0_12, %c0_13] : memref<8x2048xf32, #tpu.memory_space<vmem>>, vector<8x2048xf32>
    tpu.vector_store %arg11[%c0_12, %c0_13], %10 {strides = array<i32>} : memref<8x2048xf32, #tpu.memory_space<vmem>>, vector<8x2048xf32>,
    %12 = vector.extract_strided_slice %9 {offsets = [0, 0], sizes = [8, 2048], strides = [1, 1]} : vector<32x3072xf32> to vector<8x2048xf32>
    %13 = vector.extract_strided_slice %9 {offsets = [8, 512], sizes = [8, 2048], strides = [1, 1]} : vector<32x3072xf32> to vector<8x2048xf32>
    %14 = arith.addf %12, %13 : vector<8x2048xf32>
    %15 = vector.extract_strided_slice %9 {offsets = [16, 1024], sizes = [8, 2048], strides = [1, 1]} : vector<32x3072xf32> to vector<8x2048xf32>
    %16 = arith.addf %14, %15 : vector<8x2048xf32>
    %c0_14 = arith.constant 0 : index
    %c0_15 = arith.constant 0 : index
    %17 = vector.load %arg5[%c0_14, %c0_15] : memref<8x1xf32, #tpu.memory_space<vmem>>, vector<8x1xf32>
    %18 = vector.broadcast %17 : vector<8x1xf32> to vector<8x2048xf32>
    %19 = arith.addf %16, %18 : vector<8x2048xf32>
    %cst_16 = arith.constant 0.000000e+00 : f32
    %20 = vector.broadcast %cst_16 : f32 to vector<8x2048xf32>
    %21 = arith.maximumf %19, %20 : vector<8x2048xf32>
    %cst_17 = arith.constant 0.000000e+00 : f32
    %22 = vector.broadcast %cst_17 : f32 to vector<8x256xf32>
    %c0_18 = arith.constant 0 : index
    %c0_19 = arith.constant 0 : index
    %23 = vector.load %arg10[%c0_18, %c0_19] : memref<8x2560xf32, #tpu.memory_space<vmem>>, vector<8x256xf32>
    tpu.vector_store %arg10[%c0_18, %c0_19], %22 {strides = array<i32>} : memref<8x2560xf32, #tpu.memory_space<vmem>>, vector<8x256xf32>,
    %cst_20 = arith.constant 0.000000e+00 : f32
    %24 = vector.broadcast %cst_20 : f32 to vector<8x256xf32>
    %c0_21 = arith.constant 0 : index
    %c2304 = arith.constant 2304 : index
    %25 = vector.load %arg10[%c0_21, %c2304] : memref<8x2560xf32, #tpu.memory_space<vmem>>, vector<8x256xf32>
    tpu.vector_store %arg10[%c0_21, %c2304], %24 {strides = array<i32>} : memref<8x2560xf32, #tpu.memory_space<vmem>>, vector<8x256xf32>,
    %c0_22 = arith.constant 0 : index
    %c256 = arith.constant 256 : index
    %26 = vector.load %arg10[%c0_22, %c256] : memref<8x2560xf32, #tpu.memory_space<vmem>>, vector<8x2048xf32>
    tpu.vector_store %arg10[%c0_22, %c256], %21 {strides = array<i32>} : memref<8x2560xf32, #tpu.memory_space<vmem>>, vector<8x2048xf32>,
    %c0_23 = arith.constant 0 : index
    %c0_24 = arith.constant 0 : index
    %27 = vector.load %arg3[%c0_23, %c0_24] : memref<24x8xf32, #tpu.memory_space<vmem>>, vector<24x8xf32>
    %c0_25 = arith.constant 0 : index
    %c0_26 = arith.constant 0 : index
    %28 = vector.load %arg10[%c0_25, %c0_26] : memref<8x2560xf32, #tpu.memory_space<vmem>>, vector<8x2560xf32>
    %cst_27 = arith.constant dense<0.000000e+00> : vector<24x2560xf32>
    %29 = tpu.matmul %27, %28, %cst_27 {dimension_numbers = #tpu.dot_dimension_numbers<[1], [0], [0], [1], [0, 0, 1, 1], [], []>} : vector<24x8xf32>, vector<8x2560xf32>, vector<24x2560xf32> -> vector<24x2560xf32>
    %30 = vector.extract_strided_slice %29 {offsets = [0, 0], sizes = [8, 2048], strides = [1, 1]} : vector<24x2560xf32> to vector<8x2048xf32>
    %31 = vector.extract_strided_slice %29 {offsets = [8, 256], sizes = [8, 2048], strides = [1, 1]} : vector<24x2560xf32> to vector<8x2048xf32>
    %32 = arith.addf %30, %31 : vector<8x2048xf32>
    %33 = vector.extract_strided_slice %29 {offsets = [16, 512], sizes = [8, 2048], strides = [1, 1]} : vector<24x2560xf32> to vector<8x2048xf32>
    %34 = arith.addf %32, %33 : vector<8x2048xf32>
    %c0_28 = arith.constant 0 : index
    %c0_29 = arith.constant 0 : index
    %35 = vector.load %arg6[%c0_28, %c0_29] : memref<8x1xf32, #tpu.memory_space<vmem>>, vector<8x1xf32>
    %36 = vector.broadcast %35 : vector<8x1xf32> to vector<8x2048xf32>
    %37 = arith.addf %34, %36 : vector<8x2048xf32>
    %cst_30 = arith.constant 0.000000e+00 : f32
    %38 = vector.broadcast %cst_30 : f32 to vector<8x2048xf32>
    %39 = arith.maximumf %37, %38 : vector<8x2048xf32>
    %c0_31 = arith.constant 0 : index
    %c0_32 = arith.constant 0 : index
    %40 = vector.load %arg4[%c0_31, %c0_32] : memref<8x8xf32, #tpu.memory_space<vmem>>, vector<8x8xf32>
    %cst_33 = arith.constant dense<0.000000e+00> : vector<8x2048xf32>
    %41 = tpu.matmul %40, %39, %cst_33 {dimension_numbers = #tpu.dot_dimension_numbers<[1], [0], [0], [1], [0, 0, 1, 1], [], []>} : vector<8x8xf32>, vector<8x2048xf32>, vector<8x2048xf32> -> vector<8x2048xf32>
    %c0_34 = arith.constant 0 : index
    %c0_35 = arith.constant 0 : index
    %42 = vector.load %arg11[%c0_34, %c0_35] : memref<8x2048xf32, #tpu.memory_space<vmem>>, vector<8x2048xf32>
    %43 = arith.addf %41, %42 : vector<8x2048xf32>
    %c0_36 = arith.constant 0 : index
    %c0_37 = arith.constant 0 : index
    %44 = vector.load %arg7[%c0_36, %c0_37] : memref<8x1xf32, #tpu.memory_space<vmem>>, vector<8x1xf32>
    %45 = vector.broadcast %44 : vector<8x1xf32> to vector<8x2048xf32>
    %46 = arith.addf %43, %45 : vector<8x2048xf32>
    %cst_38 = arith.constant 0.000000e+00 : f32
    %47 = vector.broadcast %cst_38 : f32 to vector<8x2048xf32>
    %48 = arith.maximumf %46, %47 : vector<8x2048xf32>
    %c0_39 = arith.constant 0 : index
    %c0_40 = arith.constant 0 : index
    %c0_41 = arith.constant 0 : index
    %49 = vector.load %arg8[%c0_39, %c0_40, %c0_41] : memref<1x8x2048xf32, #tpu.memory_space<vmem>>, vector<1x8x2048xf32>
    %50 = vector.shape_cast %49 : vector<1x8x2048xf32> to vector<8x2048xf32>
    %51 = vector.shape_cast %48 : vector<8x2048xf32> to vector<1x8x2048xf32>
    tpu.vector_store %arg8[%c0_39, %c0_40, %c0_41], %51 {strides = array<i32>} : memref<1x8x2048xf32, #tpu.memory_space<vmem>>, vector<1x8x2048xf32>,
    return
  }
  func.func @transform_0(%arg0: i32) -> (i32, i32, i32) {
    %c0_i32 = arith.constant 0 : i32
    %c0_i32_0 = arith.constant 0 : i32
    %c0_i32_1 = arith.constant 0 : i32
    return %arg0, %c0_i32, %c0_i32_0 : i32, i32, i32
  }
  func.func @transform_1(%arg0: i32) -> (i32, i32) {
    %c0_i32 = arith.constant 0 : i32
    %c0_i32_0 = arith.constant 0 : i32
    %c0_i32_1 = arith.constant 0 : i32
    return %c0_i32, %c0_i32_0 : i32, i32
  }
  func.func @transform_2(%arg0: i32) -> (i32, i32) {
    %c0_i32 = arith.constant 0 : i32
    %c0_i32_0 = arith.constant 0 : i32
    %c0_i32_1 = arith.constant 0 : i32
    return %c0_i32, %c0_i32_0 : i32, i32
  }
  func.func @transform_3(%arg0: i32) -> (i32, i32) {
    %c0_i32 = arith.constant 0 : i32
    %c0_i32_0 = arith.constant 0 : i32
    %c0_i32_1 = arith.constant 0 : i32
    return %c0_i32, %c0_i32_0 : i32, i32
  }
  func.func @transform_4(%arg0: i32) -> (i32, i32) {
    %c0_i32 = arith.constant 0 : i32
    %c0_i32_0 = arith.constant 0 : i32
    %c0_i32_1 = arith.constant 0 : i32
    return %c0_i32, %c0_i32_0 : i32, i32
  }
  func.func @transform_5(%arg0: i32) -> (i32, i32) {
    %c0_i32 = arith.constant 0 : i32
    %c0_i32_0 = arith.constant 0 : i32
    %c0_i32_1 = arith.constant 0 : i32
    return %c0_i32, %c0_i32_0 : i32, i32
  }
  func.func @transform_6(%arg0: i32) -> (i32, i32) {
    %c0_i32 = arith.constant 0 : i32
    %c0_i32_0 = arith.constant 0 : i32
    %c0_i32_1 = arith.constant 0 : i32
    return %c0_i32, %c0_i32_0 : i32, i32
  }
  func.func @transform_7(%arg0: i32) -> (i32, i32, i32) {
    %c0_i32 = arith.constant 0 : i32
    %c0_i32_0 = arith.constant 0 : i32
    %c0_i32_1 = arith.constant 0 : i32
    return %arg0, %c0_i32, %c0_i32_0 : i32, i32, i32
  }
}

</mosaic_0001>

<llo_original>
// kernel: tpu_custom_call.1
$region0: #{tpu_custom_call.1}
  #allocation0 [shape = 'u32[]', space=smem, size = 0x4, offset = 0x4, fixed_abs, tag = 'smem constant byte address 0x4 - core index']
  #allocation1 [shape = 'u32[144,128]{1,0:T(1,128)}', space=vmem, size = 0x12000, scoped, tag = 'internal scratch']
  #allocation2 [shape = 'f32[4,3072]{1,0:T(4,128)}', space=vmem, size = 0xc000, scoped, tag = 'scratch operand']
  #allocation3 [shape = 'f32[8,2560]{1,0:T(8,128)}', space=vmem, size = 0x14000, scoped, tag = 'scratch operand']
  #allocation4 [shape = 'f32[8,2048]{1,0:T(8,128)}', space=vmem, size = 0x10000, scoped, tag = 'scratch operand']
  %s0 = inlined_call_operand.hbm [shape: f32[2,4,2048], index: 0, kind: input, shape index: {}]
  %s1 = inlined_call_operand.vmem [shape: f32[32,4], index: 1, kind: input, shape index: {}]
  %s2 = inlined_call_operand.vmem [shape: f32[24,8], index: 2, kind: input, shape index: {}]
  %s3 = inlined_call_operand.vmem [shape: f32[8,8], index: 3, kind: input, shape index: {}]
  %s4 = inlined_call_operand.vmem [shape: f32[8,1], index: 4, kind: input, shape index: {}]
  %s5 = inlined_call_operand.vmem [shape: f32[8,1], index: 5, kind: input, shape index: {}]
  %s6 = inlined_call_operand.vmem [shape: f32[8,1], index: 6, kind: input, shape index: {}]
  %s7 = inlined_call_operand.hbm [shape: f32[2,8,2048], index: 7, kind: output, shape index: {}]
  %s8 = sld [smem:[#allocation0]]
  $region65: #{tpu_custom_call.1} parent=0
    _
  %s10 = ssub.s32 1, %s8
  %s11 = scalar_select 0, %s10, %s8
  $region1: #{tpu_custom_call.1} parent=0
    #allocation5 [shape = 'u8[65536]{0}', space=vmem, size = 0x10000, scoped, tag = 'input window, operand 0']
    #allocation6 [shape = 's32[2]{0}', space=sflag, size = 0x8, scoped, tag = 'scoped memory for tpu_custom_call.1']
    #allocation7 [shape = 's32[2]{0}', space=sflag, size = 0x8, scoped, tag = 'scoped memory for tpu_custom_call.1']
    #allocation8 [shape = 'u8[131072]{0}', space=vmem, size = 0x20000, scoped, tag = 'output window, operand 0']
    %12 = vsyncpa [#allocation6], 0
    %s13 = scalar_lea.sflag [#allocation6], 1
    %14 = vsyncpa %s13, 0
    %15 = vsyncpa [#allocation7], 0
    %s16 = scalar_lea.sflag [#allocation7], 1
    %17 = vsyncpa %s16, 0
    loop: start=0, step=1, limit=4
    $region2: #{tpu_custom_call.1} parent=1 // loop_pre_header
      _
    $region3: #{tpu_custom_call.1} parent=1 // loop_header
      %s19 = sphi 0, %s23
      %p20 = scmp.ge.s32.totalorder %s19, 4
      %s29 = sphi 0, %s31
      %s32 = sphi 0, %s29
      %s33 = sphi 0, %s32
      %s49 = sphi 0, %s33
      %s53 = sphi 0, %s53
      %s55 = sphi 0, %s53
      %s56 = sphi 0, %s55
      %s70 = sphi 0, %s56
      %s74 = sphi 0, %s74
      %s76 = sphi 0, %s74
      %s77 = sphi 0, %s76
      %s91 = sphi 0, %s77
      %s95 = sphi 0, %s95
      %s97 = sphi 0, %s95
      %s98 = sphi 0, %s97
      %s112 = sphi 0, %s98
      %s116 = sphi 0, %s116
      %s118 = sphi 0, %s116
      %s119 = sphi 0, %s118
      %s133 = sphi 0, %s119
      %s137 = sphi 0, %s137
      %s139 = sphi 0, %s137
      %s140 = sphi 0, %s139
      %s154 = sphi 0, %s140
      %s158 = sphi 0, %s158
      %s160 = sphi 0, %s158
      %s161 = sphi 0, %s160
      %s175 = sphi 0, %s161
      %s181 = sphi 0, %s183
      %s184 = sphi 0, %s181
      %s185 = sphi 0, %s184
      %s201 = sphi 0, %s185
    $region4: #{tpu_custom_call.1} parent=1 // loop_header_branch
      %22 = sbr.rel (%p20) target = $region8
    $region5: #{tpu_custom_call.1} parent=1 // loop_body
      %s24 = ssub.s32 %s19, 1
      %s25 = ssub.s32 %s19, 2
      %s26 = sadd.s32 %s19, 1
      %s27 = ssub.s32 %s19, %s26
      %p28 = scmp.eq.s32.totalorder %s27, 0
      %s30 = sadd.s32 %s29, 1
      %s31 = scalar_select %p28, %s29, %s30
      %p34 = pneg %p28
      %p35 = scmp.eq.s32.totalorder %s19, 1
      %p36 = por %p34, %p35
      %p37 = scmp.ne.s32.totalorder %s29, %s32
      %p38 = scmp.eq.s32.totalorder %s19, 0
      %p39 = por %p37, %p38
      %p40 = scmp.ne.s32.totalorder %s29, %s32
      %p41 = scmp.eq.s32.totalorder %s24, 1
      %p42 = por %p40, %p41
      %p43 = scmp.ne.s32.totalorder %s32, %s33
      %p44 = scmp.eq.s32.totalorder %s24, 0
      %p45 = por %p43, %p44
      %p46 = scmp.ne.s32.totalorder %s32, %s33
      %p47 = scmp.eq.s32.totalorder %s25, 1
      %p48 = por %p46, %p47
      %p50 = scmp.ne.s32.totalorder %s33, %s49
      %p51 = scmp.eq.s32.totalorder %s25, 0
      %p52 = por %p50, %p51
      %s54 = sadd.s32 %s53, 1
      %p57 = scmp.eq.s32.totalorder %s19, 1
      %p58 = scmp.ne.s32.totalorder %s53, %s55
      %p59 = scmp.eq.s32.totalorder %s19, 0
      %p60 = por %p58, %p59
      %p61 = scmp.ne.s32.totalorder %s53, %s55
      %p62 = scmp.eq.s32.totalorder %s24, 1
      %p63 = por %p61, %p62
      %p64 = scmp.ne.s32.totalorder %s55, %s56
      %p65 = scmp.eq.s32.totalorder %s24, 0
      %p66 = por %p64, %p65
      %p67 = scmp.ne.s32.totalorder %s55, %s56
      %p68 = scmp.eq.s32.totalorder %s25, 1
      %p69 = por %p67, %p68
      %p71 = scmp.ne.s32.totalorder %s56, %s70
      %p72 = scmp.eq.s32.totalorder %s25, 0
      %p73 = por %p71, %p72
      %s75 = sadd.s32 %s74, 1
      %p78 = scmp.eq.s32.totalorder %s19, 1
      %p79 = scmp.ne.s32.totalorder %s74, %s76
      %p80 = scmp.eq.s32.totalorder %s19, 0
      %p81 = por %p79, %p80
      %p82 = scmp.ne.s32.totalorder %s74, %s76
      %p83 = scmp.eq.s32.totalorder %s24, 1
      %p84 = por %p82, %p83
      %p85 = scmp.ne.s32.totalorder %s76, %s77
      %p86 = scmp.eq.s32.totalorder %s24, 0
      %p87 = por %p85, %p86
      %p88 = scmp.ne.s32.totalorder %s76, %s77
      %p89 = scmp.eq.s32.totalorder %s25, 1
      %p90 = por %p88, %p89
      %p92 = scmp.ne.s32.totalorder %s77, %s91
      %p93 = scmp.eq.s32.totalorder %s25, 0
      %p94 = por %p92, %p93
      %s96 = sadd.s32 %s95, 1
      %p99 = scmp.eq.s32.totalorder %s19, 1
      %p100 = scmp.ne.s32.totalorder %s95, %s97
      %p101 = scmp.eq.s32.totalorder %s19, 0
      %p102 = por %p100, %p101
      %p103 = scmp.ne.s32.totalorder %s95, %s97
      %p104 = scmp.eq.s32.totalorder %s24, 1
      %p105 = por %p103, %p104
      %p106 = scmp.ne.s32.totalorder %s97, %s98
      %p107 = scmp.eq.s32.totalorder %s24, 0
      %p108 = por %p106, %p107
      %p109 = scmp.ne.s32.totalorder %s97, %s98
      %p110 = scmp.eq.s32.totalorder %s25, 1
      %p111 = por %p109, %p110
      %p113 = scmp.ne.s32.totalorder %s98, %s112
      %p114 = scmp.eq.s32.totalorder %s25, 0
      %p115 = por %p113, %p114
      %s117 = sadd.s32 %s116, 1
      %p120 = scmp.eq.s32.totalorder %s19, 1
      %p121 = scmp.ne.s32.totalorder %s116, %s118
      %p122 = scmp.eq.s32.totalorder %s19, 0
      %p123 = por %p121, %p122
      %p124 = scmp.ne.s32.totalorder %s116, %s118
      %p125 = scmp.eq.s32.totalorder %s24, 1
      %p126 = por %p124, %p125
      %p127 = scmp.ne.s32.totalorder %s118, %s119
      %p128 = scmp.eq.s32.totalorder %s24, 0
      %p129 = por %p127, %p128
      %p130 = scmp.ne.s32.totalorder %s118, %s119
      %p131 = scmp.eq.s32.totalorder %s25, 1
      %p132 = por %p130, %p131
      %p134 = scmp.ne.s32.totalorder %s119, %s133
      %p135 = scmp.eq.s32.totalorder %s25, 0
      %p136 = por %p134, %p135
      %s138 = sadd.s32 %s137, 1
      %p141 = scmp.eq.s32.totalorder %s19, 1
      %p142 = scmp.ne.s32.totalorder %s137, %s139
      %p143 = scmp.eq.s32.totalorder %s19, 0
      %p144 = por %p142, %p143
      %p145 = scmp.ne.s32.totalorder %s137, %s139
      %p146 = scmp.eq.s32.totalorder %s24, 1
      %p147 = por %p145, %p146
      %p148 = scmp.ne.s32.totalorder %s139, %s140
      %p149 = scmp.eq.s32.totalorder %s24, 0
      %p150 = por %p148, %p149
      %p151 = scmp.ne.s32.totalorder %s139, %s140
      %p152 = scmp.eq.s32.totalorder %s25, 1
      %p153 = por %p151, %p152
      %p155 = scmp.ne.s32.totalorder %s140, %s154
      %p156 = scmp.eq.s32.totalorder %s25, 0
      %p157 = por %p155, %p156
      %s159 = sadd.s32 %s158, 1
      %p162 = scmp.eq.s32.totalorder %s19, 1
      %p163 = scmp.ne.s32.totalorder %s158, %s160
      %p164 = scmp.eq.s32.totalorder %s19, 0
      %p165 = por %p163, %p164
      %p166 = scmp.ne.s32.totalorder %s158, %s160
      %p167 = scmp.eq.s32.totalorder %s24, 1
      %p168 = por %p166, %p167
      %p169 = scmp.ne.s32.totalorder %s160, %s161
      %p170 = scmp.eq.s32.totalorder %s24, 0
      %p171 = por %p169, %p170
      %p172 = scmp.ne.s32.totalorder %s160, %s161
      %p173 = scmp.eq.s32.totalorder %s25, 1
      %p174 = por %p172, %p173
      %p176 = scmp.ne.s32.totalorder %s161, %s175
      %p177 = scmp.eq.s32.totalorder %s25, 0
      %p178 = por %p176, %p177
      %s179 = ssub.s32 %s19, %s26
      %p180 = scmp.eq.s32.totalorder %s179, 0
      %s182 = sadd.s32 %s181, 1
      %s183 = scalar_select %p180, %s181, %s182
      %p186 = pneg %p180
      %p187 = scmp.eq.s32.totalorder %s19, 1
      %p188 = por %p186, %p187
      %p189 = scmp.ne.s32.totalorder %s181, %s184
      %p190 = scmp.eq.s32.totalorder %s19, 0
      %p191 = por %p189, %p190
      %p192 = scmp.ne.s32.totalorder %s181, %s184
      %p193 = scmp.eq.s32.totalorder %s24, 1
      %p194 = por %p192, %p193
      %p195 = scmp.ne.s32.totalorder %s184, %s185
      %p196 = scmp.eq.s32.totalorder %s24, 0
      %p197 = por %p195, %p196
      %p198 = scmp.ne.s32.totalorder %s184, %s185
      %p199 = scmp.eq.s32.totalorder %s25, 1
      %p200 = por %p198, %p199
      %p202 = scmp.ne.s32.totalorder %s185, %s201
      %p203 = scmp.eq.s32.totalorder %s25, 0
      %p204 = por %p202, %p203
      %p205 = scmp.le.s32.totalorder 1, %s19
      %p206 = scmp.lt.s32.totalorder %s19, 3
      %p207 = pnand %p205, %p206
      %p208 = pneg %p207
      // Predicated region
      $region9: #{tpu_custom_call.1} parent=5 // pred_check
        _
      $region10: #{tpu_custom_call.1} parent=5 // pred_check_branch
        %210 = sbr.rel (%p207) target = $region12
      $region11: #{tpu_custom_call.1} parent=5 // pred_region
        %s211 = ssub.s32 %s19, 1
        // Predicated region
        $region13: #{tpu_custom_call.1} parent=11 // pred_check
          %p212 = pneg %p66
        $region14: #{tpu_custom_call.1} parent=11 // pred_check_branch
          %214 = sbr.rel (%p212) target = $region16
        $region15: #{tpu_custom_call.1} parent=11 // pred_region
          _
        $region16: #{tpu_custom_call.1} parent=11 // pred_fallthru
          _
        // Predicated region
        $region17: #{tpu_custom_call.1} parent=11 // pred_check
          %p215 = pneg %p87
        $region18: #{tpu_custom_call.1} parent=11 // pred_check_branch
          %217 = sbr.rel (%p215) target = $region20
        $region19: #{tpu_custom_call.1} parent=11 // pred_region
          _
        $region20: #{tpu_custom_call.1} parent=11 // pred_fallthru
          _
        // Predicated region
        $region21: #{tpu_custom_call.1} parent=11 // pred_check
          %p218 = pneg %p108
        $region22: #{tpu_custom_call.1} parent=11 // pred_check_branch
          %220 = sbr.rel (%p218) target = $region24
        $region23: #{tpu_custom_call.1} parent=11 // pred_region
          _
        $region24: #{tpu_custom_call.1} parent=11 // pred_fallthru
          _
        // Predicated region
        $region25: #{tpu_custom_call.1} parent=11 // pred_check
          %p221 = pneg %p129
        $region26: #{tpu_custom_call.1} parent=11 // pred_check_branch
          %223 = sbr.rel (%p221) target = $region28
        $region27: #{tpu_custom_call.1} parent=11 // pred_region
          _
        $region28: #{tpu_custom_call.1} parent=11 // pred_fallthru
          _
        // Predicated region
        $region29: #{tpu_custom_call.1} parent=11 // pred_check
          %p224 = pneg %p150
        $region30: #{tpu_custom_call.1} parent=11 // pred_check_branch
          %226 = sbr.rel (%p224) target = $region32
        $region31: #{tpu_custom_call.1} parent=11 // pred_region
          _
        $region32: #{tpu_custom_call.1} parent=11 // pred_fallthru
          _
        // Predicated region
        $region33: #{tpu_custom_call.1} parent=11 // pred_check
          %p227 = pneg %p171
        $region34: #{tpu_custom_call.1} parent=11 // pred_check_branch
          %229 = sbr.rel (%p227) target = $region36
        $region35: #{tpu_custom_call.1} parent=11 // pred_region
          _
        $region36: #{tpu_custom_call.1} parent=11 // pred_fallthru
          _
      $region12: #{tpu_custom_call.1} parent=5 // pred_fallthru
        _
      %p230 = scmp.lt.s32.totalorder %s19, 2
      // Predicated region
      $region37: #{tpu_custom_call.1} parent=5 // pred_check
        %p231 = pneg %p230
      $region38: #{tpu_custom_call.1} parent=5 // pred_check_branch
        %233 = sbr.rel (%p231) target = $region40
      $region39: #{tpu_custom_call.1} parent=5 // pred_region
        // Predicated region
        $region41: #{tpu_custom_call.1} parent=39 // pred_check
          %p234 = pneg %p39
        $region42: #{tpu_custom_call.1} parent=39 // pred_check_branch
          %236 = sbr.rel (%p234) target = $region44
        $region43: #{tpu_custom_call.1} parent=39 // pred_region
          %s237 = sand.u32 %s29, 1
          %s238 = scalar_lea.sflag [#allocation6], %s237
          %s239 = sand.u32 %s29, 1
          %s240 = smul.addr %s239, 64
          %s241 = scalar_lea.vmem [#allocation5], %s240
          %s243 = ssub.s32 1024, 1024
          %244 = vsyncadd %s238, %s243
          %s245 = smul.addr %s19, 16
          %s246 = smul.addr %s245, 64
          %s247 = scalar_lea.hbm %s0, %s246
          %s249 = sshll.u32 %s241, 4
          %s250 = int_to_ptr.vmem [resolvable:$true] %s249
          %252 = dma.hbm_to_vmem [thread:$0]  %s247, 1024, %s250, %s238
        $region44: #{tpu_custom_call.1} parent=39 // pred_fallthru
          _
      $region40: #{tpu_custom_call.1} parent=5 // pred_fallthru
        _
      %p253 = scmp.le.s32.totalorder 1, %s19
      %p254 = scmp.lt.s32.totalorder %s19, 3
      %p255 = pnand %p253, %p254
      %p256 = pneg %p255
      // Predicated region
      $region45: #{tpu_custom_call.1} parent=5 // pred_check
        _
      $region46: #{tpu_custom_call.1} parent=5 // pred_check_branch
        %258 = sbr.rel (%p255) target = $region48
      $region47: #{tpu_custom_call.1} parent=5 // pred_region
        %s259 = ssub.s32 %s19, 1
        %s260 = sand.u32 %s32, 1
        %s261 = scalar_lea.sflag [#allocation6], %s260
        %s262 = sand.u32 %s32, 1
        %s263 = smul.addr %s262, 64
        %s264 = scalar_lea.vmem [#allocation5], %s263
        // Predicated region
        $region49: #{tpu_custom_call.1} parent=47 // pred_check
          %p265 = pneg %p45
        $region50: #{tpu_custom_call.1} parent=47 // pred_check_branch
          %267 = sbr.rel (%p265) target = $region52
        $region51: #{tpu_custom_call.1} parent=47 // pred_region
          %268 = dma.done %s261, 1024
        $region52: #{tpu_custom_call.1} parent=47 // pred_fallthru
          _
        %s269 = sand.u32 %s32, 1
        %s270 = scalar_lea.sflag [#allocation6], %s269
        %s271 = sand.u32 %s32, 1
        %s272 = smul.addr %s271, 64
        %s273 = scalar_lea.vmem [#allocation5], %s272
        %p274 = pneg %p45
        %p275 = pneg %p42
        %p276 = pneg %p66
        %p277 = pneg %p63
        %p278 = pneg %p87
        %p279 = pneg %p84
        %p280 = pneg %p108
        %p281 = pneg %p105
        %p282 = pneg %p129
        %p283 = pneg %p126
        %p284 = pneg %p150
        %p285 = pneg %p147
        %p286 = pneg %p171
        %p287 = pneg %p168
        %p288 = pneg %p197
        %p289 = pneg %p194
        %s290 = sand.u32 %s184, 1
        %s291 = scalar_lea.sflag [#allocation7], %s290
        %s292 = sand.u32 %s184, 1
        %s293 = smul.addr %s292, 128
        %s294 = scalar_lea.vmem [#allocation8], %s293
        %295 = vst [vmem:[#allocation2] sm:$0xff] 0.0
        %296 = vst [vmem:[#allocation2 + $0x8] sm:$0xff] 0.0
        %297 = vst [vmem:[#allocation2 + $0x50] sm:$0xff] 0.0
        %298 = vst [vmem:[#allocation2 + $0x58] sm:$0xff] 0.0
        %v299 = vld [vmem:[%s264] sm:$0xff]
        %v300 = vld [vmem:[%s264 + $0x8] sm:$0xff]
        %v301 = vld [vmem:[%s264 + $0x10] sm:$0xff]
        %v302 = vld [vmem:[%s264 + $0x18] sm:$0xff]
        %v303 = vld [vmem:[%s264 + $0x20] sm:$0xff]
        %v304 = vld [vmem:[%s264 + $0x28] sm:$0xff]
        %v305 = vld [vmem:[%s264 + $0x30] sm:$0xff]
        %v306 = vld [vmem:[%s264 + $0x38] sm:$0xff]
        %307 = vst [vmem:[#allocation2 + $0x10] sm:$0xff] %v299
        %308 = vst [vmem:[#allocation2 + $0x18] sm:$0xff] %v300
        %309 = vst [vmem:[#allocation2 + $0x20] sm:$0xff] %v301
        %310 = vst [vmem:[#allocation2 + $0x28] sm:$0xff] %v302
        %311 = vst [vmem:[#allocation2 + $0x30] sm:$0xff] %v303
        %312 = vst [vmem:[#allocation2 + $0x38] sm:$0xff] %v304
        %313 = vst [vmem:[#allocation2 + $0x40] sm:$0xff] %v305
        %314 = vst [vmem:[#allocation2 + $0x48] sm:$0xff] %v306
        %v315 = vld [vmem:[%s1] sm:$0xff]
        %v316 = vld [vmem:[%s1 + $0x8] sm:$0xff]
        %v317 = vld [vmem:[%s1 + $0x10] sm:$0xff]
        %v318 = vld [vmem:[%s1 + $0x18] sm:$0xff]
        %v319 = vld [vmem:[#allocation2] sm:$0xff]
        %v320 = vld [vmem:[#allocation2 + $0x8] sm:$0xff]
        %v321 = vld [vmem:[#allocation2 + $0x10] sm:$0xff]
        %v322 = vld [vmem:[#allocation2 + $0x18] sm:$0xff]
        %v323 = vld [vmem:[#allocation2 + $0x20] sm:$0xff]
        %v324 = vld [vmem:[#allocation2 + $0x28] sm:$0xff]
        %v325 = vld [vmem:[#allocation2 + $0x30] sm:$0xff]
        %v326 = vld [vmem:[#allocation2 + $0x38] sm:$0xff]
        %v327 = vld [vmem:[#allocation2 + $0x40] sm:$0xff]
        %v328 = vld [vmem:[#allocation2 + $0x48] sm:$0xff]
        %v329 = vld [vmem:[#allocation2 + $0x50] sm:$0xff]
        %v330 = vld [vmem:[#allocation2 + $0x58] sm:$0xff]
        %v343 = vcombine.high %v319, %v319
        %v344 = vcombine.high %v320, %v320
        %v345 = vcombine.high %v321, %v321
        %v346 = vcombine.high %v322, %v322
        %v347 = vcombine.high %v323, %v323
        %v348 = vcombine.high %v324, %v324
        %v349 = vcombine.high %v325, %v325
        %v350 = vcombine.high %v326, %v326
        %v351 = vcombine.high %v327, %v327
        %v352 = vcombine.high %v328, %v328
        %v353 = vcombine.high %v329, %v329
        %v354 = vcombine.high %v330, %v330
        %vm355 = vcmask 31744
        %v357 = vsel %vm355, %v315, 0
        %v360 = vsel %vm355, %v316, 0
        %v363 = vsel %vm355, %v317, 0
        %v366 = vsel %vm355, %v318, 0
        %vm368 = vcmask 1043456
        %v369 = vsel %vm368, %v319, 0
        %v371 = vsel %vm368, %v343, 0
        %v373 = vsel %vm368, %v320, 0
        %v375 = vsel %vm368, %v344, 0
        %v377 = vsel %vm368, %v321, 0
        %v379 = vsel %vm368, %v345, 0
        %v381 = vsel %vm368, %v322, 0
        %v383 = vsel %vm368, %v346, 0
        %v385 = vsel %vm368, %v323, 0
        %v387 = vsel %vm368, %v347, 0
        %v389 = vsel %vm368, %v324, 0
        %v391 = vsel %vm368, %v348, 0
        %v393 = vsel %vm368, %v325, 0
        %v395 = vsel %vm368, %v349, 0
        %v397 = vsel %vm368, %v326, 0
        %v399 = vsel %vm368, %v350, 0
        %v401 = vsel %vm368, %v327, 0
        %v403 = vsel %vm368, %v351, 0
        %v405 = vsel %vm368, %v328, 0
        %v407 = vsel %vm368, %v352, 0
        %v409 = vsel %vm368, %v329, 0
        %v411 = vsel %vm368, %v353, 0
        %v413 = vsel %vm368, %v330, 0
        %v415 = vsel %vm368, %v354, 0
        %417 = vmatprep.subr.mxu0 %v371
        %418 = vmatpush1.msra.mxu0 %v369
        %419 = vmatprep.subr.mxu0 0.0
        %420 = vmatpush1.msra.mxu0 0.0
        %421 = vmatprep.subr.mxu0 0.0
        %422 = vmatpush1.msra.mxu0 0.0
        %423 = vmatprep.subr.mxu0 0.0
        %424 = vmatpush1.msra.mxu0 0.0
        %425 = vmatprep.subr.mxu0 0.0
        %426 = vmatpush1.msra.mxu0 0.0
        %427 = vmatprep.subr.mxu0 0.0
        %428 = vmatpush1.msra.mxu0 0.0
        %429 = vmatprep.subr.mxu0 0.0
        %430 = vmatpush1.msra.mxu0 0.0
        %431 = vmatprep.subr.mxu0 0.0
        %432 = vmatpush1.msra.mxu0 0.0
        %433 = vmatprep.subr.mxu0 0.0
        %434 = vmatpush1.msra.mxu0 0.0
        %435 = vmatprep.subr.mxu0 0.0
        %436 = vmatpush1.msra.mxu0 0.0
        %437 = vmatprep.subr.mxu0 0.0
        %438 = vmatpush1.msra.mxu0 0.0
        %439 = vmatprep.subr.mxu0 0.0
        %440 = vmatpush1.msra.mxu0 0.0
        %441 = vmatprep.subr.mxu0 0.0
        %442 = vmatpush1.msra.mxu0 0.0
        %443 = vmatprep.subr.mxu0 0.0
        %444 = vmatpush1.msra.mxu0 0.0
        %445 = vmatprep.subr.mxu0 0.0
        %446 = vmatpush1.msra.mxu0 0.0
        %447 = vmatprep.subr.mxu0 0.0
        %448 = vmatpush1.msra.mxu0 0.0
        %449 = vmatprep.subr.mxu0 0.0
        %450 = vmatpush1.msra.mxu0 0.0
        %451 = vmatprep.subr.mxu0 0.0
        %452 = vmatpush1.msra.mxu0 0.0
        %453 = vmatprep.subr.mxu0 0.0
        %454 = vmatpush1.msra.mxu0 0.0
        %455 = vmatprep.subr.mxu0 0.0
        %456 = vmatpush1.msra.mxu0 0.0
        %457 = vmatprep.subr.mxu0 0.0
        %458 = vmatpush1.msra.mxu0 0.0
        %459 = vmatprep.subr.mxu0 0.0
        %460 = vmatpush1.msra.mxu0 0.0
        %461 = vmatprep.subr.mxu0 0.0
        %462 = vmatpush1.msra.mxu0 0.0
        %463 = vmatprep.subr.mxu0 0.0
        %464 = vmatpush1.msra.mxu0 0.0
        %465 = vmatprep.subr.mxu0 0.0
        %466 = vmatpush1.msra.mxu0 0.0
        %467 = vmatprep.subr.mxu0 0.0
        %468 = vmatpush1.msra.mxu0 0.0
        %469 = vmatprep.subr.mxu0 0.0
        %470 = vmatpush1.msra.mxu0 0.0
        %471 = vmatprep.subr.mxu0 0.0
        %472 = vmatpush1.msra.mxu0 0.0
        %473 = vmatprep.subr.mxu0 0.0
        %474 = vmatpush1.msra.mxu0 0.0
        %475 = vmatprep.subr.mxu0 0.0
        %476 = vmatpush1.msra.mxu0 0.0
        %477 = vmatprep.subr.mxu0 0.0
        %478 = vmatpush1.msra.mxu0 0.0
        %479 = vmatprep.subr.mxu0 0.0
        %480 = vmatpush1.msra.mxu0 0.0
        %481 = vmatprep.mubr.f32.mxu0 0.0
        %482 = vmatmul.mubr.f32.gmra.mrb[0].mxu0 %v357
        %v483 = vpop.f32.mrb[0].mxu0
        %v484 = vadd.f32 0.0, %v483
        %v485 = vpop.f32.mrb[0].mxu0
        %v486 = vadd.f32 0.0, %v485
        %487 = vmatprep.mubr.f32.mxu0 0.0
        %488 = vmatmul.mubr.f32.gmra.mrb[0].mxu0 %v360
        %v489 = vpop.f32.mrb[0].mxu0
        %v490 = vpop.f32.mrb[0].mxu0
        %491 = vmatprep.mubr.f32.mxu0 0.0
        %492 = vmatmul.mubr.f32.gmra.mrb[0].mxu0 %v363
        %v493 = vpop.f32.mrb[0].mxu0
        %v494 = vpop.f32.mrb[0].mxu0
        %495 = vmatprep.mubr.f32.mxu0 0.0
        %496 = vmatmul.mubr.f32.gmra.mrb[0].mxu0 %v366
        %v497 = vpop.f32.mrb[0].mxu0
        %v498 = vpop.f32.mrb[0].mxu0
        %499 = vdwg.mxu0
        %500 = vmatprep.subr.mxu0 %v375
        %501 = vmatpush1.msra.mxu0 %v373
        %502 = vmatprep.subr.mxu0 0.0
        %503 = vmatpush1.msra.mxu0 0.0
        %504 = vmatprep.subr.mxu0 0.0
        %505 = vmatpush1.msra.mxu0 0.0
        %506 = vmatprep.subr.mxu0 0.0
        %507 = vmatpush1.msra.mxu0 0.0
        %508 = vmatprep.subr.mxu0 0.0
        %509 = vmatpush1.msra.mxu0 0.0
        %510 = vmatprep.subr.mxu0 0.0
        %511 = vmatpush1.msra.mxu0 0.0
        %512 = vmatprep.subr.mxu0 0.0
        %513 = vmatpush1.msra.mxu0 0.0
        %514 = vmatprep.subr.mxu0 0.0
        %515 = vmatpush1.msra.mxu0 0.0
        %516 = vmatprep.subr.mxu0 0.0
        %517 = vmatpush1.msra.mxu0 0.0
        %518 = vmatprep.subr.mxu0 0.0
        %519 = vmatpush1.msra.mxu0 0.0
        %520 = vmatprep.subr.mxu0 0.0
        %521 = vmatpush1.msra.mxu0 0.0
        %522 = vmatprep.subr.mxu0 0.0
        %523 = vmatpush1.msra.mxu0 0.0
        %524 = vmatprep.subr.mxu0 0.0
        %525 = vmatpush1.msra.mxu0 0.0
        %526 = vmatprep.subr.mxu0 0.0
        %527 = vmatpush1.msra.mxu0 0.0
        %528 = vmatprep.subr.mxu0 0.0
        %529 = vmatpush1.msra.mxu0 0.0
        %530 = vmatprep.subr.mxu0 0.0
        %531 = vmatpush1.msra.mxu0 0.0
        %532 = vmatprep.subr.mxu0 0.0
        %533 = vmatpush1.msra.mxu0 0.0
        %534 = vmatprep.subr.mxu0 0.0
        %535 = vmatpush1.msra.mxu0 0.0
        %536 = vmatprep.subr.mxu0 0.0
        %537 = vmatpush1.msra.mxu0 0.0
        %538 = vmatprep.subr.mxu0 0.0
        %539 = vmatpush1.msra.mxu0 0.0
        %540 = vmatprep.subr.mxu0 0.0
        %541 = vmatpush1.msra.mxu0 0.0
        %542 = vmatprep.subr.mxu0 0.0
        %543 = vmatpush1.msra.mxu0 0.0
        %544 = vmatprep.subr.mxu0 0.0
        %545 = vmatpush1.msra.mxu0 0.0
        %546 = vmatprep.subr.mxu0 0.0
        %547 = vmatpush1.msra.mxu0 0.0
        %548 = vmatprep.subr.mxu0 0.0
        %549 = vmatpush1.msra.mxu0 0.0
        %550 = vmatprep.subr.mxu0 0.0
        %551 = vmatpush1.msra.mxu0 0.0
        %552 = vmatprep.subr.mxu0 0.0
        %553 = vmatpush1.msra.mxu0 0.0
        %554 = vmatprep.subr.mxu0 0.0
        %555 = vmatpush1.msra.mxu0 0.0
        %556 = vmatprep.subr.mxu0 0.0
        %557 = vmatpush1.msra.mxu0 0.0
        %558 = vmatprep.subr.mxu0 0.0
        %559 = vmatpush1.msra.mxu0 0.0
        %560 = vmatprep.subr.mxu0 0.0
        %561 = vmatpush1.msra.mxu0 0.0
        %562 = vmatprep.subr.mxu0 0.0
        %563 = vmatpush1.msra.mxu0 0.0
        %564 = vmatprep.mubr.f32.mxu0 0.0
        %565 = vmatmul.mubr.f32.gmra.mrb[0].mxu0 %v357
        %v566 = vpop.f32.mrb[0].mxu0
        %v567 = vadd.f32 0.0, %v566
        %v568 = vpop.f32.mrb[0].mxu0
        %v569 = vadd.f32 0.0, %v568
        %570 = vmatprep.mubr.f32.mxu0 0.0
        %571 = vmatmul.mubr.f32.gmra.mrb[0].mxu0 %v360
        %v572 = vpop.f32.mrb[0].mxu0
        %v573 = vpop.f32.mrb[0].mxu0
        %574 = vmatprep.mubr.f32.mxu0 0.0
        %575 = vmatmul.mubr.f32.gmra.mrb[0].mxu0 %v363
        %v576 = vpop.f32.mrb[0].mxu0
        %v577 = vpop.f32.mrb[0].mxu0
        %578 = vmatprep.mubr.f32.mxu0 0.0
        %579 = vmatmul.mubr.f32.gmra.mrb[0].mxu0 %v366
        %v580 = vpop.f32.mrb[0].mxu0
        %v581 = vpop.f32.mrb[0].mxu0
        %582 = vdwg.mxu0
        %583 = vmatprep.subr.mxu0 %v379
        %584 = vmatpush1.msra.mxu0 %v377
        %585 = vmatprep.subr.mxu0 0.0
        %586 = vmatpush1.msra.mxu0 0.0
        %587 = vmatprep.subr.mxu0 0.0
        %588 = vmatpush1.msra.mxu0 0.0
        %589 = vmatprep.subr.mxu0 0.0
        %590 = vmatpush1.msra.mxu0 0.0
        %591 = vmatprep.subr.mxu0 0.0
        %592 = vmatpush1.msra.mxu0 0.0
        %593 = vmatprep.subr.mxu0 0.0
        %594 = vmatpush1.msra.mxu0 0.0
        %595 = vmatprep.subr.mxu0 0.0
        %596 = vmatpush1.msra.mxu0 0.0
        %597 = vmatprep.subr.mxu0 0.0
        %598 = vmatpush1.msra.mxu0 0.0
        %599 = vmatprep.subr.mxu0 0.0
        %600 = vmatpush1.msra.mxu0 0.0
        %601 = vmatprep.subr.mxu0 0.0
        %602 = vmatpush1.msra.mxu0 0.0
        %603 = vmatprep.subr.mxu0 0.0
        %604 = vmatpush1.msra.mxu0 0.0
        %605 = vmatprep.subr.mxu0 0.0
        %606 = vmatpush1.msra.mxu0 0.0
        %607 = vmatprep.subr.mxu0 0.0
        %608 = vmatpush1.msra.mxu0 0.0
        %609 = vmatprep.subr.mxu0 0.0
        %610 = vmatpush1.msra.mxu0 0.0
        %611 = vmatprep.subr.mxu0 0.0
        %612 = vmatpush1.msra.mxu0 0.0
        %613 = vmatprep.subr.mxu0 0.0
        %614 = vmatpush1.msra.mxu0 0.0
        %615 = vmatprep.subr.mxu0 0.0
        %616 = vmatpush1.msra.mxu0 0.0
        %617 = vmatprep.subr.mxu0 0.0
        %618 = vmatpush1.msra.mxu0 0.0
        %619 = vmatprep.subr.mxu0 0.0
        %620 = vmatpush1.msra.mxu0 0.0
        %621 = vmatprep.subr.mxu0 0.0
        %622 = vmatpush1.msra.mxu0 0.0
        %623 = vmatprep.subr.mxu0 0.0
        %624 = vmatpush1.msra.mxu0 0.0
        %625 = vmatprep.subr.mxu0 0.0
        %626 = vmatpush1.msra.mxu0 0.0
        %627 = vmatprep.subr.mxu0 0.0
        %628 = vmatpush1.msra.mxu0 0.0
        %629 = vmatprep.subr.mxu0 0.0
        %630 = vmatpush1.msra.mxu0 0.0
        %631 = vmatprep.subr.mxu0 0.0
        %632 = vmatpush1.msra.mxu0 0.0
        %633 = vmatprep.subr.mxu0 0.0
        %634 = vmatpush1.msra.mxu0 0.0
        %635 = vmatprep.subr.mxu0 0.0
        %636 = vmatpush1.msra.mxu0 0.0
        %637 = vmatprep.subr.mxu0 0.0
        %638 = vmatpush1.msra.mxu0 0.0
        %639 = vmatprep.subr.mxu0 0.0
        %640 = vmatpush1.msra.mxu0 0.0
        %641 = vmatprep.subr.mxu0 0.0
        %642 = vmatpush1.msra.mxu0 0.0
        %643 = vmatprep.subr.mxu0 0.0
        %644 = vmatpush1.msra.mxu0 0.0
        %645 = vmatprep.subr.mxu0 0.0
        %646 = vmatpush1.msra.mxu0 0.0
        %647 = vmatprep.mubr.f32.mxu0 0.0
        %648 = vmatmul.mubr.f32.gmra.mrb[0].mxu0 %v357
        %v649 = vpop.f32.mrb[0].mxu0
        %v650 = vadd.f32 0.0, %v649
        %v651 = vpop.f32.mrb[0].mxu0
        %v652 = vadd.f32 0.0, %v651
        %653 = vmatprep.mubr.f32.mxu0 0.0
        %654 = vmatmul.mubr.f32.gmra.mrb[0].mxu0 %v360
        %v655 = vpop.f32.mrb[0].mxu0
        %v656 = vadd.f32 0.0, %v655
        %v657 = vpop.f32.mrb[0].mxu0
        %v658 = vadd.f32 0.0, %v657
        %659 = vmatprep.mubr.f32.mxu0 0.0
        %660 = vmatmul.mubr.f32.gmra.mrb[0].mxu0 %v363
        %v661 = vpop.f32.mrb[0].mxu0
        %v662 = vpop.f32.mrb[0].mxu0
        %663 = vmatprep.mubr.f32.mxu0 0.0
        %664 = vmatmul.mubr.f32.gmra.mrb[0].mxu0 %v366
        %v665 = vpop.f32.mrb[0].mxu0
        %v666 = vadd.f32 0.0, %v665
        %v667 = vpop.f32.mrb[0].mxu0
        %v668 = vadd.f32 0.0, %v667
        %669 = vdwg.mxu0
        %670 = vmatprep.subr.mxu0 %v383
        %671 = vmatpush1.msra.mxu0 %v381
        %672 = vmatprep.subr.mxu0 0.0
        %673 = vmatpush1.msra.mxu0 0.0
        %674 = vmatprep.subr.mxu0 0.0
        %675 = vmatpush1.msra.mxu0 0.0
        %676 = vmatprep.subr.mxu0 0.0
        %677 = vmatpush1.msra.mxu0 0.0
        %678 = vmatprep.subr.mxu0 0.0
        %679 = vmatpush1.msra.mxu0 0.0
        %680 = vmatprep.subr.mxu0 0.0
        %681 = vmatpush1.msra.mxu0 0.0
        %682 = vmatprep.subr.mxu0 0.0
        %683 = vmatpush1.msra.mxu0 0.0
        %684 = vmatprep.subr.mxu0 0.0
        %685 = vmatpush1.msra.mxu0 0.0
        %686 = vmatprep.subr.mxu0 0.0
        %687 = vmatpush1.msra.mxu0 0.0
        %688 = vmatprep.subr.mxu0 0.0
        %689 = vmatpush1.msra.mxu0 0.0
        %690 = vmatprep.subr.mxu0 0.0
        %691 = vmatpush1.msra.mxu0 0.0
        %692 = vmatprep.subr.mxu0 0.0
        %693 = vmatpush1.msra.mxu0 0.0
        %694 = vmatprep.subr.mxu0 0.0
        %695 = vmatpush1.msra.mxu0 0.0
        %696 = vmatprep.subr.mxu0 0.0
        %697 = vmatpush1.msra.mxu0 0.0
        %698 = vmatprep.subr.mxu0 0.0
        %699 = vmatpush1.msra.mxu0 0.0
        %700 = vmatprep.subr.mxu0 0.0
        %701 = vmatpush1.msra.mxu0 0.0
        %702 = vmatprep.subr.mxu0 0.0
        %703 = vmatpush1.msra.mxu0 0.0
        %704 = vmatprep.subr.mxu0 0.0
        %705 = vmatpush1.msra.mxu0 0.0
        %706 = vmatprep.subr.mxu0 0.0
        %707 = vmatpush1.msra.mxu0 0.0
        %708 = vmatprep.subr.mxu0 0.0
        %709 = vmatpush1.msra.mxu0 0.0
        %710 = vmatprep.subr.mxu0 0.0
        %711 = vmatpush1.msra.mxu0 0.0
        %712 = vmatprep.subr.mxu0 0.0
        %713 = vmatpush1.msra.mxu0 0.0
        %714 = vmatprep.subr.mxu0 0.0
        %715 = vmatpush1.msra.mxu0 0.0
        %716 = vmatprep.subr.mxu0 0.0
        %717 = vmatpush1.msra.mxu0 0.0
        %718 = vmatprep.subr.mxu0 0.0
        %719 = vmatpush1.msra.mxu0 0.0
        %720 = vmatprep.subr.mxu0 0.0
        %721 = vmatpush1.msra.mxu0 0.0
        %722 = vmatprep.subr.mxu0 0.0
        %723 = vmatpush1.msra.mxu0 0.0
        %724 = vmatprep.subr.mxu0 0.0
        %725 = vmatpush1.msra.mxu0 0.0
        %726 = vmatprep.subr.mxu0 0.0
        %727 = vmatpush1.msra.mxu0 0.0
        %728 = vmatprep.subr.mxu0 0.0
        %729 = vmatpush1.msra.mxu0 0.0
        %730 = vmatprep.subr.mxu0 0.0
        %731 = vmatpush1.msra.mxu0 0.0
        %732 = vmatprep.subr.mxu0 0.0
        %733 = vmatpush1.msra.mxu0 0.0
        %734 = vmatprep.mubr.f32.mxu0 0.0
        %735 = vmatmul.mubr.f32.gmra.mrb[0].mxu0 %v357
        %v736 = vpop.f32.mrb[0].mxu0
        %v737 = vadd.f32 0.0, %v736
        %v738 = vpop.f32.mrb[0].mxu0
        %v739 = vadd.f32 0.0, %v738
        %740 = vmatprep.mubr.f32.mxu0 0.0
        %741 = vmatmul.mubr.f32.gmra.mrb[0].mxu0 %v360
        %v742 = vpop.f32.mrb[0].mxu0
        %v743 = vadd.f32 0.0, %v742
        %v744 = vpop.f32.mrb[0].mxu0
        %v745 = vadd.f32 0.0, %v744
        %746 = vmatprep.mubr.f32.mxu0 0.0
        %747 = vmatmul.mubr.f32.gmra.mrb[0].mxu0 %v363
        %v748 = vpop.f32.mrb[0].mxu0
        %v749 = vpop.f32.mrb[0].mxu0
        %750 = vmatprep.mubr.f32.mxu0 0.0
        %751 = vmatmul.mubr.f32.gmra.mrb[0].mxu0 %v366
        %v752 = vpop.f32.mrb[0].mxu0
        %v753 = vadd.f32 0.0, %v752
        %v754 = vpop.f32.mrb[0].mxu0
        %v755 = vadd.f32 0.0, %v754
        %756 = vdwg.mxu0
        %757 = vmatprep.subr.mxu0 %v387
        %758 = vmatpush1.msra.mxu0 %v385
        %759 = vmatprep.subr.mxu0 0.0
        %760 = vmatpush1.msra.mxu0 0.0
        %761 = vmatprep.subr.mxu0 0.0
        %762 = vmatpush1.msra.mxu0 0.0
        %763 = vmatprep.subr.mxu0 0.0
        %764 = vmatpush1.msra.mxu0 0.0
        %765 = vmatprep.subr.mxu0 0.0
        %766 = vmatpush1.msra.mxu0 0.0
        %767 = vmatprep.subr.mxu0 0.0
        %768 = vmatpush1.msra.mxu0 0.0
        %769 = vmatprep.subr.mxu0 0.0
        %770 = vmatpush1.msra.mxu0 0.0
        %771 = vmatprep.subr.mxu0 0.0
        %772 = vmatpush1.msra.mxu0 0.0
        %773 = vmatprep.subr.mxu0 0.0
        %774 = vmatpush1.msra.mxu0 0.0
        %775 = vmatprep.subr.mxu0 0.0
        %776 = vmatpush1.msra.mxu0 0.0
        %777 = vmatprep.subr.mxu0 0.0
        %778 = vmatpush1.msra.mxu0 0.0
        %779 = vmatprep.subr.mxu0 0.0
        %780 = vmatpush1.msra.mxu0 0.0
        %781 = vmatprep.subr.mxu0 0.0
        %782 = vmatpush1.msra.mxu0 0.0
        %783 = vmatprep.subr.mxu0 0.0
        %784 = vmatpush1.msra.mxu0 0.0
        %785 = vmatprep.subr.mxu0 0.0
        %786 = vmatpush1.msra.mxu0 0.0
        %787 = vmatprep.subr.mxu0 0.0
        %788 = vmatpush1.msra.mxu0 0.0
        %789 = vmatprep.subr.mxu0 0.0
        %790 = vmatpush1.msra.mxu0 0.0
        %791 = vmatprep.subr.mxu0 0.0
        %792 = vmatpush1.msra.mxu0 0.0
        %793 = vmatprep.subr.mxu0 0.0
        %794 = vmatpush1.msra.mxu0 0.0
        %795 = vmatprep.subr.mxu0 0.0
        %796 = vmatpush1.msra.mxu0 0.0
        %797 = vmatprep.subr.mxu0 0.0
        %798 = vmatpush1.msra.mxu0 0.0
        %799 = vmatprep.subr.mxu0 0.0
        %800 = vmatpush1.msra.mxu0 0.0
        %801 = vmatprep.subr.mxu0 0.0
        %802 = vmatpush1.msra.mxu0 0.0
        %803 = vmatprep.subr.mxu0 0.0
        %804 = vmatpush1.msra.mxu0 0.0
        %805 = vmatprep.subr.mxu0 0.0
        %806 = vmatpush1.msra.mxu0 0.0
        %807 = vmatprep.subr.mxu0 0.0
        %808 = vmatpush1.msra.mxu0 0.0
        %809 = vmatprep.subr.mxu0 0.0
        %810 = vmatpush1.msra.mxu0 0.0
        %811 = vmatprep.subr.mxu0 0.0
        %812 = vmatpush1.msra.mxu0 0.0
        %813 = vmatprep.subr.mxu0 0.0
        %814 = vmatpush1.msra.mxu0 0.0
        %815 = vmatprep.subr.mxu0 0.0
        %816 = vmatpush1.msra.mxu0 0.0
        %817 = vmatprep.subr.mxu0 0.0
        %818 = vmatpush1.msra.mxu0 0.0
        %819 = vmatprep.subr.mxu0 0.0
        %820 = vmatpush1.msra.mxu0 0.0
        %821 = vmatprep.mubr.f32.mxu0 0.0
        %822 = vmatmul.mubr.f32.gmra.mrb[0].mxu0 %v357
        %v823 = vpop.f32.mrb[0].mxu0
        %v824 = vadd.f32 0.0, %v823
        %v825 = vpop.f32.mrb[0].mxu0
        %v826 = vadd.f32 0.0, %v825
        %827 = vmatprep.mubr.f32.mxu0 0.0
        %828 = vmatmul.mubr.f32.gmra.mrb[0].mxu0 %v360
        %v829 = vpop.f32.mrb[0].mxu0
        %v830 = vadd.f32 0.0, %v829
        %v831 = vpop.f32.mrb[0].mxu0
        %v832 = vadd.f32 0.0, %v831
        %833 = vmatprep.mubr.f32.mxu0 0.0
        %834 = vmatmul.mubr.f32.gmra.mrb[0].mxu0 %v363
        %v835 = vpop.f32.mrb[0].mxu0
        %v836 = vadd.f32 0.0, %v835
        %v837 = vpop.f32.mrb[0].mxu0
        %v838 = vadd.f32 0.0, %v837
        %839 = vmatprep.mubr.f32.mxu0 0.0
        %840 = vmatmul.mubr.f32.gmra.mrb[0].mxu0 %v366
        %v841 = vpop.f32.mrb[0].mxu0
        %v842 = vadd.f32 0.0, %v841
        %v843 = vpop.f32.mrb[0].mxu0
        %v844 = vadd.f32 0.0, %v843
        %845 = vdwg.mxu0
        %846 = vmatprep.subr.mxu0 %v391
        %847 = vmatpush1.msra.mxu0 %v389
        %848 = vmatprep.subr.mxu0 0.0
        %849 = vmatpush1.msra.mxu0 0.0
        %850 = vmatprep.subr.mxu0 0.0
        %851 = vmatpush1.msra.mxu0 0.0
        %852 = vmatprep.subr.mxu0 0.0
        %853 = vmatpush1.msra.mxu0 0.0
        %854 = vmatprep.subr.mxu0 0.0
        %855 = vmatpush1.msra.mxu0 0.0
        %856 = vmatprep.subr.mxu0 0.0
        %857 = vmatpush1.msra.mxu0 0.0
        %858 = vmatprep.subr.mxu0 0.0
        %859 = vmatpush1.msra.mxu0 0.0
        %860 = vmatprep.subr.mxu0 0.0
        %861 = vmatpush1.msra.mxu0 0.0
        %862 = vmatprep.subr.mxu0 0.0
        %863 = vmatpush1.msra.mxu0 0.0
        %864 = vmatprep.subr.mxu0 0.0
        %865 = vmatpush1.msra.mxu0 0.0
        %866 = vmatprep.subr.mxu0 0.0
        %867 = vmatpush1.msra.mxu0 0.0
        %868 = vmatprep.subr.mxu0 0.0
        %869 = vmatpush1.msra.mxu0 0.0
        %870 = vmatprep.subr.mxu0 0.0
        %871 = vmatpush1.msra.mxu0 0.0
        %872 = vmatprep.subr.mxu0 0.0
        %873 = vmatpush1.msra.mxu0 0.0
        %874 = vmatprep.subr.mxu0 0.0
        %875 = vmatpush1.msra.mxu0 0.0
        %876 = vmatprep.subr.mxu0 0.0
        %877 = vmatpush1.msra.mxu0 0.0
        %878 = vmatprep.subr.mxu0 0.0
        %879 = vmatpush1.msra.mxu0 0.0
        %880 = vmatprep.subr.mxu0 0.0
        %881 = vmatpush1.msra.mxu0 0.0
        %882 = vmatprep.subr.mxu0 0.0
        %883 = vmatpush1.msra.mxu0 0.0
        %884 = vmatprep.subr.mxu0 0.0
        %885 = vmatpush1.msra.mxu0 0.0
        %886 = vmatprep.subr.mxu0 0.0
        %887 = vmatpush1.msra.mxu0 0.0
        %888 = vmatprep.subr.mxu0 0.0
        %889 = vmatpush1.msra.mxu0 0.0
        %890 = vmatprep.subr.mxu0 0.0
        %891 = vmatpush1.msra.mxu0 0.0
        %892 = vmatprep.subr.mxu0 0.0
        %893 = vmatpush1.msra.mxu0 0.0
        %894 = vmatprep.subr.mxu0 0.0
        %895 = vmatpush1.msra.mxu0 0.0
        %896 = vmatprep.subr.mxu0 0.0
        %897 = vmatpush1.msra.mxu0 0.0
        %898 = vmatprep.subr.mxu0 0.0
        %899 = vmatpush1.msra.mxu0 0.0
        %900 = vmatprep.subr.mxu0 0.0
        %901 = vmatpush1.msra.mxu0 0.0
        %902 = vmatprep.subr.mxu0 0.0
        %903 = vmatpush1.msra.mxu0 0.0
        %904 = vmatprep.subr.mxu0 0.0
        %905 = vmatpush1.msra.mxu0 0.0
        %906 = vmatprep.subr.mxu0 0.0
        %907 = vmatpush1.msra.mxu0 0.0
        %908 = vmatprep.subr.mxu0 0.0
        %909 = vmatpush1.msra.mxu0 0.0
        %910 = vmatprep.mubr.f32.mxu0 0.0
        %911 = vmatmul.mubr.f32.gmra.mrb[0].mxu0 %v357
        %v912 = vpop.f32.mrb[0].mxu0
        %v913 = vadd.f32 0.0, %v912
        %v914 = vpop.f32.mrb[0].mxu0
        %v915 = vadd.f32 0.0, %v914
        %916 = vmatprep.mubr.f32.mxu0 0.0
        %917 = vmatmul.mubr.f32.gmra.mrb[0].mxu0 %v360
        %v918 = vpop.f32.mrb[0].mxu0
        %v919 = vadd.f32 0.0, %v918
        %v920 = vpop.f32.mrb[0].mxu0
        %v921 = vadd.f32 0.0, %v920
        %922 = vmatprep.mubr.f32.mxu0 0.0
        %923 = vmatmul.mubr.f32.gmra.mrb[0].mxu0 %v363
        %v924 = vpop.f32.mrb[0].mxu0
        %v925 = vadd.f32 0.0, %v924
        %v926 = vpop.f32.mrb[0].mxu0
        %v927 = vadd.f32 0.0, %v926
        %928 = vmatprep.mubr.f32.mxu0 0.0
        %929 = vmatmul.mubr.f32.gmra.mrb[0].mxu0 %v366
        %v930 = vpop.f32.mrb[0].mxu0
        %v931 = vadd.f32 0.0, %v930
        %v932 = vpop.f32.mrb[0].mxu0
        %v933 = vadd.f32 0.0, %v932
        %934 = vdwg.mxu0
        %935 = vmatprep.subr.mxu0 %v395
        %936 = vmatpush1.msra.mxu0 %v393
        %937 = vmatprep.subr.mxu0 0.0
        %938 = vmatpush1.msra.mxu0 0.0
        %939 = vmatprep.subr.mxu0 0.0
        %940 = vmatpush1.msra.mxu0 0.0
        %941 = vmatprep.subr.mxu0 0.0
        %942 = vmatpush1.msra.mxu0 0.0
        %943 = vmatprep.subr.mxu0 0.0
        %944 = vmatpush1.msra.mxu0 0.0
        %945 = vmatprep.subr.mxu0 0.0
        %946 = vmatpush1.msra.mxu0 0.0
        %947 = vmatprep.subr.mxu0 0.0
        %948 = vmatpush1.msra.mxu0 0.0
        %949 = vmatprep.subr.mxu0 0.0
        %950 = vmatpush1.msra.mxu0 0.0
        %951 = vmatprep.subr.mxu0 0.0
        %952 = vmatpush1.msra.mxu0 0.0
        %953 = vmatprep.subr.mxu0 0.0
        %954 = vmatpush1.msra.mxu0 0.0
        %955 = vmatprep.subr.mxu0 0.0
        %956 = vmatpush1.msra.mxu0 0.0
        %957 = vmatprep.subr.mxu0 0.0
        %958 = vmatpush1.msra.mxu0 0.0
        %959 = vmatprep.subr.mxu0 0.0
        %960 = vmatpush1.msra.mxu0 0.0
        %961 = vmatprep.subr.mxu0 0.0
        %962 = vmatpush1.msra.mxu0 0.0
        %963 = vmatprep.subr.mxu0 0.0
        %964 = vmatpush1.msra.mxu0 0.0
        %965 = vmatprep.subr.mxu0 0.0
        %966 = vmatpush1.msra.mxu0 0.0
        %967 = vmatprep.subr.mxu0 0.0
        %968 = vmatpush1.msra.mxu0 0.0
        %969 = vmatprep.subr.mxu0 0.0
        %970 = vmatpush1.msra.mxu0 0.0
        %971 = vmatprep.subr.mxu0 0.0
        %972 = vmatpush1.msra.mxu0 0.0
        %973 = vmatprep.subr.mxu0 0.0
        %974 = vmatpush1.msra.mxu0 0.0
        %975 = vmatprep.subr.mxu0 0.0
        %976 = vmatpush1.msra.mxu0 0.0
        %977 = vmatprep.subr.mxu0 0.0
        %978 = vmatpush1.msra.mxu0 0.0
        %979 = vmatprep.subr.mxu0 0.0
        %980 = vmatpush1.msra.mxu0 0.0
        %981 = vmatprep.subr.mxu0 0.0
        %982 = vmatpush1.msra.mxu0 0.0
        %983 = vmatprep.subr.mxu0 0.0
        %984 = vmatpush1.msra.mxu0 0.0
        %985 = vmatprep.subr.mxu0 0.0
        %986 = vmatpush1.msra.mxu0 0.0
        %987 = vmatprep.subr.mxu0 0.0
        %988 = vmatpush1.msra.mxu0 0.0
        %989 = vmatprep.subr.mxu0 0.0
        %990 = vmatpush1.msra.mxu0 0.0
        %991 = vmatprep.subr.mxu0 0.0
        %992 = vmatpush1.msra.mxu0 0.0
        %993 = vmatprep.subr.mxu0 0.0
        %994 = vmatpush1.msra.mxu0 0.0
        %995 = vmatprep.subr.mxu0 0.0
        %996 = vmatpush1.msra.mxu0 0.0
        %997 = vmatprep.subr.mxu0 0.0
        %998 = vmatpush1.msra.mxu0 0.0
        %999 = vmatprep.mubr.f32.mxu0 0.0
        %1000 = vmatmul.mubr.f32.gmra.mrb[0].mxu0 %v357
        %v1001 = vpop.f32.mrb[0].mxu0
        %v1002 = vadd.f32 0.0, %v1001
        %v1003 = vpop.f32.mrb[0].mxu0
        %v1004 = vadd.f32 0.0, %v1003
        %1005 = vmatprep.mubr.f32.mxu0 0.0
        %1006 = vmatmul.mubr.f32.gmra.mrb[0].mxu0 %v360
        %v1007 = vpop.f32.mrb[0].mxu0
        %v1008 = vadd.f32 0.0, %v1007
        %v1009 = vpop.f32.mrb[0].mxu0
        %v1010 = vadd.f32 0.0, %v1009
        %1011 = vmatprep.mubr.f32.mxu0 0.0
        %1012 = vmatmul.mubr.f32.gmra.mrb[0].mxu0 %v363
        %v1013 = vpop.f32.mrb[0].mxu0
        %v1014 = vadd.f32 0.0, %v1013
        %v1015 = vpop.f32.mrb[0].mxu0
        %v1016 = vadd.f32 0.0, %v1015
        %1017 = vmatprep.mubr.f32.mxu0 0.0
        %1018 = vmatmul.mubr.f32.gmra.mrb[0].mxu0 %v366
        %v1019 = vpop.f32.mrb[0].mxu0
        %v1020 = vadd.f32 0.0, %v1019
        %v1021 = vpop.f32.mrb[0].mxu0
        %v1022 = vadd.f32 0.0, %v1021
        %1023 = vdwg.mxu0
        %1024 = vmatprep.subr.mxu0 %v399
        %1025 = vmatpush1.msra.mxu0 %v397
        %1026 = vmatprep.subr.mxu0 0.0
        %1027 = vmatpush1.msra.mxu0 0.0
        %1028 = vmatprep.subr.mxu0 0.0
        %1029 = vmatpush1.msra.mxu0 0.0
        %1030 = vmatprep.subr.mxu0 0.0
        %1031 = vmatpush1.msra.mxu0 0.0
        %1032 = vmatprep.subr.mxu0 0.0
        %1033 = vmatpush1.msra.mxu0 0.0
        %1034 = vmatprep.subr.mxu0 0.0
        %1035 = vmatpush1.msra.mxu0 0.0
        %1036 = vmatprep.subr.mxu0 0.0
        %1037 = vmatpush1.msra.mxu0 0.0
        %1038 = vmatprep.subr.mxu0 0.0
        %1039 = vmatpush1.msra.mxu0 0.0
        %1040 = vmatprep.subr.mxu0 0.0
        %1041 = vmatpush1.msra.mxu0 0.0
        %1042 = vmatprep.subr.mxu0 0.0
        %1043 = vmatpush1.msra.mxu0 0.0
        %1044 = vmatprep.subr.mxu0 0.0
        %1045 = vmatpush1.msra.mxu0 0.0
        %1046 = vmatprep.subr.mxu0 0.0
        %1047 = vmatpush1.msra.mxu0 0.0
        %1048 = vmatprep.subr.mxu0 0.0
        %1049 = vmatpush1.msra.mxu0 0.0
        %1050 = vmatprep.subr.mxu0 0.0
        %1051 = vmatpush1.msra.mxu0 0.0
        %1052 = vmatprep.subr.mxu0 0.0
        %1053 = vmatpush1.msra.mxu0 0.0
        %1054 = vmatprep.subr.mxu0 0.0
        %1055 = vmatpush1.msra.mxu0 0.0
        %1056 = vmatprep.subr.mxu0 0.0
        %1057 = vmatpush1.msra.mxu0 0.0
        %1058 = vmatprep.subr.mxu0 0.0
        %1059 = vmatpush1.msra.mxu0 0.0
        %1060 = vmatprep.subr.mxu0 0.0
        %1061 = vmatpush1.msra.mxu0 0.0
        %1062 = vmatprep.subr.mxu0 0.0
        %1063 = vmatpush1.msra.mxu0 0.0
        %1064 = vmatprep.subr.mxu0 0.0
        %1065 = vmatpush1.msra.mxu0 0.0
        %1066 = vmatprep.subr.mxu0 0.0
        %1067 = vmatpush1.msra.mxu0 0.0
        %1068 = vmatprep.subr.mxu0 0.0
        %1069 = vmatpush1.msra.mxu0 0.0
        %1070 = vmatprep.subr.mxu0 0.0
        %1071 = vmatpush1.msra.mxu0 0.0
        %1072 = vmatprep.subr.mxu0 0.0
        %1073 = vmatpush1.msra.mxu0 0.0
        %1074 = vmatprep.subr.mxu0 0.0
        %1075 = vmatpush1.msra.mxu0 0.0
        %1076 = vmatprep.subr.mxu0 0.0
        %1077 = vmatpush1.msra.mxu0 0.0
        %1078 = vmatprep.subr.mxu0 0.0
        %1079 = vmatpush1.msra.mxu0 0.0
        %1080 = vmatprep.subr.mxu0 0.0
        %1081 = vmatpush1.msra.mxu0 0.0
        %1082 = vmatprep.subr.mxu0 0.0
        %1083 = vmatpush1.msra.mxu0 0.0
        %1084 = vmatprep.subr.mxu0 0.0
        %1085 = vmatpush1.msra.mxu0 0.0
        %1086 = vmatprep.subr.mxu0 0.0
        %1087 = vmatpush1.msra.mxu0 0.0
        %1088 = vmatprep.mubr.f32.mxu0 0.0
        %1089 = vmatmul.mubr.f32.gmra.mrb[0].mxu0 %v357
        %v1090 = vpop.f32.mrb[0].mxu0
        %v1091 = vadd.f32 0.0, %v1090
        %v1092 = vpop.f32.mrb[0].mxu0
        %v1093 = vadd.f32 0.0, %v1092
        %1094 = vmatprep.mubr.f32.mxu0 0.0
        %1095 = vmatmul.mubr.f32.gmra.mrb[0].mxu0 %v360
        %v1096 = vpop.f32.mrb[0].mxu0
        %v1097 = vadd.f32 0.0, %v1096
        %v1098 = vpop.f32.mrb[0].mxu0
        %v1099 = vadd.f32 0.0, %v1098
        %1100 = vmatprep.mubr.f32.mxu0 0.0
        %1101 = vmatmul.mubr.f32.gmra.mrb[0].mxu0 %v363
        %v1102 = vpop.f32.mrb[0].mxu0
        %v1103 = vadd.f32 0.0, %v1102
        %v1104 = vpop.f32.mrb[0].mxu0
        %v1105 = vadd.f32 0.0, %v1104
        %1106 = vmatprep.mubr.f32.mxu0 0.0
        %1107 = vmatmul.mubr.f32.gmra.mrb[0].mxu0 %v366
        %v1108 = vpop.f32.mrb[0].mxu0
        %v1109 = vadd.f32 0.0, %v1108
        %v1110 = vpop.f32.mrb[0].mxu0
        %v1111 = vadd.f32 0.0, %v1110
        %1112 = vdwg.mxu0
        %1113 = vmatprep.subr.mxu0 %v403
        %1114 = vmatpush1.msra.mxu0 %v401
        %1115 = vmatprep.subr.mxu0 0.0
        %1116 = vmatpush1.msra.mxu0 0.0
        %1117 = vmatprep.subr.mxu0 0.0
        %1118 = vmatpush1.msra.mxu0 0.0
        %1119 = vmatprep.subr.mxu0 0.0
        %1120 = vmatpush1.msra.mxu0 0.0
        %1121 = vmatprep.subr.mxu0 0.0
        %1122 = vmatpush1.msra.mxu0 0.0
        %1123 = vmatprep.subr.mxu0 0.0
        %1124 = vmatpush1.msra.mxu0 0.0
        %1125 = vmatprep.subr.mxu0 0.0
        %1126 = vmatpush1.msra.mxu0 0.0
        %1127 = vmatprep.subr.mxu0 0.0
        %1128 = vmatpush1.msra.mxu0 0.0
        %1129 = vmatprep.subr.mxu0 0.0
        %1130 = vmatpush1.msra.mxu0 0.0
        %1131 = vmatprep.subr.mxu0 0.0
        %1132 = vmatpush1.msra.mxu0 0.0
        %1133 = vmatprep.subr.mxu0 0.0
        %1134 = vmatpush1.msra.mxu0 0.0
        %1135 = vmatprep.subr.mxu0 0.0
        %1136 = vmatpush1.msra.mxu0 0.0
        %1137 = vmatprep.subr.mxu0 0.0
        %1138 = vmatpush1.msra.mxu0 0.0
        %1139 = vmatprep.subr.mxu0 0.0
        %1140 = vmatpush1.msra.mxu0 0.0
        %1141 = vmatprep.subr.mxu0 0.0
        %1142 = vmatpush1.msra.mxu0 0.0
        %1143 = vmatprep.subr.mxu0 0.0
        %1144 = vmatpush1.msra.mxu0 0.0
        %1145 = vmatprep.subr.mxu0 0.0
        %1146 = vmatpush1.msra.mxu0 0.0
        %1147 = vmatprep.subr.mxu0 0.0
        %1148 = vmatpush1.msra.mxu0 0.0
        %1149 = vmatprep.subr.mxu0 0.0
        %1150 = vmatpush1.msra.mxu0 0.0
        %1151 = vmatprep.subr.mxu0 0.0
        %1152 = vmatpush1.msra.mxu0 0.0
        %1153 = vmatprep.subr.mxu0 0.0
        %1154 = vmatpush1.msra.mxu0 0.0
        %1155 = vmatprep.subr.mxu0 0.0
        %1156 = vmatpush1.msra.mxu0 0.0
        %1157 = vmatprep.subr.mxu0 0.0
        %1158 = vmatpush1.msra.mxu0 0.0
        %1159 = vmatprep.subr.mxu0 0.0
        %1160 = vmatpush1.msra.mxu0 0.0
        %1161 = vmatprep.subr.mxu0 0.0
        %1162 = vmatpush1.msra.mxu0 0.0
        %1163 = vmatprep.subr.mxu0 0.0
        %1164 = vmatpush1.msra.mxu0 0.0
        %1165 = vmatprep.subr.mxu0 0.0
        %1166 = vmatpush1.msra.mxu0 0.0
        %1167 = vmatprep.subr.mxu0 0.0
        %1168 = vmatpush1.msra.mxu0 0.0
        %1169 = vmatprep.subr.mxu0 0.0
        %1170 = vmatpush1.msra.mxu0 0.0
        %1171 = vmatprep.subr.mxu0 0.0
        %1172 = vmatpush1.msra.mxu0 0.0
        %1173 = vmatprep.subr.mxu0 0.0
        %1174 = vmatpush1.msra.mxu0 0.0
        %1175 = vmatprep.subr.mxu0 0.0
        %1176 = vmatpush1.msra.mxu0 0.0
        %1177 = vmatprep.mubr.f32.mxu0 0.0
        %1178 = vmatmul.mubr.f32.gmra.mrb[0].mxu0 %v357
        %v1179 = vpop.f32.mrb[0].mxu0
        %v1180 = vpop.f32.mrb[0].mxu0
        %1181 = vmatprep.mubr.f32.mxu0 0.0
        %1182 = vmatmul.mubr.f32.gmra.mrb[0].mxu0 %v360
        %v1183 = vpop.f32.mrb[0].mxu0
        %v1184 = vadd.f32 0.0, %v1183
        %v1185 = vpop.f32.mrb[0].mxu0
        %v1186 = vadd.f32 0.0, %v1185
        %1187 = vmatprep.mubr.f32.mxu0 0.0
        %1188 = vmatmul.mubr.f32.gmra.mrb[0].mxu0 %v363
        %v1189 = vpop.f32.mrb[0].mxu0
        %v1190 = vadd.f32 0.0, %v1189
        %v1191 = vpop.f32.mrb[0].mxu0
        %v1192 = vadd.f32 0.0, %v1191
        %1193 = vmatprep.mubr.f32.mxu0 0.0
        %1194 = vmatmul.mubr.f32.gmra.mrb[0].mxu0 %v366
        %v1195 = vpop.f32.mrb[0].mxu0
        %v1196 = vadd.f32 0.0, %v1195
        %v1197 = vpop.f32.mrb[0].mxu0
        %v1198 = vadd.f32 0.0, %v1197
        %1199 = vdwg.mxu0
        %1200 = vmatprep.subr.mxu0 %v407
        %1201 = vmatpush1.msra.mxu0 %v405
        %1202 = vmatprep.subr.mxu0 0.0
        %1203 = vmatpush1.msra.mxu0 0.0
        %1204 = vmatprep.subr.mxu0 0.0
        %1205 = vmatpush1.msra.mxu0 0.0
        %1206 = vmatprep.subr.mxu0 0.0
        %1207 = vmatpush1.msra.mxu0 0.0
        %1208 = vmatprep.subr.mxu0 0.0
        %1209 = vmatpush1.msra.mxu0 0.0
        %1210 = vmatprep.subr.mxu0 0.0
        %1211 = vmatpush1.msra.mxu0 0.0
        %1212 = vmatprep.subr.mxu0 0.0
        %1213 = vmatpush1.msra.mxu0 0.0
        %1214 = vmatprep.subr.mxu0 0.0
        %1215 = vmatpush1.msra.mxu0 0.0
        %1216 = vmatprep.subr.mxu0 0.0
        %1217 = vmatpush1.msra.mxu0 0.0
        %1218 = vmatprep.subr.mxu0 0.0
        %1219 = vmatpush1.msra.mxu0 0.0
        %1220 = vmatprep.subr.mxu0 0.0
        %1221 = vmatpush1.msra.mxu0 0.0
        %1222 = vmatprep.subr.mxu0 0.0
        %1223 = vmatpush1.msra.mxu0 0.0
        %1224 = vmatprep.subr.mxu0 0.0
        %1225 = vmatpush1.msra.mxu0 0.0
        %1226 = vmatprep.subr.mxu0 0.0
        %1227 = vmatpush1.msra.mxu0 0.0
        %1228 = vmatprep.subr.mxu0 0.0
        %1229 = vmatpush1.msra.mxu0 0.0
        %1230 = vmatprep.subr.mxu0 0.0
        %1231 = vmatpush1.msra.mxu0 0.0
        %1232 = vmatprep.subr.mxu0 0.0
        %1233 = vmatpush1.msra.mxu0 0.0
        %1234 = vmatprep.subr.mxu0 0.0
        %1235 = vmatpush1.msra.mxu0 0.0
        %1236 = vmatprep.subr.mxu0 0.0
        %1237 = vmatpush1.msra.mxu0 0.0
        %1238 = vmatprep.subr.mxu0 0.0
        %1239 = vmatpush1.msra.mxu0 0.0
        %1240 = vmatprep.subr.mxu0 0.0
        %1241 = vmatpush1.msra.mxu0 0.0
        %1242 = vmatprep.subr.mxu0 0.0
        %1243 = vmatpush1.msra.mxu0 0.0
        %1244 = vmatprep.subr.mxu0 0.0
        %1245 = vmatpush1.msra.mxu0 0.0
        %1246 = vmatprep.subr.mxu0 0.0
        %1247 = vmatpush1.msra.mxu0 0.0
        %1248 = vmatprep.subr.mxu0 0.0
        %1249 = vmatpush1.msra.mxu0 0.0
        %1250 = vmatprep.subr.mxu0 0.0
        %1251 = vmatpush1.msra.mxu0 0.0
        %1252 = vmatprep.subr.mxu0 0.0
        %1253 = vmatpush1.msra.mxu0 0.0
        %1254 = vmatprep.subr.mxu0 0.0
        %1255 = vmatpush1.msra.mxu0 0.0
        %1256 = vmatprep.subr.mxu0 0.0
        %1257 = vmatpush1.msra.mxu0 0.0
        %1258 = vmatprep.subr.mxu0 0.0
        %1259 = vmatpush1.msra.mxu0 0.0
        %1260 = vmatprep.subr.mxu0 0.0
        %1261 = vmatpush1.msra.mxu0 0.0
        %1262 = vmatprep.subr.mxu0 0.0
        %1263 = vmatpush1.msra.mxu0 0.0
        %1264 = vmatprep.mubr.f32.mxu0 0.0
        %1265 = vmatmul.mubr.f32.gmra.mrb[0].mxu0 %v357
        %v1266 = vpop.f32.mrb[0].mxu0
        %v1267 = vpop.f32.mrb[0].mxu0
        %1268 = vmatprep.mubr.f32.mxu0 0.0
        %1269 = vmatmul.mubr.f32.gmra.mrb[0].mxu0 %v360
        %v1270 = vpop.f32.mrb[0].mxu0
        %v1271 = vadd.f32 0.0, %v1270
        %v1272 = vpop.f32.mrb[0].mxu0
        %v1273 = vadd.f32 0.0, %v1272
        %1274 = vmatprep.mubr.f32.mxu0 0.0
        %1275 = vmatmul.mubr.f32.gmra.mrb[0].mxu0 %v363
        %v1276 = vpop.f32.mrb[0].mxu0
        %v1277 = vadd.f32 0.0, %v1276
        %v1278 = vpop.f32.mrb[0].mxu0
        %v1279 = vadd.f32 0.0, %v1278
        %1280 = vmatprep.mubr.f32.mxu0 0.0
        %1281 = vmatmul.mubr.f32.gmra.mrb[0].mxu0 %v366
        %v1282 = vpop.f32.mrb[0].mxu0
        %v1283 = vadd.f32 0.0, %v1282
        %v1284 = vpop.f32.mrb[0].mxu0
        %v1285 = vadd.f32 0.0, %v1284
        %1286 = vdwg.mxu0
        %1287 = vmatprep.subr.mxu0 %v411
        %1288 = vmatpush1.msra.mxu0 %v409
        %1289 = vmatprep.subr.mxu0 0.0
        %1290 = vmatpush1.msra.mxu0 0.0
        %1291 = vmatprep.subr.mxu0 0.0
        %1292 = vmatpush1.msra.mxu0 0.0
        %1293 = vmatprep.subr.mxu0 0.0
        %1294 = vmatpush1.msra.mxu0 0.0
        %1295 = vmatprep.subr.mxu0 0.0
        %1296 = vmatpush1.msra.mxu0 0.0
        %1297 = vmatprep.subr.mxu0 0.0
        %1298 = vmatpush1.msra.mxu0 0.0
        %1299 = vmatprep.subr.mxu0 0.0
        %1300 = vmatpush1.msra.mxu0 0.0
        %1301 = vmatprep.subr.mxu0 0.0
        %1302 = vmatpush1.msra.mxu0 0.0
        %1303 = vmatprep.subr.mxu0 0.0
        %1304 = vmatpush1.msra.mxu0 0.0
        %1305 = vmatprep.subr.mxu0 0.0
        %1306 = vmatpush1.msra.mxu0 0.0
        %1307 = vmatprep.subr.mxu0 0.0
        %1308 = vmatpush1.msra.mxu0 0.0
        %1309 = vmatprep.subr.mxu0 0.0
        %1310 = vmatpush1.msra.mxu0 0.0
        %1311 = vmatprep.subr.mxu0 0.0
        %1312 = vmatpush1.msra.mxu0 0.0
        %1313 = vmatprep.subr.mxu0 0.0
        %1314 = vmatpush1.msra.mxu0 0.0
        %1315 = vmatprep.subr.mxu0 0.0
        %1316 = vmatpush1.msra.mxu0 0.0
        %1317 = vmatprep.subr.mxu0 0.0
        %1318 = vmatpush1.msra.mxu0 0.0
        %1319 = vmatprep.subr.mxu0 0.0
        %1320 = vmatpush1.msra.mxu0 0.0
        %1321 = vmatprep.subr.mxu0 0.0
        %1322 = vmatpush1.msra.mxu0 0.0
        %1323 = vmatprep.subr.mxu0 0.0
        %1324 = vmatpush1.msra.mxu0 0.0
        %1325 = vmatprep.subr.mxu0 0.0
        %1326 = vmatpush1.msra.mxu0 0.0
        %1327 = vmatprep.subr.mxu0 0.0
        %1328 = vmatpush1.msra.mxu0 0.0
        %1329 = vmatprep.subr.mxu0 0.0
        %1330 = vmatpush1.msra.mxu0 0.0
        %1331 = vmatprep.subr.mxu0 0.0
        %1332 = vmatpush1.msra.mxu0 0.0
        %1333 = vmatprep.subr.mxu0 0.0
        %1334 = vmatpush1.msra.mxu0 0.0
        %1335 = vmatprep.subr.mxu0 0.0
        %1336 = vmatpush1.msra.mxu0 0.0
        %1337 = vmatprep.subr.mxu0 0.0
        %1338 = vmatpush1.msra.mxu0 0.0
        %1339 = vmatprep.subr.mxu0 0.0
        %1340 = vmatpush1.msra.mxu0 0.0
        %1341 = vmatprep.subr.mxu0 0.0
        %1342 = vmatpush1.msra.mxu0 0.0
        %1343 = vmatprep.subr.mxu0 0.0
        %1344 = vmatpush1.msra.mxu0 0.0
        %1345 = vmatprep.subr.mxu0 0.0
        %1346 = vmatpush1.msra.mxu0 0.0
        %1347 = vmatprep.subr.mxu0 0.0
        %1348 = vmatpush1.msra.mxu0 0.0
        %1349 = vmatprep.subr.mxu0 0.0
        %1350 = vmatpush1.msra.mxu0 0.0
        %1351 = vmatprep.mubr.f32.mxu0 0.0
        %1352 = vmatmul.mubr.f32.gmra.mrb[0].mxu0 %v357
        %v1353 = vpop.f32.mrb[0].mxu0
        %v1354 = vpop.f32.mrb[0].mxu0
        %1355 = vmatprep.mubr.f32.mxu0 0.0
        %1356 = vmatmul.mubr.f32.gmra.mrb[0].mxu0 %v360
        %v1357 = vpop.f32.mrb[0].mxu0
        %v1358 = vpop.f32.mrb[0].mxu0
        %1359 = vmatprep.mubr.f32.mxu0 0.0
        %1360 = vmatmul.mubr.f32.gmra.mrb[0].mxu0 %v363
        %v1361 = vpop.f32.mrb[0].mxu0
        %v1362 = vadd.f32 0.0, %v1361
        %v1363 = vpop.f32.mrb[0].mxu0
        %v1364 = vadd.f32 0.0, %v1363
        %1365 = vmatprep.mubr.f32.mxu0 0.0
        %1366 = vmatmul.mubr.f32.gmra.mrb[0].mxu0 %v366
        %v1367 = vpop.f32.mrb[0].mxu0
        %v1368 = vpop.f32.mrb[0].mxu0
        %1369 = vdwg.mxu0
        %1370 = vmatprep.subr.mxu0 %v415
        %1371 = vmatpush1.msra.mxu0 %v413
        %1372 = vmatprep.subr.mxu0 0.0
        %1373 = vmatpush1.msra.mxu0 0.0
        %1374 = vmatprep.subr.mxu0 0.0
        %1375 = vmatpush1.msra.mxu0 0.0
        %1376 = vmatprep.subr.mxu0 0.0
        %1377 = vmatpush1.msra.mxu0 0.0
        %1378 = vmatprep.subr.mxu0 0.0
        %1379 = vmatpush1.msra.mxu0 0.0
        %1380 = vmatprep.subr.mxu0 0.0
        %1381 = vmatpush1.msra.mxu0 0.0
        %1382 = vmatprep.subr.mxu0 0.0
        %1383 = vmatpush1.msra.mxu0 0.0
        %1384 = vmatprep.subr.mxu0 0.0
        %1385 = vmatpush1.msra.mxu0 0.0
        %1386 = vmatprep.subr.mxu0 0.0
        %1387 = vmatpush1.msra.mxu0 0.0
        %1388 = vmatprep.subr.mxu0 0.0
        %1389 = vmatpush1.msra.mxu0 0.0
        %1390 = vmatprep.subr.mxu0 0.0
        %1391 = vmatpush1.msra.mxu0 0.0
        %1392 = vmatprep.subr.mxu0 0.0
        %1393 = vmatpush1.msra.mxu0 0.0
        %1394 = vmatprep.subr.mxu0 0.0
        %1395 = vmatpush1.msra.mxu0 0.0
        %1396 = vmatprep.subr.mxu0 0.0
        %1397 = vmatpush1.msra.mxu0 0.0
        %1398 = vmatprep.subr.mxu0 0.0
        %1399 = vmatpush1.msra.mxu0 0.0
        %1400 = vmatprep.subr.mxu0 0.0
        %1401 = vmatpush1.msra.mxu0 0.0
        %1402 = vmatprep.subr.mxu0 0.0
        %1403 = vmatpush1.msra.mxu0 0.0
        %1404 = vmatprep.subr.mxu0 0.0
        %1405 = vmatpush1.msra.mxu0 0.0
        %1406 = vmatprep.subr.mxu0 0.0
        %1407 = vmatpush1.msra.mxu0 0.0
        %1408 = vmatprep.subr.mxu0 0.0
        %1409 = vmatpush1.msra.mxu0 0.0
        %1410 = vmatprep.subr.mxu0 0.0
        %1411 = vmatpush1.msra.mxu0 0.0
        %1412 = vmatprep.subr.mxu0 0.0
        %1413 = vmatpush1.msra.mxu0 0.0
        %1414 = vmatprep.subr.mxu0 0.0
        %1415 = vmatpush1.msra.mxu0 0.0
        %1416 = vmatprep.subr.mxu0 0.0
        %1417 = vmatpush1.msra.mxu0 0.0
        %1418 = vmatprep.subr.mxu0 0.0
        %1419 = vmatpush1.msra.mxu0 0.0
        %1420 = vmatprep.subr.mxu0 0.0
        %1421 = vmatpush1.msra.mxu0 0.0
        %1422 = vmatprep.subr.mxu0 0.0
        %1423 = vmatpush1.msra.mxu0 0.0
        %1424 = vmatprep.subr.mxu0 0.0
        %1425 = vmatpush1.msra.mxu0 0.0
        %1426 = vmatprep.subr.mxu0 0.0
        %1427 = vmatpush1.msra.mxu0 0.0
        %1428 = vmatprep.subr.mxu0 0.0
        %1429 = vmatpush1.msra.mxu0 0.0
        %1430 = vmatprep.subr.mxu0 0.0
        %1431 = vmatpush1.msra.mxu0 0.0
        %1432 = vmatprep.subr.mxu0 0.0
        %1433 = vmatpush1.msra.mxu0 0.0
        %1434 = vmatprep.mubr.f32.mxu0 0.0
        %1435 = vmatmul.mubr.f32.gmra.mrb[0].mxu0 %v357
        %v1436 = vpop.f32.mrb[0].mxu0
        %v1437 = vpop.f32.mrb[0].mxu0
        %1438 = vmatprep.mubr.f32.mxu0 0.0
        %1439 = vmatmul.mubr.f32.gmra.mrb[0].mxu0 %v360
        %v1440 = vpop.f32.mrb[0].mxu0
        %v1441 = vpop.f32.mrb[0].mxu0
        %1442 = vmatprep.mubr.f32.mxu0 0.0
        %1443 = vmatmul.mubr.f32.gmra.mrb[0].mxu0 %v363
        %v1444 = vpop.f32.mrb[0].mxu0
        %v1445 = vadd.f32 0.0, %v1444
        %v1446 = vpop.f32.mrb[0].mxu0
        %v1447 = vadd.f32 0.0, %v1446
        %1448 = vmatprep.mubr.f32.mxu0 0.0
        %1449 = vmatmul.mubr.f32.gmra.mrb[0].mxu0 %v366
        %v1450 = vpop.f32.mrb[0].mxu0
        %v1451 = vpop.f32.mrb[0].mxu0
        %1452 = vdwg.mxu0
        %1453 = vst [vmem:[#allocation4] sm:$0xff] %v666
        %1454 = vst [vmem:[#allocation4 + $0x8] sm:$0xff] %v668
        %1455 = vst [vmem:[#allocation4 + $0x10] sm:$0xff] %v753
        %1456 = vst [vmem:[#allocation4 + $0x18] sm:$0xff] %v755
        %1457 = vst [vmem:[#allocation4 + $0x20] sm:$0xff] %v842
        %1458 = vst [vmem:[#allocation4 + $0x28] sm:$0xff] %v844
        %1459 = vst [vmem:[#allocation4 + $0x30] sm:$0xff] %v931
        %1460 = vst [vmem:[#allocation4 + $0x38] sm:$0xff] %v933
        %1461 = vst [vmem:[#allocation4 + $0x40] sm:$0xff] %v1020
        %1462 = vst [vmem:[#allocation4 + $0x48] sm:$0xff] %v1022
        %1463 = vst [vmem:[#allocation4 + $0x50] sm:$0xff] %v1109
        %1464 = vst [vmem:[#allocation4 + $0x58] sm:$0xff] %v1111
        %1465 = vst [vmem:[#allocation4 + $0x60] sm:$0xff] %v1196
        %1466 = vst [vmem:[#allocation4 + $0x68] sm:$0xff] %v1198
        %1467 = vst [vmem:[#allocation4 + $0x70] sm:$0xff] %v1283
        %1468 = vst [vmem:[#allocation4 + $0x78] sm:$0xff] %v1285
        %v1469 = vadd.f32 %v484, %v656
        %v1470 = vadd.f32 %v486, %v658
        %v1471 = vadd.f32 %v567, %v743
        %v1472 = vadd.f32 %v569, %v745
        %v1473 = vadd.f32 %v650, %v830
        %v1474 = vadd.f32 %v652, %v832
        %v1475 = vadd.f32 %v737, %v919
        %v1476 = vadd.f32 %v739, %v921
        %v1477 = vadd.f32 %v824, %v1008
        %v1478 = vadd.f32 %v826, %v1010
        %v1479 = vadd.f32 %v913, %v1097
        %v1480 = vadd.f32 %v915, %v1099
        %v1481 = vadd.f32 %v1002, %v1184
        %v1482 = vadd.f32 %v1004, %v1186
        %v1483 = vadd.f32 %v1091, %v1271
        %v1484 = vadd.f32 %v1093, %v1273
        %v1485 = vadd.f32 %v1469, %v836
        %v1486 = vadd.f32 %v1470, %v838
        %v1487 = vadd.f32 %v1471, %v925
        %v1488 = vadd.f32 %v1472, %v927
        %v1489 = vadd.f32 %v1473, %v1014
        %v1490 = vadd.f32 %v1474, %v1016
        %v1491 = vadd.f32 %v1475, %v1103
        %v1492 = vadd.f32 %v1476, %v1105
        %v1493 = vadd.f32 %v1477, %v1190
        %v1494 = vadd.f32 %v1478, %v1192
        %v1495 = vadd.f32 %v1479, %v1277
        %v1496 = vadd.f32 %v1480, %v1279
        %v1497 = vadd.f32 %v1481, %v1362
        %v1498 = vadd.f32 %v1482, %v1364
        %v1499 = vadd.f32 %v1483, %v1445
        %v1500 = vadd.f32 %v1484, %v1447
        %v1501 = vld [vmem:[%s4] sm:$0xff]
        %1503 = vset.pattern.permute.xlu0 0
        %1504 = vperm.xlu0 %1503, %v1501
        %v1505 = vpop.permute.xlu0 %1504
        %v1507 = vadd.f32 %v1485, %v1505
        %v1508 = vadd.f32 %v1486, %v1505
        %v1509 = vadd.f32 %v1487, %v1505
        %v1510 = vadd.f32 %v1488, %v1505
        %v1511 = vadd.f32 %v1489, %v1505
        %v1512 = vadd.f32 %v1490, %v1505
        %v1513 = vadd.f32 %v1491, %v1505
        %v1514 = vadd.f32 %v1492, %v1505
        %v1515 = vadd.f32 %v1493, %v1505
        %v1516 = vadd.f32 %v1494, %v1505
        %v1517 = vadd.f32 %v1495, %v1505
        %v1518 = vadd.f32 %v1496, %v1505
        %v1519 = vadd.f32 %v1497, %v1505
        %v1520 = vadd.f32 %v1498, %v1505
        %v1521 = vadd.f32 %v1499, %v1505
        %v1522 = vadd.f32 %v1500, %v1505
        %v1523 = vmax.f32 %v1507, 0.0
        %v1524 = vmax.f32 %v1508, 0.0
        %v1525 = vmax.f32 %v1509, 0.0
        %v1526 = vmax.f32 %v1510, 0.0
        %v1527 = vmax.f32 %v1511, 0.0
        %v1528 = vmax.f32 %v1512, 0.0
        %v1529 = vmax.f32 %v1513, 0.0
        %v1530 = vmax.f32 %v1514, 0.0
        %v1531 = vmax.f32 %v1515, 0.0
        %v1532 = vmax.f32 %v1516, 0.0
        %v1533 = vmax.f32 %v1517, 0.0
        %v1534 = vmax.f32 %v1518, 0.0
        %v1535 = vmax.f32 %v1519, 0.0
        %v1536 = vmax.f32 %v1520, 0.0
        %v1537 = vmax.f32 %v1521, 0.0
        %v1538 = vmax.f32 %v1522, 0.0
        %1539 = vst [vmem:[#allocation3] sm:$0xff] 0.0
        %1540 = vst [vmem:[#allocation3 + $0x8] sm:$0xff] 0.0
        %1541 = vst [vmem:[#allocation3 + $0x90] sm:$0xff] 0.0
        %1542 = vst [vmem:[#allocation3 + $0x98] sm:$0xff] 0.0
        %1543 = vst [vmem:[#allocation3 + $0x10] sm:$0xff] %v1523
        %1544 = vst [vmem:[#allocation3 + $0x18] sm:$0xff] %v1524
        %1545 = vst [vmem:[#allocation3 + $0x20] sm:$0xff] %v1525
        %1546 = vst [vmem:[#allocation3 + $0x28] sm:$0xff] %v1526
        %1547 = vst [vmem:[#allocation3 + $0x30] sm:$0xff] %v1527
        %1548 = vst [vmem:[#allocation3 + $0x38] sm:$0xff] %v1528
        %1549 = vst [vmem:[#allocation3 + $0x40] sm:$0xff] %v1529
        %1550 = vst [vmem:[#allocation3 + $0x48] sm:$0xff] %v1530
        %1551 = vst [vmem:[#allocation3 + $0x50] sm:$0xff] %v1531
        %1552 = vst [vmem:[#allocation3 + $0x58] sm:$0xff] %v1532
        %1553 = vst [vmem:[#allocation3 + $0x60] sm:$0xff] %v1533
        %1554 = vst [vmem:[#allocation3 + $0x68] sm:$0xff] %v1534
        %1555 = vst [vmem:[#allocation3 + $0x70] sm:$0xff] %v1535
        %1556 = vst [vmem:[#allocation3 + $0x78] sm:$0xff] %v1536
        %1557 = vst [vmem:[#allocation3 + $0x80] sm:$0xff] %v1537
        %1558 = vst [vmem:[#allocation3 + $0x88] sm:$0xff] %v1538
        %v1559 = vld [vmem:[%s2] sm:$0xff]
        %v1560 = vld [vmem:[%s2 + $0x8] sm:$0xff]
        %v1561 = vld [vmem:[%s2 + $0x10] sm:$0xff]
        %v1562 = vld [vmem:[#allocation3] sm:$0xff]
        %v1563 = vld [vmem:[#allocation3 + $0x8] sm:$0xff]
        %v1564 = vld [vmem:[#allocation3 + $0x10] sm:$0xff]
        %v1565 = vld [vmem:[#allocation3 + $0x18] sm:$0xff]
        %v1566 = vld [vmem:[#allocation3 + $0x20] sm:$0xff]
        %v1567 = vld [vmem:[#allocation3 + $0x28] sm:$0xff]
        %v1568 = vld [vmem:[#allocation3 + $0x30] sm:$0xff]
        %v1569 = vld [vmem:[#allocation3 + $0x38] sm:$0xff]
        %v1570 = vld [vmem:[#allocation3 + $0x40] sm:$0xff]
        %v1571 = vld [vmem:[#allocation3 + $0x48] sm:$0xff]
        %v1572 = vld [vmem:[#allocation3 + $0x50] sm:$0xff]
        %v1573 = vld [vmem:[#allocation3 + $0x58] sm:$0xff]
        %v1574 = vld [vmem:[#allocation3 + $0x60] sm:$0xff]
        %v1575 = vld [vmem:[#allocation3 + $0x68] sm:$0xff]
        %v1576 = vld [vmem:[#allocation3 + $0x70] sm:$0xff]
        %v1577 = vld [vmem:[#allocation3 + $0x78] sm:$0xff]
        %v1578 = vld [vmem:[#allocation3 + $0x80] sm:$0xff]
        %v1579 = vld [vmem:[#allocation3 + $0x88] sm:$0xff]
        %v1580 = vld [vmem:[#allocation3 + $0x90] sm:$0xff]
        %v1581 = vld [vmem:[#allocation3 + $0x98] sm:$0xff]
        %vm1582 = vcmask 64512
        %v1584 = vsel %vm1582, %v1559, 0
        %v1587 = vsel %vm1582, %v1560, 0
        %v1590 = vsel %vm1582, %v1561, 0
        %1592 = vmatprep.subr.mxu0 %v1563
        %1593 = vmatpush1.msra.mxu0 %v1562
        %1594 = vmatprep.subr.mxu0 0.0
        %1595 = vmatpush1.msra.mxu0 0.0
        %1596 = vmatprep.subr.mxu0 0.0
        %1597 = vmatpush1.msra.mxu0 0.0
        %1598 = vmatprep.subr.mxu0 0.0
        %1599 = vmatpush1.msra.mxu0 0.0
        %1600 = vmatprep.subr.mxu0 0.0
        %1601 = vmatpush1.msra.mxu0 0.0
        %1602 = vmatprep.subr.mxu0 0.0
        %1603 = vmatpush1.msra.mxu0 0.0
        %1604 = vmatprep.subr.mxu0 0.0
        %1605 = vmatpush1.msra.mxu0 0.0
        %1606 = vmatprep.subr.mxu0 0.0
        %1607 = vmatpush1.msra.mxu0 0.0
        %1608 = vmatprep.subr.mxu0 0.0
        %1609 = vmatpush1.msra.mxu0 0.0
        %1610 = vmatprep.subr.mxu0 0.0
        %1611 = vmatpush1.msra.mxu0 0.0
        %1612 = vmatprep.subr.mxu0 0.0
        %1613 = vmatpush1.msra.mxu0 0.0
        %1614 = vmatprep.subr.mxu0 0.0
        %1615 = vmatpush1.msra.mxu0 0.0
        %1616 = vmatprep.subr.mxu0 0.0
        %1617 = vmatpush1.msra.mxu0 0.0
        %1618 = vmatprep.subr.mxu0 0.0
        %1619 = vmatpush1.msra.mxu0 0.0
        %1620 = vmatprep.subr.mxu0 0.0
        %1621 = vmatpush1.msra.mxu0 0.0
        %1622 = vmatprep.subr.mxu0 0.0
        %1623 = vmatpush1.msra.mxu0 0.0
        %1624 = vmatprep.subr.mxu0 0.0
        %1625 = vmatpush1.msra.mxu0 0.0
        %1626 = vmatprep.subr.mxu0 0.0
        %1627 = vmatpush1.msra.mxu0 0.0
        %1628 = vmatprep.subr.mxu0 0.0
        %1629 = vmatpush1.msra.mxu0 0.0
        %1630 = vmatprep.subr.mxu0 0.0
        %1631 = vmatpush1.msra.mxu0 0.0
        %1632 = vmatprep.subr.mxu0 0.0
        %1633 = vmatpush1.msra.mxu0 0.0
        %1634 = vmatprep.subr.mxu0 0.0
        %1635 = vmatpush1.msra.mxu0 0.0
        %1636 = vmatprep.subr.mxu0 0.0
        %1637 = vmatpush1.msra.mxu0 0.0
        %1638 = vmatprep.subr.mxu0 0.0
        %1639 = vmatpush1.msra.mxu0 0.0
        %1640 = vmatprep.subr.mxu0 0.0
        %1641 = vmatpush1.msra.mxu0 0.0
        %1642 = vmatprep.subr.mxu0 0.0
        %1643 = vmatpush1.msra.mxu0 0.0
        %1644 = vmatprep.subr.mxu0 0.0
        %1645 = vmatpush1.msra.mxu0 0.0
        %1646 = vmatprep.subr.mxu0 0.0
        %1647 = vmatpush1.msra.mxu0 0.0
        %1648 = vmatprep.subr.mxu0 0.0
        %1649 = vmatpush1.msra.mxu0 0.0
        %1650 = vmatprep.subr.mxu0 0.0
        %1651 = vmatpush1.msra.mxu0 0.0
        %1652 = vmatprep.subr.mxu0 0.0
        %1653 = vmatpush1.msra.mxu0 0.0
        %1654 = vmatprep.subr.mxu0 0.0
        %1655 = vmatpush1.msra.mxu0 0.0
        %1656 = vmatprep.mubr.f32.mxu0 0.0
        %1657 = vmatmul.mubr.f32.gmra.mrb[0].mxu0 %v1584
        %v1658 = vpop.f32.mrb[0].mxu0
        %v1659 = vadd.f32 0.0, %v1658
        %v1660 = vpop.f32.mrb[0].mxu0
        %v1661 = vadd.f32 0.0, %v1660
        %1662 = vmatprep.mubr.f32.mxu0 0.0
        %1663 = vmatmul.mubr.f32.gmra.mrb[0].mxu0 %v1587
        %v1664 = vpop.f32.mrb[0].mxu0
        %v1665 = vpop.f32.mrb[0].mxu0
        %1666 = vmatprep.mubr.f32.mxu0 0.0
        %1667 = vmatmul.mubr.f32.gmra.mrb[0].mxu0 %v1590
        %v1668 = vpop.f32.mrb[0].mxu0
        %v1669 = vpop.f32.mrb[0].mxu0
        %1670 = vdwg.mxu0
        %1671 = vmatprep.subr.mxu0 %v1565
        %1672 = vmatpush1.msra.mxu0 %v1564
        %1673 = vmatprep.subr.mxu0 0.0
        %1674 = vmatpush1.msra.mxu0 0.0
        %1675 = vmatprep.subr.mxu0 0.0
        %1676 = vmatpush1.msra.mxu0 0.0
        %1677 = vmatprep.subr.mxu0 0.0
        %1678 = vmatpush1.msra.mxu0 0.0
        %1679 = vmatprep.subr.mxu0 0.0
        %1680 = vmatpush1.msra.mxu0 0.0
        %1681 = vmatprep.subr.mxu0 0.0
        %1682 = vmatpush1.msra.mxu0 0.0
        %1683 = vmatprep.subr.mxu0 0.0
        %1684 = vmatpush1.msra.mxu0 0.0
        %1685 = vmatprep.subr.mxu0 0.0
        %1686 = vmatpush1.msra.mxu0 0.0
        %1687 = vmatprep.subr.mxu0 0.0
        %1688 = vmatpush1.msra.mxu0 0.0
        %1689 = vmatprep.subr.mxu0 0.0
        %1690 = vmatpush1.msra.mxu0 0.0
        %1691 = vmatprep.subr.mxu0 0.0
        %1692 = vmatpush1.msra.mxu0 0.0
        %1693 = vmatprep.subr.mxu0 0.0
        %1694 = vmatpush1.msra.mxu0 0.0
        %1695 = vmatprep.subr.mxu0 0.0
        %1696 = vmatpush1.msra.mxu0 0.0
        %1697 = vmatprep.subr.mxu0 0.0
        %1698 = vmatpush1.msra.mxu0 0.0
        %1699 = vmatprep.subr.mxu0 0.0
        %1700 = vmatpush1.msra.mxu0 0.0
        %1701 = vmatprep.subr.mxu0 0.0
        %1702 = vmatpush1.msra.mxu0 0.0
        %1703 = vmatprep.subr.mxu0 0.0
        %1704 = vmatpush1.msra.mxu0 0.0
        %1705 = vmatprep.subr.mxu0 0.0
        %1706 = vmatpush1.msra.mxu0 0.0
        %1707 = vmatprep.subr.mxu0 0.0
        %1708 = vmatpush1.msra.mxu0 0.0
        %1709 = vmatprep.subr.mxu0 0.0
        %1710 = vmatpush1.msra.mxu0 0.0
        %1711 = vmatprep.subr.mxu0 0.0
        %1712 = vmatpush1.msra.mxu0 0.0
        %1713 = vmatprep.subr.mxu0 0.0
        %1714 = vmatpush1.msra.mxu0 0.0
        %1715 = vmatprep.subr.mxu0 0.0
        %1716 = vmatpush1.msra.mxu0 0.0
        %1717 = vmatprep.subr.mxu0 0.0
        %1718 = vmatpush1.msra.mxu0 0.0
        %1719 = vmatprep.subr.mxu0 0.0
        %1720 = vmatpush1.msra.mxu0 0.0
        %1721 = vmatprep.subr.mxu0 0.0
        %1722 = vmatpush1.msra.mxu0 0.0
        %1723 = vmatprep.subr.mxu0 0.0
        %1724 = vmatpush1.msra.mxu0 0.0
        %1725 = vmatprep.subr.mxu0 0.0
        %1726 = vmatpush1.msra.mxu0 0.0
        %1727 = vmatprep.subr.mxu0 0.0
        %1728 = vmatpush1.msra.mxu0 0.0
        %1729 = vmatprep.subr.mxu0 0.0
        %1730 = vmatpush1.msra.mxu0 0.0
        %1731 = vmatprep.subr.mxu0 0.0
        %1732 = vmatpush1.msra.mxu0 0.0
        %1733 = vmatprep.subr.mxu0 0.0
        %1734 = vmatpush1.msra.mxu0 0.0
        %1735 = vmatprep.mubr.f32.mxu0 0.0
        %1736 = vmatmul.mubr.f32.gmra.mrb[0].mxu0 %v1584
        %v1737 = vpop.f32.mrb[0].mxu0
        %v1738 = vadd.f32 0.0, %v1737
        %v1739 = vpop.f32.mrb[0].mxu0
        %v1740 = vadd.f32 0.0, %v1739
        %1741 = vmatprep.mubr.f32.mxu0 0.0
        %1742 = vmatmul.mubr.f32.gmra.mrb[0].mxu0 %v1587
        %v1743 = vpop.f32.mrb[0].mxu0
        %v1744 = vadd.f32 0.0, %v1743
        %v1745 = vpop.f32.mrb[0].mxu0
        %v1746 = vadd.f32 0.0, %v1745
        %1747 = vmatprep.mubr.f32.mxu0 0.0
        %1748 = vmatmul.mubr.f32.gmra.mrb[0].mxu0 %v1590
        %v1749 = vpop.f32.mrb[0].mxu0
        %v1750 = vpop.f32.mrb[0].mxu0
        %1751 = vdwg.mxu0
        %1752 = vmatprep.subr.mxu0 %v1567
        %1753 = vmatpush1.msra.mxu0 %v1566
        %1754 = vmatprep.subr.mxu0 0.0
        %1755 = vmatpush1.msra.mxu0 0.0
        %1756 = vmatprep.subr.mxu0 0.0
        %1757 = vmatpush1.msra.mxu0 0.0
        %1758 = vmatprep.subr.mxu0 0.0
        %1759 = vmatpush1.msra.mxu0 0.0
        %1760 = vmatprep.subr.mxu0 0.0
        %1761 = vmatpush1.msra.mxu0 0.0
        %1762 = vmatprep.subr.mxu0 0.0
        %1763 = vmatpush1.msra.mxu0 0.0
        %1764 = vmatprep.subr.mxu0 0.0
        %1765 = vmatpush1.msra.mxu0 0.0
        %1766 = vmatprep.subr.mxu0 0.0
        %1767 = vmatpush1.msra.mxu0 0.0
        %1768 = vmatprep.subr.mxu0 0.0
        %1769 = vmatpush1.msra.mxu0 0.0
        %1770 = vmatprep.subr.mxu0 0.0
        %1771 = vmatpush1.msra.mxu0 0.0
        %1772 = vmatprep.subr.mxu0 0.0
        %1773 = vmatpush1.msra.mxu0 0.0
        %1774 = vmatprep.subr.mxu0 0.0
        %1775 = vmatpush1.msra.mxu0 0.0
        %1776 = vmatprep.subr.mxu0 0.0
        %1777 = vmatpush1.msra.mxu0 0.0
        %1778 = vmatprep.subr.mxu0 0.0
        %1779 = vmatpush1.msra.mxu0 0.0
        %1780 = vmatprep.subr.mxu0 0.0
        %1781 = vmatpush1.msra.mxu0 0.0
        %1782 = vmatprep.subr.mxu0 0.0
        %1783 = vmatpush1.msra.mxu0 0.0
        %1784 = vmatprep.subr.mxu0 0.0
        %1785 = vmatpush1.msra.mxu0 0.0
        %1786 = vmatprep.subr.mxu0 0.0
        %1787 = vmatpush1.msra.mxu0 0.0
        %1788 = vmatprep.subr.mxu0 0.0
        %1789 = vmatpush1.msra.mxu0 0.0
        %1790 = vmatprep.subr.mxu0 0.0
        %1791 = vmatpush1.msra.mxu0 0.0
        %1792 = vmatprep.subr.mxu0 0.0
        %1793 = vmatpush1.msra.mxu0 0.0
        %1794 = vmatprep.subr.mxu0 0.0
        %1795 = vmatpush1.msra.mxu0 0.0
        %1796 = vmatprep.subr.mxu0 0.0
        %1797 = vmatpush1.msra.mxu0 0.0
        %1798 = vmatprep.subr.mxu0 0.0
        %1799 = vmatpush1.msra.mxu0 0.0
        %1800 = vmatprep.subr.mxu0 0.0
        %1801 = vmatpush1.msra.mxu0 0.0
        %1802 = vmatprep.subr.mxu0 0.0
        %1803 = vmatpush1.msra.mxu0 0.0
        %1804 = vmatprep.subr.mxu0 0.0
        %1805 = vmatpush1.msra.mxu0 0.0
        %1806 = vmatprep.subr.mxu0 0.0
        %1807 = vmatpush1.msra.mxu0 0.0
        %1808 = vmatprep.subr.mxu0 0.0
        %1809 = vmatpush1.msra.mxu0 0.0
        %1810 = vmatprep.subr.mxu0 0.0
        %1811 = vmatpush1.msra.mxu0 0.0
        %1812 = vmatprep.subr.mxu0 0.0
        %1813 = vmatpush1.msra.mxu0 0.0
        %1814 = vmatprep.subr.mxu0 0.0
        %1815 = vmatpush1.msra.mxu0 0.0
        %1816 = vmatprep.mubr.f32.mxu0 0.0
        %1817 = vmatmul.mubr.f32.gmra.mrb[0].mxu0 %v1584
        %v1818 = vpop.f32.mrb[0].mxu0
        %v1819 = vadd.f32 0.0, %v1818
        %v1820 = vpop.f32.mrb[0].mxu0
        %v1821 = vadd.f32 0.0, %v1820
        %1822 = vmatprep.mubr.f32.mxu0 0.0
        %1823 = vmatmul.mubr.f32.gmra.mrb[0].mxu0 %v1587
        %v1824 = vpop.f32.mrb[0].mxu0
        %v1825 = vadd.f32 0.0, %v1824
        %v1826 = vpop.f32.mrb[0].mxu0
        %v1827 = vadd.f32 0.0, %v1826
        %1828 = vmatprep.mubr.f32.mxu0 0.0
        %1829 = vmatmul.mubr.f32.gmra.mrb[0].mxu0 %v1590
        %v1830 = vpop.f32.mrb[0].mxu0
        %v1831 = vadd.f32 0.0, %v1830
        %v1832 = vpop.f32.mrb[0].mxu0
        %v1833 = vadd.f32 0.0, %v1832
        %1834 = vdwg.mxu0
        %1835 = vmatprep.subr.mxu0 %v1569
        %1836 = vmatpush1.msra.mxu0 %v1568
        %1837 = vmatprep.subr.mxu0 0.0
        %1838 = vmatpush1.msra.mxu0 0.0
        %1839 = vmatprep.subr.mxu0 0.0
        %1840 = vmatpush1.msra.mxu0 0.0
        %1841 = vmatprep.subr.mxu0 0.0
        %1842 = vmatpush1.msra.mxu0 0.0
        %1843 = vmatprep.subr.mxu0 0.0
        %1844 = vmatpush1.msra.mxu0 0.0
        %1845 = vmatprep.subr.mxu0 0.0
        %1846 = vmatpush1.msra.mxu0 0.0
        %1847 = vmatprep.subr.mxu0 0.0
        %1848 = vmatpush1.msra.mxu0 0.0
        %1849 = vmatprep.subr.mxu0 0.0
        %1850 = vmatpush1.msra.mxu0 0.0
        %1851 = vmatprep.subr.mxu0 0.0
        %1852 = vmatpush1.msra.mxu0 0.0
        %1853 = vmatprep.subr.mxu0 0.0
        %1854 = vmatpush1.msra.mxu0 0.0
        %1855 = vmatprep.subr.mxu0 0.0
        %1856 = vmatpush1.msra.mxu0 0.0
        %1857 = vmatprep.subr.mxu0 0.0
        %1858 = vmatpush1.msra.mxu0 0.0
        %1859 = vmatprep.subr.mxu0 0.0
        %1860 = vmatpush1.msra.mxu0 0.0
        %1861 = vmatprep.subr.mxu0 0.0
        %1862 = vmatpush1.msra.mxu0 0.0
        %1863 = vmatprep.subr.mxu0 0.0
        %1864 = vmatpush1.msra.mxu0 0.0
        %1865 = vmatprep.subr.mxu0 0.0
        %1866 = vmatpush1.msra.mxu0 0.0
        %1867 = vmatprep.subr.mxu0 0.0
        %1868 = vmatpush1.msra.mxu0 0.0
        %1869 = vmatprep.subr.mxu0 0.0
        %1870 = vmatpush1.msra.mxu0 0.0
        %1871 = vmatprep.subr.mxu0 0.0
        %1872 = vmatpush1.msra.mxu0 0.0
        %1873 = vmatprep.subr.mxu0 0.0
        %1874 = vmatpush1.msra.mxu0 0.0
        %1875 = vmatprep.subr.mxu0 0.0
        %1876 = vmatpush1.msra.mxu0 0.0
        %1877 = vmatprep.subr.mxu0 0.0
        %1878 = vmatpush1.msra.mxu0 0.0
        %1879 = vmatprep.subr.mxu0 0.0
        %1880 = vmatpush1.msra.mxu0 0.0
        %1881 = vmatprep.subr.mxu0 0.0
        %1882 = vmatpush1.msra.mxu0 0.0
        %1883 = vmatprep.subr.mxu0 0.0
        %1884 = vmatpush1.msra.mxu0 0.0
        %1885 = vmatprep.subr.mxu0 0.0
        %1886 = vmatpush1.msra.mxu0 0.0
        %1887 = vmatprep.subr.mxu0 0.0
        %1888 = vmatpush1.msra.mxu0 0.0
        %1889 = vmatprep.subr.mxu0 0.0
        %1890 = vmatpush1.msra.mxu0 0.0
        %1891 = vmatprep.subr.mxu0 0.0
        %1892 = vmatpush1.msra.mxu0 0.0
        %1893 = vmatprep.subr.mxu0 0.0
        %1894 = vmatpush1.msra.mxu0 0.0
        %1895 = vmatprep.subr.mxu0 0.0
        %1896 = vmatpush1.msra.mxu0 0.0
        %1897 = vmatprep.subr.mxu0 0.0
        %1898 = vmatpush1.msra.mxu0 0.0
        %1899 = vmatprep.mubr.f32.mxu0 0.0
        %1900 = vmatmul.mubr.f32.gmra.mrb[0].mxu0 %v1584
        %v1901 = vpop.f32.mrb[0].mxu0
        %v1902 = vadd.f32 0.0, %v1901
        %v1903 = vpop.f32.mrb[0].mxu0
        %v1904 = vadd.f32 0.0, %v1903
        %1905 = vmatprep.mubr.f32.mxu0 0.0
        %1906 = vmatmul.mubr.f32.gmra.mrb[0].mxu0 %v1587
        %v1907 = vpop.f32.mrb[0].mxu0
        %v1908 = vadd.f32 0.0, %v1907
        %v1909 = vpop.f32.mrb[0].mxu0
        %v1910 = vadd.f32 0.0, %v1909
        %1911 = vmatprep.mubr.f32.mxu0 0.0
        %1912 = vmatmul.mubr.f32.gmra.mrb[0].mxu0 %v1590
        %v1913 = vpop.f32.mrb[0].mxu0
        %v1914 = vadd.f32 0.0, %v1913
        %v1915 = vpop.f32.mrb[0].mxu0
        %v1916 = vadd.f32 0.0, %v1915
        %1917 = vdwg.mxu0
        %1918 = vmatprep.subr.mxu0 %v1571
        %1919 = vmatpush1.msra.mxu0 %v1570
        %1920 = vmatprep.subr.mxu0 0.0
        %1921 = vmatpush1.msra.mxu0 0.0
        %1922 = vmatprep.subr.mxu0 0.0
        %1923 = vmatpush1.msra.mxu0 0.0
        %1924 = vmatprep.subr.mxu0 0.0
        %1925 = vmatpush1.msra.mxu0 0.0
        %1926 = vmatprep.subr.mxu0 0.0
        %1927 = vmatpush1.msra.mxu0 0.0
        %1928 = vmatprep.subr.mxu0 0.0
        %1929 = vmatpush1.msra.mxu0 0.0
        %1930 = vmatprep.subr.mxu0 0.0
        %1931 = vmatpush1.msra.mxu0 0.0
        %1932 = vmatprep.subr.mxu0 0.0
        %1933 = vmatpush1.msra.mxu0 0.0
        %1934 = vmatprep.subr.mxu0 0.0
        %1935 = vmatpush1.msra.mxu0 0.0
        %1936 = vmatprep.subr.mxu0 0.0
        %1937 = vmatpush1.msra.mxu0 0.0
        %1938 = vmatprep.subr.mxu0 0.0
        %1939 = vmatpush1.msra.mxu0 0.0
        %1940 = vmatprep.subr.mxu0 0.0
        %1941 = vmatpush1.msra.mxu0 0.0
        %1942 = vmatprep.subr.mxu0 0.0
        %1943 = vmatpush1.msra.mxu0 0.0
        %1944 = vmatprep.subr.mxu0 0.0
        %1945 = vmatpush1.msra.mxu0 0.0
        %1946 = vmatprep.subr.mxu0 0.0
        %1947 = vmatpush1.msra.mxu0 0.0
        %1948 = vmatprep.subr.mxu0 0.0
        %1949 = vmatpush1.msra.mxu0 0.0
        %1950 = vmatprep.subr.mxu0 0.0
        %1951 = vmatpush1.msra.mxu0 0.0
        %1952 = vmatprep.subr.mxu0 0.0
        %1953 = vmatpush1.msra.mxu0 0.0
        %1954 = vmatprep.subr.mxu0 0.0
        %1955 = vmatpush1.msra.mxu0 0.0
        %1956 = vmatprep.subr.mxu0 0.0
        %1957 = vmatpush1.msra.mxu0 0.0
        %1958 = vmatprep.subr.mxu0 0.0
        %1959 = vmatpush1.msra.mxu0 0.0
        %1960 = vmatprep.subr.mxu0 0.0
        %1961 = vmatpush1.msra.mxu0 0.0
        %1962 = vmatprep.subr.mxu0 0.0
        %1963 = vmatpush1.msra.mxu0 0.0
        %1964 = vmatprep.subr.mxu0 0.0
        %1965 = vmatpush1.msra.mxu0 0.0
        %1966 = vmatprep.subr.mxu0 0.0
        %1967 = vmatpush1.msra.mxu0 0.0
        %1968 = vmatprep.subr.mxu0 0.0
        %1969 = vmatpush1.msra.mxu0 0.0
        %1970 = vmatprep.subr.mxu0 0.0
        %1971 = vmatpush1.msra.mxu0 0.0
        %1972 = vmatprep.subr.mxu0 0.0
        %1973 = vmatpush1.msra.mxu0 0.0
        %1974 = vmatprep.subr.mxu0 0.0
        %1975 = vmatpush1.msra.mxu0 0.0
        %1976 = vmatprep.subr.mxu0 0.0
        %1977 = vmatpush1.msra.mxu0 0.0
        %1978 = vmatprep.subr.mxu0 0.0
        %1979 = vmatpush1.msra.mxu0 0.0
        %1980 = vmatprep.subr.mxu0 0.0
        %1981 = vmatpush1.msra.mxu0 0.0
        %1982 = vmatprep.mubr.f32.mxu0 0.0
        %1983 = vmatmul.mubr.f32.gmra.mrb[0].mxu0 %v1584
        %v1984 = vpop.f32.mrb[0].mxu0
        %v1985 = vadd.f32 0.0, %v1984
        %v1986 = vpop.f32.mrb[0].mxu0
        %v1987 = vadd.f32 0.0, %v1986
        %1988 = vmatprep.mubr.f32.mxu0 0.0
        %1989 = vmatmul.mubr.f32.gmra.mrb[0].mxu0 %v1587
        %v1990 = vpop.f32.mrb[0].mxu0
        %v1991 = vadd.f32 0.0, %v1990
        %v1992 = vpop.f32.mrb[0].mxu0
        %v1993 = vadd.f32 0.0, %v1992
        %1994 = vmatprep.mubr.f32.mxu0 0.0
        %1995 = vmatmul.mubr.f32.gmra.mrb[0].mxu0 %v1590
        %v1996 = vpop.f32.mrb[0].mxu0
        %v1997 = vadd.f32 0.0, %v1996
        %v1998 = vpop.f32.mrb[0].mxu0
        %v1999 = vadd.f32 0.0, %v1998
        %2000 = vdwg.mxu0
        %2001 = vmatprep.subr.mxu0 %v1573
        %2002 = vmatpush1.msra.mxu0 %v1572
        %2003 = vmatprep.subr.mxu0 0.0
        %2004 = vmatpush1.msra.mxu0 0.0
        %2005 = vmatprep.subr.mxu0 0.0
        %2006 = vmatpush1.msra.mxu0 0.0
        %2007 = vmatprep.subr.mxu0 0.0
        %2008 = vmatpush1.msra.mxu0 0.0
        %2009 = vmatprep.subr.mxu0 0.0
        %2010 = vmatpush1.msra.mxu0 0.0
        %2011 = vmatprep.subr.mxu0 0.0
        %2012 = vmatpush1.msra.mxu0 0.0
        %2013 = vmatprep.subr.mxu0 0.0
        %2014 = vmatpush1.msra.mxu0 0.0
        %2015 = vmatprep.subr.mxu0 0.0
        %2016 = vmatpush1.msra.mxu0 0.0
        %2017 = vmatprep.subr.mxu0 0.0
        %2018 = vmatpush1.msra.mxu0 0.0
        %2019 = vmatprep.subr.mxu0 0.0
        %2020 = vmatpush1.msra.mxu0 0.0
        %2021 = vmatprep.subr.mxu0 0.0
        %2022 = vmatpush1.msra.mxu0 0.0
        %2023 = vmatprep.subr.mxu0 0.0
        %2024 = vmatpush1.msra.mxu0 0.0
        %2025 = vmatprep.subr.mxu0 0.0
        %2026 = vmatpush1.msra.mxu0 0.0
        %2027 = vmatprep.subr.mxu0 0.0
        %2028 = vmatpush1.msra.mxu0 0.0
        %2029 = vmatprep.subr.mxu0 0.0
        %2030 = vmatpush1.msra.mxu0 0.0
        %2031 = vmatprep.subr.mxu0 0.0
        %2032 = vmatpush1.msra.mxu0 0.0
        %2033 = vmatprep.subr.mxu0 0.0
        %2034 = vmatpush1.msra.mxu0 0.0
        %2035 = vmatprep.subr.mxu0 0.0
        %2036 = vmatpush1.msra.mxu0 0.0
        %2037 = vmatprep.subr.mxu0 0.0
        %2038 = vmatpush1.msra.mxu0 0.0
        %2039 = vmatprep.subr.mxu0 0.0
        %2040 = vmatpush1.msra.mxu0 0.0
        %2041 = vmatprep.subr.mxu0 0.0
        %2042 = vmatpush1.msra.mxu0 0.0
        %2043 = vmatprep.subr.mxu0 0.0
        %2044 = vmatpush1.msra.mxu0 0.0
        %2045 = vmatprep.subr.mxu0 0.0
        %2046 = vmatpush1.msra.mxu0 0.0
        %2047 = vmatprep.subr.mxu0 0.0
        %2048 = vmatpush1.msra.mxu0 0.0
        %2049 = vmatprep.subr.mxu0 0.0
        %2050 = vmatpush1.msra.mxu0 0.0
        %2051 = vmatprep.subr.mxu0 0.0
        %2052 = vmatpush1.msra.mxu0 0.0
        %2053 = vmatprep.subr.mxu0 0.0
        %2054 = vmatpush1.msra.mxu0 0.0
        %2055 = vmatprep.subr.mxu0 0.0
        %2056 = vmatpush1.msra.mxu0 0.0
        %2057 = vmatprep.subr.mxu0 0.0
        %2058 = vmatpush1.msra.mxu0 0.0
        %2059 = vmatprep.subr.mxu0 0.0
        %2060 = vmatpush1.msra.mxu0 0.0
        %2061 = vmatprep.subr.mxu0 0.0
        %2062 = vmatpush1.msra.mxu0 0.0
        %2063 = vmatprep.subr.mxu0 0.0
        %2064 = vmatpush1.msra.mxu0 0.0
        %2065 = vmatprep.mubr.f32.mxu0 0.0
        %2066 = vmatmul.mubr.f32.gmra.mrb[0].mxu0 %v1584
        %v2067 = vpop.f32.mrb[0].mxu0
        %v2068 = vadd.f32 0.0, %v2067
        %v2069 = vpop.f32.mrb[0].mxu0
        %v2070 = vadd.f32 0.0, %v2069
        %2071 = vmatprep.mubr.f32.mxu0 0.0
        %2072 = vmatmul.mubr.f32.gmra.mrb[0].mxu0 %v1587
        %v2073 = vpop.f32.mrb[0].mxu0
        %v2074 = vadd.f32 0.0, %v2073
        %v2075 = vpop.f32.mrb[0].mxu0
        %v2076 = vadd.f32 0.0, %v2075
        %2077 = vmatprep.mubr.f32.mxu0 0.0
        %2078 = vmatmul.mubr.f32.gmra.mrb[0].mxu0 %v1590
        %v2079 = vpop.f32.mrb[0].mxu0
        %v2080 = vadd.f32 0.0, %v2079
        %v2081 = vpop.f32.mrb[0].mxu0
        %v2082 = vadd.f32 0.0, %v2081
        %2083 = vdwg.mxu0
        %2084 = vmatprep.subr.mxu0 %v1575
        %2085 = vmatpush1.msra.mxu0 %v1574
        %2086 = vmatprep.subr.mxu0 0.0
        %2087 = vmatpush1.msra.mxu0 0.0
        %2088 = vmatprep.subr.mxu0 0.0
        %2089 = vmatpush1.msra.mxu0 0.0
        %2090 = vmatprep.subr.mxu0 0.0
        %2091 = vmatpush1.msra.mxu0 0.0
        %2092 = vmatprep.subr.mxu0 0.0
        %2093 = vmatpush1.msra.mxu0 0.0
        %2094 = vmatprep.subr.mxu0 0.0
        %2095 = vmatpush1.msra.mxu0 0.0
        %2096 = vmatprep.subr.mxu0 0.0
        %2097 = vmatpush1.msra.mxu0 0.0
        %2098 = vmatprep.subr.mxu0 0.0
        %2099 = vmatpush1.msra.mxu0 0.0
        %2100 = vmatprep.subr.mxu0 0.0
        %2101 = vmatpush1.msra.mxu0 0.0
        %2102 = vmatprep.subr.mxu0 0.0
        %2103 = vmatpush1.msra.mxu0 0.0
        %2104 = vmatprep.subr.mxu0 0.0
        %2105 = vmatpush1.msra.mxu0 0.0
        %2106 = vmatprep.subr.mxu0 0.0
        %2107 = vmatpush1.msra.mxu0 0.0
        %2108 = vmatprep.subr.mxu0 0.0
        %2109 = vmatpush1.msra.mxu0 0.0
        %2110 = vmatprep.subr.mxu0 0.0
        %2111 = vmatpush1.msra.mxu0 0.0
        %2112 = vmatprep.subr.mxu0 0.0
        %2113 = vmatpush1.msra.mxu0 0.0
        %2114 = vmatprep.subr.mxu0 0.0
        %2115 = vmatpush1.msra.mxu0 0.0
        %2116 = vmatprep.subr.mxu0 0.0
        %2117 = vmatpush1.msra.mxu0 0.0
        %2118 = vmatprep.subr.mxu0 0.0
        %2119 = vmatpush1.msra.mxu0 0.0
        %2120 = vmatprep.subr.mxu0 0.0
        %2121 = vmatpush1.msra.mxu0 0.0
        %2122 = vmatprep.subr.mxu0 0.0
        %2123 = vmatpush1.msra.mxu0 0.0
        %2124 = vmatprep.subr.mxu0 0.0
        %2125 = vmatpush1.msra.mxu0 0.0
        %2126 = vmatprep.subr.mxu0 0.0
        %2127 = vmatpush1.msra.mxu0 0.0
        %2128 = vmatprep.subr.mxu0 0.0
        %2129 = vmatpush1.msra.mxu0 0.0
        %2130 = vmatprep.subr.mxu0 0.0
        %2131 = vmatpush1.msra.mxu0 0.0
        %2132 = vmatprep.subr.mxu0 0.0
        %2133 = vmatpush1.msra.mxu0 0.0
        %2134 = vmatprep.subr.mxu0 0.0
        %2135 = vmatpush1.msra.mxu0 0.0
        %2136 = vmatprep.subr.mxu0 0.0
        %2137 = vmatpush1.msra.mxu0 0.0
        %2138 = vmatprep.subr.mxu0 0.0
        %2139 = vmatpush1.msra.mxu0 0.0
        %2140 = vmatprep.subr.mxu0 0.0
        %2141 = vmatpush1.msra.mxu0 0.0
        %2142 = vmatprep.subr.mxu0 0.0
        %2143 = vmatpush1.msra.mxu0 0.0
        %2144 = vmatprep.subr.mxu0 0.0
        %2145 = vmatpush1.msra.mxu0 0.0
        %2146 = vmatprep.subr.mxu0 0.0
        %2147 = vmatpush1.msra.mxu0 0.0
        %2148 = vmatprep.mubr.f32.mxu0 0.0
        %2149 = vmatmul.mubr.f32.gmra.mrb[0].mxu0 %v1584
        %v2150 = vpop.f32.mrb[0].mxu0
        %v2151 = vadd.f32 0.0, %v2150
        %v2152 = vpop.f32.mrb[0].mxu0
        %v2153 = vadd.f32 0.0, %v2152
        %2154 = vmatprep.mubr.f32.mxu0 0.0
        %2155 = vmatmul.mubr.f32.gmra.mrb[0].mxu0 %v1587
        %v2156 = vpop.f32.mrb[0].mxu0
        %v2157 = vadd.f32 0.0, %v2156
        %v2158 = vpop.f32.mrb[0].mxu0
        %v2159 = vadd.f32 0.0, %v2158
        %2160 = vmatprep.mubr.f32.mxu0 0.0
        %2161 = vmatmul.mubr.f32.gmra.mrb[0].mxu0 %v1590
        %v2162 = vpop.f32.mrb[0].mxu0
        %v2163 = vadd.f32 0.0, %v2162
        %v2164 = vpop.f32.mrb[0].mxu0
        %v2165 = vadd.f32 0.0, %v2164
        %2166 = vdwg.mxu0
        %2167 = vmatprep.subr.mxu0 %v1577
        %2168 = vmatpush1.msra.mxu0 %v1576
        %2169 = vmatprep.subr.mxu0 0.0
        %2170 = vmatpush1.msra.mxu0 0.0
        %2171 = vmatprep.subr.mxu0 0.0
        %2172 = vmatpush1.msra.mxu0 0.0
        %2173 = vmatprep.subr.mxu0 0.0
        %2174 = vmatpush1.msra.mxu0 0.0
        %2175 = vmatprep.subr.mxu0 0.0
        %2176 = vmatpush1.msra.mxu0 0.0
        %2177 = vmatprep.subr.mxu0 0.0
        %2178 = vmatpush1.msra.mxu0 0.0
        %2179 = vmatprep.subr.mxu0 0.0
        %2180 = vmatpush1.msra.mxu0 0.0
        %2181 = vmatprep.subr.mxu0 0.0
        %2182 = vmatpush1.msra.mxu0 0.0
        %2183 = vmatprep.subr.mxu0 0.0
        %2184 = vmatpush1.msra.mxu0 0.0
        %2185 = vmatprep.subr.mxu0 0.0
        %2186 = vmatpush1.msra.mxu0 0.0
        %2187 = vmatprep.subr.mxu0 0.0
        %2188 = vmatpush1.msra.mxu0 0.0
        %2189 = vmatprep.subr.mxu0 0.0
        %2190 = vmatpush1.msra.mxu0 0.0
        %2191 = vmatprep.subr.mxu0 0.0
        %2192 = vmatpush1.msra.mxu0 0.0
        %2193 = vmatprep.subr.mxu0 0.0
        %2194 = vmatpush1.msra.mxu0 0.0
        %2195 = vmatprep.subr.mxu0 0.0
        %2196 = vmatpush1.msra.mxu0 0.0
        %2197 = vmatprep.subr.mxu0 0.0
        %2198 = vmatpush1.msra.mxu0 0.0
        %2199 = vmatprep.subr.mxu0 0.0
        %2200 = vmatpush1.msra.mxu0 0.0
        %2201 = vmatprep.subr.mxu0 0.0
        %2202 = vmatpush1.msra.mxu0 0.0
        %2203 = vmatprep.subr.mxu0 0.0
        %2204 = vmatpush1.msra.mxu0 0.0
        %2205 = vmatprep.subr.mxu0 0.0
        %2206 = vmatpush1.msra.mxu0 0.0
        %2207 = vmatprep.subr.mxu0 0.0
        %2208 = vmatpush1.msra.mxu0 0.0
        %2209 = vmatprep.subr.mxu0 0.0
        %2210 = vmatpush1.msra.mxu0 0.0
        %2211 = vmatprep.subr.mxu0 0.0
        %2212 = vmatpush1.msra.mxu0 0.0
        %2213 = vmatprep.subr.mxu0 0.0
        %2214 = vmatpush1.msra.mxu0 0.0
        %2215 = vmatprep.subr.mxu0 0.0
        %2216 = vmatpush1.msra.mxu0 0.0
        %2217 = vmatprep.subr.mxu0 0.0
        %2218 = vmatpush1.msra.mxu0 0.0
        %2219 = vmatprep.subr.mxu0 0.0
        %2220 = vmatpush1.msra.mxu0 0.0
        %2221 = vmatprep.subr.mxu0 0.0
        %2222 = vmatpush1.msra.mxu0 0.0
        %2223 = vmatprep.subr.mxu0 0.0
        %2224 = vmatpush1.msra.mxu0 0.0
        %2225 = vmatprep.subr.mxu0 0.0
        %2226 = vmatpush1.msra.mxu0 0.0
        %2227 = vmatprep.subr.mxu0 0.0
        %2228 = vmatpush1.msra.mxu0 0.0
        %2229 = vmatprep.subr.mxu0 0.0
        %2230 = vmatpush1.msra.mxu0 0.0
        %2231 = vmatprep.mubr.f32.mxu0 0.0
        %2232 = vmatmul.mubr.f32.gmra.mrb[0].mxu0 %v1584
        %v2233 = vpop.f32.mrb[0].mxu0
        %v2234 = vadd.f32 0.0, %v2233
        %v2235 = vpop.f32.mrb[0].mxu0
        %v2236 = vadd.f32 0.0, %v2235
        %2237 = vmatprep.mubr.f32.mxu0 0.0
        %2238 = vmatmul.mubr.f32.gmra.mrb[0].mxu0 %v1587
        %v2239 = vpop.f32.mrb[0].mxu0
        %v2240 = vadd.f32 0.0, %v2239
        %v2241 = vpop.f32.mrb[0].mxu0
        %v2242 = vadd.f32 0.0, %v2241
        %2243 = vmatprep.mubr.f32.mxu0 0.0
        %2244 = vmatmul.mubr.f32.gmra.mrb[0].mxu0 %v1590
        %v2245 = vpop.f32.mrb[0].mxu0
        %v2246 = vadd.f32 0.0, %v2245
        %v2247 = vpop.f32.mrb[0].mxu0
        %v2248 = vadd.f32 0.0, %v2247
        %2249 = vdwg.mxu0
        %2250 = vmatprep.subr.mxu0 %v1579
        %2251 = vmatpush1.msra.mxu0 %v1578
        %2252 = vmatprep.subr.mxu0 0.0
        %2253 = vmatpush1.msra.mxu0 0.0
        %2254 = vmatprep.subr.mxu0 0.0
        %2255 = vmatpush1.msra.mxu0 0.0
        %2256 = vmatprep.subr.mxu0 0.0
        %2257 = vmatpush1.msra.mxu0 0.0
        %2258 = vmatprep.subr.mxu0 0.0
        %2259 = vmatpush1.msra.mxu0 0.0
        %2260 = vmatprep.subr.mxu0 0.0
        %2261 = vmatpush1.msra.mxu0 0.0
        %2262 = vmatprep.subr.mxu0 0.0
        %2263 = vmatpush1.msra.mxu0 0.0
        %2264 = vmatprep.subr.mxu0 0.0
        %2265 = vmatpush1.msra.mxu0 0.0
        %2266 = vmatprep.subr.mxu0 0.0
        %2267 = vmatpush1.msra.mxu0 0.0
        %2268 = vmatprep.subr.mxu0 0.0
        %2269 = vmatpush1.msra.mxu0 0.0
        %2270 = vmatprep.subr.mxu0 0.0
        %2271 = vmatpush1.msra.mxu0 0.0
        %2272 = vmatprep.subr.mxu0 0.0
        %2273 = vmatpush1.msra.mxu0 0.0
        %2274 = vmatprep.subr.mxu0 0.0
        %2275 = vmatpush1.msra.mxu0 0.0
        %2276 = vmatprep.subr.mxu0 0.0
        %2277 = vmatpush1.msra.mxu0 0.0
        %2278 = vmatprep.subr.mxu0 0.0
        %2279 = vmatpush1.msra.mxu0 0.0
        %2280 = vmatprep.subr.mxu0 0.0
        %2281 = vmatpush1.msra.mxu0 0.0
        %2282 = vmatprep.subr.mxu0 0.0
        %2283 = vmatpush1.msra.mxu0 0.0
        %2284 = vmatprep.subr.mxu0 0.0
        %2285 = vmatpush1.msra.mxu0 0.0
        %2286 = vmatprep.subr.mxu0 0.0
        %2287 = vmatpush1.msra.mxu0 0.0
        %2288 = vmatprep.subr.mxu0 0.0
        %2289 = vmatpush1.msra.mxu0 0.0
        %2290 = vmatprep.subr.mxu0 0.0
        %2291 = vmatpush1.msra.mxu0 0.0
        %2292 = vmatprep.subr.mxu0 0.0
        %2293 = vmatpush1.msra.mxu0 0.0
        %2294 = vmatprep.subr.mxu0 0.0
        %2295 = vmatpush1.msra.mxu0 0.0
        %2296 = vmatprep.subr.mxu0 0.0
        %2297 = vmatpush1.msra.mxu0 0.0
        %2298 = vmatprep.subr.mxu0 0.0
        %2299 = vmatpush1.msra.mxu0 0.0
        %2300 = vmatprep.subr.mxu0 0.0
        %2301 = vmatpush1.msra.mxu0 0.0
        %2302 = vmatprep.subr.mxu0 0.0
        %2303 = vmatpush1.msra.mxu0 0.0
        %2304 = vmatprep.subr.mxu0 0.0
        %2305 = vmatpush1.msra.mxu0 0.0
        %2306 = vmatprep.subr.mxu0 0.0
        %2307 = vmatpush1.msra.mxu0 0.0
        %2308 = vmatprep.subr.mxu0 0.0
        %2309 = vmatpush1.msra.mxu0 0.0
        %2310 = vmatprep.subr.mxu0 0.0
        %2311 = vmatpush1.msra.mxu0 0.0
        %2312 = vmatprep.subr.mxu0 0.0
        %2313 = vmatpush1.msra.mxu0 0.0
        %2314 = vmatprep.mubr.f32.mxu0 0.0
        %2315 = vmatmul.mubr.f32.gmra.mrb[0].mxu0 %v1584
        %v2316 = vpop.f32.mrb[0].mxu0
        %v2317 = vpop.f32.mrb[0].mxu0
        %2318 = vmatprep.mubr.f32.mxu0 0.0
        %2319 = vmatmul.mubr.f32.gmra.mrb[0].mxu0 %v1587
        %v2320 = vpop.f32.mrb[0].mxu0
        %v2321 = vadd.f32 0.0, %v2320
        %v2322 = vpop.f32.mrb[0].mxu0
        %v2323 = vadd.f32 0.0, %v2322
        %2324 = vmatprep.mubr.f32.mxu0 0.0
        %2325 = vmatmul.mubr.f32.gmra.mrb[0].mxu0 %v1590
        %v2326 = vpop.f32.mrb[0].mxu0
        %v2327 = vadd.f32 0.0, %v2326
        %v2328 = vpop.f32.mrb[0].mxu0
        %v2329 = vadd.f32 0.0, %v2328
        %2330 = vdwg.mxu0
        %2331 = vmatprep.subr.mxu0 %v1581
        %2332 = vmatpush1.msra.mxu0 %v1580
        %2333 = vmatprep.subr.mxu0 0.0
        %2334 = vmatpush1.msra.mxu0 0.0
        %2335 = vmatprep.subr.mxu0 0.0
        %2336 = vmatpush1.msra.mxu0 0.0
        %2337 = vmatprep.subr.mxu0 0.0
        %2338 = vmatpush1.msra.mxu0 0.0
        %2339 = vmatprep.subr.mxu0 0.0
        %2340 = vmatpush1.msra.mxu0 0.0
        %2341 = vmatprep.subr.mxu0 0.0
        %2342 = vmatpush1.msra.mxu0 0.0
        %2343 = vmatprep.subr.mxu0 0.0
        %2344 = vmatpush1.msra.mxu0 0.0
        %2345 = vmatprep.subr.mxu0 0.0
        %2346 = vmatpush1.msra.mxu0 0.0
        %2347 = vmatprep.subr.mxu0 0.0
        %2348 = vmatpush1.msra.mxu0 0.0
        %2349 = vmatprep.subr.mxu0 0.0
        %2350 = vmatpush1.msra.mxu0 0.0
        %2351 = vmatprep.subr.mxu0 0.0
        %2352 = vmatpush1.msra.mxu0 0.0
        %2353 = vmatprep.subr.mxu0 0.0
        %2354 = vmatpush1.msra.mxu0 0.0
        %2355 = vmatprep.subr.mxu0 0.0
        %2356 = vmatpush1.msra.mxu0 0.0
        %2357 = vmatprep.subr.mxu0 0.0
        %2358 = vmatpush1.msra.mxu0 0.0
        %2359 = vmatprep.subr.mxu0 0.0
        %2360 = vmatpush1.msra.mxu0 0.0
        %2361 = vmatprep.subr.mxu0 0.0
        %2362 = vmatpush1.msra.mxu0 0.0
        %2363 = vmatprep.subr.mxu0 0.0
        %2364 = vmatpush1.msra.mxu0 0.0
        %2365 = vmatprep.subr.mxu0 0.0
        %2366 = vmatpush1.msra.mxu0 0.0
        %2367 = vmatprep.subr.mxu0 0.0
        %2368 = vmatpush1.msra.mxu0 0.0
        %2369 = vmatprep.subr.mxu0 0.0
        %2370 = vmatpush1.msra.mxu0 0.0
        %2371 = vmatprep.subr.mxu0 0.0
        %2372 = vmatpush1.msra.mxu0 0.0
        %2373 = vmatprep.subr.mxu0 0.0
        %2374 = vmatpush1.msra.mxu0 0.0
        %2375 = vmatprep.subr.mxu0 0.0
        %2376 = vmatpush1.msra.mxu0 0.0
        %2377 = vmatprep.subr.mxu0 0.0
        %2378 = vmatpush1.msra.mxu0 0.0
        %2379 = vmatprep.subr.mxu0 0.0
        %2380 = vmatpush1.msra.mxu0 0.0
        %2381 = vmatprep.subr.mxu0 0.0
        %2382 = vmatpush1.msra.mxu0 0.0
        %2383 = vmatprep.subr.mxu0 0.0
        %2384 = vmatpush1.msra.mxu0 0.0
        %2385 = vmatprep.subr.mxu0 0.0
        %2386 = vmatpush1.msra.mxu0 0.0
        %2387 = vmatprep.subr.mxu0 0.0
        %2388 = vmatpush1.msra.mxu0 0.0
        %2389 = vmatprep.subr.mxu0 0.0
        %2390 = vmatpush1.msra.mxu0 0.0
        %2391 = vmatprep.subr.mxu0 0.0
        %2392 = vmatpush1.msra.mxu0 0.0
        %2393 = vmatprep.subr.mxu0 0.0
        %2394 = vmatpush1.msra.mxu0 0.0
        %2395 = vmatprep.mubr.f32.mxu0 0.0
        %2396 = vmatmul.mubr.f32.gmra.mrb[0].mxu0 %v1584
        %v2397 = vpop.f32.mrb[0].mxu0
        %v2398 = vpop.f32.mrb[0].mxu0
        %2399 = vmatprep.mubr.f32.mxu0 0.0
        %2400 = vmatmul.mubr.f32.gmra.mrb[0].mxu0 %v1587
        %v2401 = vpop.f32.mrb[0].mxu0
        %v2402 = vpop.f32.mrb[0].mxu0
        %2403 = vmatprep.mubr.f32.mxu0 0.0
        %2404 = vmatmul.mubr.f32.gmra.mrb[0].mxu0 %v1590
        %v2405 = vpop.f32.mrb[0].mxu0
        %v2406 = vadd.f32 0.0, %v2405
        %v2407 = vpop.f32.mrb[0].mxu0
        %v2408 = vadd.f32 0.0, %v2407
        %2409 = vdwg.mxu0
        %v2410 = vadd.f32 %v1659, %v1744
        %v2411 = vadd.f32 %v1661, %v1746
        %v2412 = vadd.f32 %v1738, %v1825
        %v2413 = vadd.f32 %v1740, %v1827
        %v2414 = vadd.f32 %v1819, %v1908
        %v2415 = vadd.f32 %v1821, %v1910
        %v2416 = vadd.f32 %v1902, %v1991
        %v2417 = vadd.f32 %v1904, %v1993
        %v2418 = vadd.f32 %v1985, %v2074
        %v2419 = vadd.f32 %v1987, %v2076
        %v2420 = vadd.f32 %v2068, %v2157
        %v2421 = vadd.f32 %v2070, %v2159
        %v2422 = vadd.f32 %v2151, %v2240
        %v2423 = vadd.f32 %v2153, %v2242
        %v2424 = vadd.f32 %v2234, %v2321
        %v2425 = vadd.f32 %v2236, %v2323
        %v2426 = vadd.f32 %v2410, %v1831
        %v2427 = vadd.f32 %v2411, %v1833
        %v2428 = vadd.f32 %v2412, %v1914
        %v2429 = vadd.f32 %v2413, %v1916
        %v2430 = vadd.f32 %v2414, %v1997
        %v2431 = vadd.f32 %v2415, %v1999
        %v2432 = vadd.f32 %v2416, %v2080
        %v2433 = vadd.f32 %v2417, %v2082
        %v2434 = vadd.f32 %v2418, %v2163
        %v2435 = vadd.f32 %v2419, %v2165
        %v2436 = vadd.f32 %v2420, %v2246
        %v2437 = vadd.f32 %v2421, %v2248
        %v2438 = vadd.f32 %v2422, %v2327
        %v2439 = vadd.f32 %v2423, %v2329
        %v2440 = vadd.f32 %v2424, %v2406
        %v2441 = vadd.f32 %v2425, %v2408
        %v2442 = vld [vmem:[%s5] sm:$0xff]
        %2444 = vset.pattern.permute.xlu0 0
        %2445 = vperm.xlu0 %2444, %v2442
        %v2446 = vpop.permute.xlu0 %2445
        %v2448 = vadd.f32 %v2426, %v2446
        %v2449 = vadd.f32 %v2427, %v2446
        %v2450 = vadd.f32 %v2428, %v2446
        %v2451 = vadd.f32 %v2429, %v2446
        %v2452 = vadd.f32 %v2430, %v2446
        %v2453 = vadd.f32 %v2431, %v2446
        %v2454 = vadd.f32 %v2432, %v2446
        %v2455 = vadd.f32 %v2433, %v2446
        %v2456 = vadd.f32 %v2434, %v2446
        %v2457 = vadd.f32 %v2435, %v2446
        %v2458 = vadd.f32 %v2436, %v2446
        %v2459 = vadd.f32 %v2437, %v2446
        %v2460 = vadd.f32 %v2438, %v2446
        %v2461 = vadd.f32 %v2439, %v2446
        %v2462 = vadd.f32 %v2440, %v2446
        %v2463 = vadd.f32 %v2441, %v2446
        %v2464 = vmax.f32 %v2448, 0.0
        %v2465 = vmax.f32 %v2449, 0.0
        %v2466 = vmax.f32 %v2450, 0.0
        %v2467 = vmax.f32 %v2451, 0.0
        %v2468 = vmax.f32 %v2452, 0.0
        %v2469 = vmax.f32 %v2453, 0.0
        %v2470 = vmax.f32 %v2454, 0.0
        %v2471 = vmax.f32 %v2455, 0.0
        %v2472 = vmax.f32 %v2456, 0.0
        %v2473 = vmax.f32 %v2457, 0.0
        %v2474 = vmax.f32 %v2458, 0.0
        %v2475 = vmax.f32 %v2459, 0.0
        %v2476 = vmax.f32 %v2460, 0.0
        %v2477 = vmax.f32 %v2461, 0.0
        %v2478 = vmax.f32 %v2462, 0.0
        %v2479 = vmax.f32 %v2463, 0.0
        %v2480 = vld [vmem:[%s3] sm:$0xff]
        %v2481 = vld [vmem:[#allocation4] sm:$0xff]
        %v2482 = vld [vmem:[#allocation4 + $0x8] sm:$0xff]
        %v2483 = vld [vmem:[#allocation4 + $0x10] sm:$0xff]
        %v2484 = vld [vmem:[#allocation4 + $0x18] sm:$0xff]
        %v2485 = vld [vmem:[#allocation4 + $0x20] sm:$0xff]
        %v2486 = vld [vmem:[#allocation4 + $0x28] sm:$0xff]
        %v2487 = vld [vmem:[#allocation4 + $0x30] sm:$0xff]
        %v2488 = vld [vmem:[#allocation4 + $0x38] sm:$0xff]
        %v2489 = vld [vmem:[#allocation4 + $0x40] sm:$0xff]
        %v2490 = vld [vmem:[#allocation4 + $0x48] sm:$0xff]
        %v2491 = vld [vmem:[#allocation4 + $0x50] sm:$0xff]
        %v2492 = vld [vmem:[#allocation4 + $0x58] sm:$0xff]
        %v2493 = vld [vmem:[#allocation4 + $0x60] sm:$0xff]
        %v2494 = vld [vmem:[#allocation4 + $0x68] sm:$0xff]
        %v2495 = vld [vmem:[#allocation4 + $0x70] sm:$0xff]
        %v2496 = vld [vmem:[#allocation4 + $0x78] sm:$0xff]
        %v2498 = vsel %vm1582, %v2480, 0
        %2500 = vmatprep.subr.mxu0 %v2465
        %2501 = vmatpush1.msra.mxu0 %v2464
        %2502 = vmatprep.subr.mxu0 0.0
        %2503 = vmatpush1.msra.mxu0 0.0
        %2504 = vmatprep.subr.mxu0 0.0
        %2505 = vmatpush1.msra.mxu0 0.0
        %2506 = vmatprep.subr.mxu0 0.0
        %2507 = vmatpush1.msra.mxu0 0.0
        %2508 = vmatprep.subr.mxu0 0.0
        %2509 = vmatpush1.msra.mxu0 0.0
        %2510 = vmatprep.subr.mxu0 0.0
        %2511 = vmatpush1.msra.mxu0 0.0
        %2512 = vmatprep.subr.mxu0 0.0
        %2513 = vmatpush1.msra.mxu0 0.0
        %2514 = vmatprep.subr.mxu0 0.0
        %2515 = vmatpush1.msra.mxu0 0.0
        %2516 = vmatprep.subr.mxu0 0.0
        %2517 = vmatpush1.msra.mxu0 0.0
        %2518 = vmatprep.subr.mxu0 0.0
        %2519 = vmatpush1.msra.mxu0 0.0
        %2520 = vmatprep.subr.mxu0 0.0
        %2521 = vmatpush1.msra.mxu0 0.0
        %2522 = vmatprep.subr.mxu0 0.0
        %2523 = vmatpush1.msra.mxu0 0.0
        %2524 = vmatprep.subr.mxu0 0.0
        %2525 = vmatpush1.msra.mxu0 0.0
        %2526 = vmatprep.subr.mxu0 0.0
        %2527 = vmatpush1.msra.mxu0 0.0
        %2528 = vmatprep.subr.mxu0 0.0
        %2529 = vmatpush1.msra.mxu0 0.0
        %2530 = vmatprep.subr.mxu0 0.0
        %2531 = vmatpush1.msra.mxu0 0.0
        %2532 = vmatprep.subr.mxu0 0.0
        %2533 = vmatpush1.msra.mxu0 0.0
        %2534 = vmatprep.subr.mxu0 0.0
        %2535 = vmatpush1.msra.mxu0 0.0
        %2536 = vmatprep.subr.mxu0 0.0
        %2537 = vmatpush1.msra.mxu0 0.0
        %2538 = vmatprep.subr.mxu0 0.0
        %2539 = vmatpush1.msra.mxu0 0.0
        %2540 = vmatprep.subr.mxu0 0.0
        %2541 = vmatpush1.msra.mxu0 0.0
        %2542 = vmatprep.subr.mxu0 0.0
        %2543 = vmatpush1.msra.mxu0 0.0
        %2544 = vmatprep.subr.mxu0 0.0
        %2545 = vmatpush1.msra.mxu0 0.0
        %2546 = vmatprep.subr.mxu0 0.0
        %2547 = vmatpush1.msra.mxu0 0.0
        %2548 = vmatprep.subr.mxu0 0.0
        %2549 = vmatpush1.msra.mxu0 0.0
        %2550 = vmatprep.subr.mxu0 0.0
        %2551 = vmatpush1.msra.mxu0 0.0
        %2552 = vmatprep.subr.mxu0 0.0
        %2553 = vmatpush1.msra.mxu0 0.0
        %2554 = vmatprep.subr.mxu0 0.0
        %2555 = vmatpush1.msra.mxu0 0.0
        %2556 = vmatprep.subr.mxu0 0.0
        %2557 = vmatpush1.msra.mxu0 0.0
        %2558 = vmatprep.subr.mxu0 0.0
        %2559 = vmatpush1.msra.mxu0 0.0
        %2560 = vmatprep.subr.mxu0 0.0
        %2561 = vmatpush1.msra.mxu0 0.0
        %2562 = vmatprep.subr.mxu0 0.0
        %2563 = vmatpush1.msra.mxu0 0.0
        %2564 = vmatprep.mubr.f32.mxu0 0.0
        %2565 = vmatmul.mubr.f32.gmra.mrb[0].mxu0 %v2498
        %v2566 = vpop.f32.mrb[0].mxu0
        %v2567 = vadd.f32 %v2481, %v2566
        %v2568 = vpop.f32.mrb[0].mxu0
        %v2569 = vadd.f32 %v2482, %v2568
        %2570 = vdwg.mxu0
        %2571 = vmatprep.subr.mxu0 %v2467
        %2572 = vmatpush1.msra.mxu0 %v2466
        %2573 = vmatprep.subr.mxu0 0.0
        %2574 = vmatpush1.msra.mxu0 0.0
        %2575 = vmatprep.subr.mxu0 0.0
        %2576 = vmatpush1.msra.mxu0 0.0
        %2577 = vmatprep.subr.mxu0 0.0
        %2578 = vmatpush1.msra.mxu0 0.0
        %2579 = vmatprep.subr.mxu0 0.0
        %2580 = vmatpush1.msra.mxu0 0.0
        %2581 = vmatprep.subr.mxu0 0.0
        %2582 = vmatpush1.msra.mxu0 0.0
        %2583 = vmatprep.subr.mxu0 0.0
        %2584 = vmatpush1.msra.mxu0 0.0
        %2585 = vmatprep.subr.mxu0 0.0
        %2586 = vmatpush1.msra.mxu0 0.0
        %2587 = vmatprep.subr.mxu0 0.0
        %2588 = vmatpush1.msra.mxu0 0.0
        %2589 = vmatprep.subr.mxu0 0.0
        %2590 = vmatpush1.msra.mxu0 0.0
        %2591 = vmatprep.subr.mxu0 0.0
        %2592 = vmatpush1.msra.mxu0 0.0
        %2593 = vmatprep.subr.mxu0 0.0
        %2594 = vmatpush1.msra.mxu0 0.0
        %2595 = vmatprep.subr.mxu0 0.0
        %2596 = vmatpush1.msra.mxu0 0.0
        %2597 = vmatprep.subr.mxu0 0.0
        %2598 = vmatpush1.msra.mxu0 0.0
        %2599 = vmatprep.subr.mxu0 0.0
        %2600 = vmatpush1.msra.mxu0 0.0
        %2601 = vmatprep.subr.mxu0 0.0
        %2602 = vmatpush1.msra.mxu0 0.0
        %2603 = vmatprep.subr.mxu0 0.0
        %2604 = vmatpush1.msra.mxu0 0.0
        %2605 = vmatprep.subr.mxu0 0.0
        %2606 = vmatpush1.msra.mxu0 0.0
        %2607 = vmatprep.subr.mxu0 0.0
        %2608 = vmatpush1.msra.mxu0 0.0
        %2609 = vmatprep.subr.mxu0 0.0
        %2610 = vmatpush1.msra.mxu0 0.0
        %2611 = vmatprep.subr.mxu0 0.0
        %2612 = vmatpush1.msra.mxu0 0.0
        %2613 = vmatprep.subr.mxu0 0.0
        %2614 = vmatpush1.msra.mxu0 0.0
        %2615 = vmatprep.subr.mxu0 0.0
        %2616 = vmatpush1.msra.mxu0 0.0
        %2617 = vmatprep.subr.mxu0 0.0
        %2618 = vmatpush1.msra.mxu0 0.0
        %2619 = vmatprep.subr.mxu0 0.0
        %2620 = vmatpush1.msra.mxu0 0.0
        %2621 = vmatprep.subr.mxu0 0.0
        %2622 = vmatpush1.msra.mxu0 0.0
        %2623 = vmatprep.subr.mxu0 0.0
        %2624 = vmatpush1.msra.mxu0 0.0
        %2625 = vmatprep.subr.mxu0 0.0
        %2626 = vmatpush1.msra.mxu0 0.0
        %2627 = vmatprep.subr.mxu0 0.0
        %2628 = vmatpush1.msra.mxu0 0.0
        %2629 = vmatprep.subr.mxu0 0.0
        %2630 = vmatpush1.msra.mxu0 0.0
        %2631 = vmatprep.subr.mxu0 0.0
        %2632 = vmatpush1.msra.mxu0 0.0
        %2633 = vmatprep.subr.mxu0 0.0
        %2634 = vmatpush1.msra.mxu0 0.0
        %2635 = vmatprep.mubr.f32.mxu0 0.0
        %2636 = vmatmul.mubr.f32.gmra.mrb[0].mxu0 %v2498
        %v2637 = vpop.f32.mrb[0].mxu0
        %v2638 = vadd.f32 %v2483, %v2637
        %v2639 = vpop.f32.mrb[0].mxu0
        %v2640 = vadd.f32 %v2484, %v2639
        %2641 = vdwg.mxu0
        %2642 = vmatprep.subr.mxu0 %v2469
        %2643 = vmatpush1.msra.mxu0 %v2468
        %2644 = vmatprep.subr.mxu0 0.0
        %2645 = vmatpush1.msra.mxu0 0.0
        %2646 = vmatprep.subr.mxu0 0.0
        %2647 = vmatpush1.msra.mxu0 0.0
        %2648 = vmatprep.subr.mxu0 0.0
        %2649 = vmatpush1.msra.mxu0 0.0
        %2650 = vmatprep.subr.mxu0 0.0
        %2651 = vmatpush1.msra.mxu0 0.0
        %2652 = vmatprep.subr.mxu0 0.0
        %2653 = vmatpush1.msra.mxu0 0.0
        %2654 = vmatprep.subr.mxu0 0.0
        %2655 = vmatpush1.msra.mxu0 0.0
        %2656 = vmatprep.subr.mxu0 0.0
        %2657 = vmatpush1.msra.mxu0 0.0
        %2658 = vmatprep.subr.mxu0 0.0
        %2659 = vmatpush1.msra.mxu0 0.0
        %2660 = vmatprep.subr.mxu0 0.0
        %2661 = vmatpush1.msra.mxu0 0.0
        %2662 = vmatprep.subr.mxu0 0.0
        %2663 = vmatpush1.msra.mxu0 0.0
        %2664 = vmatprep.subr.mxu0 0.0
        %2665 = vmatpush1.msra.mxu0 0.0
        %2666 = vmatprep.subr.mxu0 0.0
        %2667 = vmatpush1.msra.mxu0 0.0
        %2668 = vmatprep.subr.mxu0 0.0
        %2669 = vmatpush1.msra.mxu0 0.0
        %2670 = vmatprep.subr.mxu0 0.0
        %2671 = vmatpush1.msra.mxu0 0.0
        %2672 = vmatprep.subr.mxu0 0.0
        %2673 = vmatpush1.msra.mxu0 0.0
        %2674 = vmatprep.subr.mxu0 0.0
        %2675 = vmatpush1.msra.mxu0 0.0
        %2676 = vmatprep.subr.mxu0 0.0
        %2677 = vmatpush1.msra.mxu0 0.0
        %2678 = vmatprep.subr.mxu0 0.0
        %2679 = vmatpush1.msra.mxu0 0.0
        %2680 = vmatprep.subr.mxu0 0.0
        %2681 = vmatpush1.msra.mxu0 0.0
        %2682 = vmatprep.subr.mxu0 0.0
        %2683 = vmatpush1.msra.mxu0 0.0
        %2684 = vmatprep.subr.mxu0 0.0
        %2685 = vmatpush1.msra.mxu0 0.0
        %2686 = vmatprep.subr.mxu0 0.0
        %2687 = vmatpush1.msra.mxu0 0.0
        %2688 = vmatprep.subr.mxu0 0.0
        %2689 = vmatpush1.msra.mxu0 0.0
        %2690 = vmatprep.subr.mxu0 0.0
        %2691 = vmatpush1.msra.mxu0 0.0
        %2692 = vmatprep.subr.mxu0 0.0
        %2693 = vmatpush1.msra.mxu0 0.0
        %2694 = vmatprep.subr.mxu0 0.0
        %2695 = vmatpush1.msra.mxu0 0.0
        %2696 = vmatprep.subr.mxu0 0.0
        %2697 = vmatpush1.msra.mxu0 0.0
        %2698 = vmatprep.subr.mxu0 0.0
        %2699 = vmatpush1.msra.mxu0 0.0
        %2700 = vmatprep.subr.mxu0 0.0
        %2701 = vmatpush1.msra.mxu0 0.0
        %2702 = vmatprep.subr.mxu0 0.0
        %2703 = vmatpush1.msra.mxu0 0.0
        %2704 = vmatprep.subr.mxu0 0.0
        %2705 = vmatpush1.msra.mxu0 0.0
        %2706 = vmatprep.mubr.f32.mxu0 0.0
        %2707 = vmatmul.mubr.f32.gmra.mrb[0].mxu0 %v2498
        %v2708 = vpop.f32.mrb[0].mxu0
        %v2709 = vadd.f32 %v2485, %v2708
        %v2710 = vpop.f32.mrb[0].mxu0
        %v2711 = vadd.f32 %v2486, %v2710
        %2712 = vdwg.mxu0
        %2713 = vmatprep.subr.mxu0 %v2471
        %2714 = vmatpush1.msra.mxu0 %v2470
        %2715 = vmatprep.subr.mxu0 0.0
        %2716 = vmatpush1.msra.mxu0 0.0
        %2717 = vmatprep.subr.mxu0 0.0
        %2718 = vmatpush1.msra.mxu0 0.0
        %2719 = vmatprep.subr.mxu0 0.0
        %2720 = vmatpush1.msra.mxu0 0.0
        %2721 = vmatprep.subr.mxu0 0.0
        %2722 = vmatpush1.msra.mxu0 0.0
        %2723 = vmatprep.subr.mxu0 0.0
        %2724 = vmatpush1.msra.mxu0 0.0
        %2725 = vmatprep.subr.mxu0 0.0
        %2726 = vmatpush1.msra.mxu0 0.0
        %2727 = vmatprep.subr.mxu0 0.0
        %2728 = vmatpush1.msra.mxu0 0.0
        %2729 = vmatprep.subr.mxu0 0.0
        %2730 = vmatpush1.msra.mxu0 0.0
        %2731 = vmatprep.subr.mxu0 0.0
        %2732 = vmatpush1.msra.mxu0 0.0
        %2733 = vmatprep.subr.mxu0 0.0
        %2734 = vmatpush1.msra.mxu0 0.0
        %2735 = vmatprep.subr.mxu0 0.0
        %2736 = vmatpush1.msra.mxu0 0.0
        %2737 = vmatprep.subr.mxu0 0.0
        %2738 = vmatpush1.msra.mxu0 0.0
        %2739 = vmatprep.subr.mxu0 0.0
        %2740 = vmatpush1.msra.mxu0 0.0
        %2741 = vmatprep.subr.mxu0 0.0
        %2742 = vmatpush1.msra.mxu0 0.0
        %2743 = vmatprep.subr.mxu0 0.0
        %2744 = vmatpush1.msra.mxu0 0.0
        %2745 = vmatprep.subr.mxu0 0.0
        %2746 = vmatpush1.msra.mxu0 0.0
        %2747 = vmatprep.subr.mxu0 0.0
        %2748 = vmatpush1.msra.mxu0 0.0
        %2749 = vmatprep.subr.mxu0 0.0
        %2750 = vmatpush1.msra.mxu0 0.0
        %2751 = vmatprep.subr.mxu0 0.0
        %2752 = vmatpush1.msra.mxu0 0.0
        %2753 = vmatprep.subr.mxu0 0.0
        %2754 = vmatpush1.msra.mxu0 0.0
        %2755 = vmatprep.subr.mxu0 0.0
        %2756 = vmatpush1.msra.mxu0 0.0
        %2757 = vmatprep.subr.mxu0 0.0
        %2758 = vmatpush1.msra.mxu0 0.0
        %2759 = vmatprep.subr.mxu0 0.0
        %2760 = vmatpush1.msra.mxu0 0.0
        %2761 = vmatprep.subr.mxu0 0.0
        %2762 = vmatpush1.msra.mxu0 0.0
        %2763 = vmatprep.subr.mxu0 0.0
        %2764 = vmatpush1.msra.mxu0 0.0
        %2765 = vmatprep.subr.mxu0 0.0
        %2766 = vmatpush1.msra.mxu0 0.0
        %2767 = vmatprep.subr.mxu0 0.0
        %2768 = vmatpush1.msra.mxu0 0.0
        %2769 = vmatprep.subr.mxu0 0.0
        %2770 = vmatpush1.msra.mxu0 0.0
        %2771 = vmatprep.subr.mxu0 0.0
        %2772 = vmatpush1.msra.mxu0 0.0
        %2773 = vmatprep.subr.mxu0 0.0
        %2774 = vmatpush1.msra.mxu0 0.0
        %2775 = vmatprep.subr.mxu0 0.0
        %2776 = vmatpush1.msra.mxu0 0.0
        %2777 = vmatprep.mubr.f32.mxu0 0.0
        %2778 = vmatmul.mubr.f32.gmra.mrb[0].mxu0 %v2498
        %v2779 = vpop.f32.mrb[0].mxu0
        %v2780 = vadd.f32 %v2487, %v2779
        %v2781 = vpop.f32.mrb[0].mxu0
        %v2782 = vadd.f32 %v2488, %v2781
        %2783 = vdwg.mxu0
        %2784 = vmatprep.subr.mxu0 %v2473
        %2785 = vmatpush1.msra.mxu0 %v2472
        %2786 = vmatprep.subr.mxu0 0.0
        %2787 = vmatpush1.msra.mxu0 0.0
        %2788 = vmatprep.subr.mxu0 0.0
        %2789 = vmatpush1.msra.mxu0 0.0
        %2790 = vmatprep.subr.mxu0 0.0
        %2791 = vmatpush1.msra.mxu0 0.0
        %2792 = vmatprep.subr.mxu0 0.0
        %2793 = vmatpush1.msra.mxu0 0.0
        %2794 = vmatprep.subr.mxu0 0.0
        %2795 = vmatpush1.msra.mxu0 0.0
        %2796 = vmatprep.subr.mxu0 0.0
        %2797 = vmatpush1.msra.mxu0 0.0
        %2798 = vmatprep.subr.mxu0 0.0
        %2799 = vmatpush1.msra.mxu0 0.0
        %2800 = vmatprep.subr.mxu0 0.0
        %2801 = vmatpush1.msra.mxu0 0.0
        %2802 = vmatprep.subr.mxu0 0.0
        %2803 = vmatpush1.msra.mxu0 0.0
        %2804 = vmatprep.subr.mxu0 0.0
        %2805 = vmatpush1.msra.mxu0 0.0
        %2806 = vmatprep.subr.mxu0 0.0
        %2807 = vmatpush1.msra.mxu0 0.0
        %2808 = vmatprep.subr.mxu0 0.0
        %2809 = vmatpush1.msra.mxu0 0.0
        %2810 = vmatprep.subr.mxu0 0.0
        %2811 = vmatpush1.msra.mxu0 0.0
        %2812 = vmatprep.subr.mxu0 0.0
        %2813 = vmatpush1.msra.mxu0 0.0
        %2814 = vmatprep.subr.mxu0 0.0
        %2815 = vmatpush1.msra.mxu0 0.0
        %2816 = vmatprep.subr.mxu0 0.0
        %2817 = vmatpush1.msra.mxu0 0.0
        %2818 = vmatprep.subr.mxu0 0.0
        %2819 = vmatpush1.msra.mxu0 0.0
        %2820 = vmatprep.subr.mxu0 0.0
        %2821 = vmatpush1.msra.mxu0 0.0
        %2822 = vmatprep.subr.mxu0 0.0
        %2823 = vmatpush1.msra.mxu0 0.0
        %2824 = vmatprep.subr.mxu0 0.0
        %2825 = vmatpush1.msra.mxu0 0.0
        %2826 = vmatprep.subr.mxu0 0.0
        %2827 = vmatpush1.msra.mxu0 0.0
        %2828 = vmatprep.subr.mxu0 0.0
        %2829 = vmatpush1.msra.mxu0 0.0
        %2830 = vmatprep.subr.mxu0 0.0
        %2831 = vmatpush1.msra.mxu0 0.0
        %2832 = vmatprep.subr.mxu0 0.0
        %2833 = vmatpush1.msra.mxu0 0.0
        %2834 = vmatprep.subr.mxu0 0.0
        %2835 = vmatpush1.msra.mxu0 0.0
        %2836 = vmatprep.subr.mxu0 0.0
        %2837 = vmatpush1.msra.mxu0 0.0
        %2838 = vmatprep.subr.mxu0 0.0
        %2839 = vmatpush1.msra.mxu0 0.0
        %2840 = vmatprep.subr.mxu0 0.0
        %2841 = vmatpush1.msra.mxu0 0.0
        %2842 = vmatprep.subr.mxu0 0.0
        %2843 = vmatpush1.msra.mxu0 0.0
        %2844 = vmatprep.subr.mxu0 0.0
        %2845 = vmatpush1.msra.mxu0 0.0
        %2846 = vmatprep.subr.mxu0 0.0
        %2847 = vmatpush1.msra.mxu0 0.0
        %2848 = vmatprep.mubr.f32.mxu0 0.0
        %2849 = vmatmul.mubr.f32.gmra.mrb[0].mxu0 %v2498
        %v2850 = vpop.f32.mrb[0].mxu0
        %v2851 = vadd.f32 %v2489, %v2850
        %v2852 = vpop.f32.mrb[0].mxu0
        %v2853 = vadd.f32 %v2490, %v2852
        %2854 = vdwg.mxu0
        %2855 = vmatprep.subr.mxu0 %v2475
        %2856 = vmatpush1.msra.mxu0 %v2474
        %2857 = vmatprep.subr.mxu0 0.0
        %2858 = vmatpush1.msra.mxu0 0.0
        %2859 = vmatprep.subr.mxu0 0.0
        %2860 = vmatpush1.msra.mxu0 0.0
        %2861 = vmatprep.subr.mxu0 0.0
        %2862 = vmatpush1.msra.mxu0 0.0
        %2863 = vmatprep.subr.mxu0 0.0
        %2864 = vmatpush1.msra.mxu0 0.0
        %2865 = vmatprep.subr.mxu0 0.0
        %2866 = vmatpush1.msra.mxu0 0.0
        %2867 = vmatprep.subr.mxu0 0.0
        %2868 = vmatpush1.msra.mxu0 0.0
        %2869 = vmatprep.subr.mxu0 0.0
        %2870 = vmatpush1.msra.mxu0 0.0
        %2871 = vmatprep.subr.mxu0 0.0
        %2872 = vmatpush1.msra.mxu0 0.0
        %2873 = vmatprep.subr.mxu0 0.0
        %2874 = vmatpush1.msra.mxu0 0.0
        %2875 = vmatprep.subr.mxu0 0.0
        %2876 = vmatpush1.msra.mxu0 0.0
        %2877 = vmatprep.subr.mxu0 0.0
        %2878 = vmatpush1.msra.mxu0 0.0
        %2879 = vmatprep.subr.mxu0 0.0
        %2880 = vmatpush1.msra.mxu0 0.0
        %2881 = vmatprep.subr.mxu0 0.0
        %2882 = vmatpush1.msra.mxu0 0.0
        %2883 = vmatprep.subr.mxu0 0.0
        %2884 = vmatpush1.msra.mxu0 0.0
        %2885 = vmatprep.subr.mxu0 0.0
        %2886 = vmatpush1.msra.mxu0 0.0
        %2887 = vmatprep.subr.mxu0 0.0
        %2888 = vmatpush1.msra.mxu0 0.0
        %2889 = vmatprep.subr.mxu0 0.0
        %2890 = vmatpush1.msra.mxu0 0.0
        %2891 = vmatprep.subr.mxu0 0.0
        %2892 = vmatpush1.msra.mxu0 0.0
        %2893 = vmatprep.subr.mxu0 0.0
        %2894 = vmatpush1.msra.mxu0 0.0
        %2895 = vmatprep.subr.mxu0 0.0
        %2896 = vmatpush1.msra.mxu0 0.0
        %2897 = vmatprep.subr.mxu0 0.0
        %2898 = vmatpush1.msra.mxu0 0.0
        %2899 = vmatprep.subr.mxu0 0.0
        %2900 = vmatpush1.msra.mxu0 0.0
        %2901 = vmatprep.subr.mxu0 0.0
        %2902 = vmatpush1.msra.mxu0 0.0
        %2903 = vmatprep.subr.mxu0 0.0
        %2904 = vmatpush1.msra.mxu0 0.0
        %2905 = vmatprep.subr.mxu0 0.0
        %2906 = vmatpush1.msra.mxu0 0.0
        %2907 = vmatprep.subr.mxu0 0.0
        %2908 = vmatpush1.msra.mxu0 0.0
        %2909 = vmatprep.subr.mxu0 0.0
        %2910 = vmatpush1.msra.mxu0 0.0
        %2911 = vmatprep.subr.mxu0 0.0
        %2912 = vmatpush1.msra.mxu0 0.0
        %2913 = vmatprep.subr.mxu0 0.0
        %2914 = vmatpush1.msra.mxu0 0.0
        %2915 = vmatprep.subr.mxu0 0.0
        %2916 = vmatpush1.msra.mxu0 0.0
        %2917 = vmatprep.subr.mxu0 0.0
        %2918 = vmatpush1.msra.mxu0 0.0
        %2919 = vmatprep.mubr.f32.mxu0 0.0
        %2920 = vmatmul.mubr.f32.gmra.mrb[0].mxu0 %v2498
        %v2921 = vpop.f32.mrb[0].mxu0
        %v2922 = vadd.f32 %v2491, %v2921
        %v2923 = vpop.f32.mrb[0].mxu0
        %v2924 = vadd.f32 %v2492, %v2923
        %2925 = vdwg.mxu0
        %2926 = vmatprep.subr.mxu0 %v2477
        %2927 = vmatpush1.msra.mxu0 %v2476
        %2928 = vmatprep.subr.mxu0 0.0
        %2929 = vmatpush1.msra.mxu0 0.0
        %2930 = vmatprep.subr.mxu0 0.0
        %2931 = vmatpush1.msra.mxu0 0.0
        %2932 = vmatprep.subr.mxu0 0.0
        %2933 = vmatpush1.msra.mxu0 0.0
        %2934 = vmatprep.subr.mxu0 0.0
        %2935 = vmatpush1.msra.mxu0 0.0
        %2936 = vmatprep.subr.mxu0 0.0
        %2937 = vmatpush1.msra.mxu0 0.0
        %2938 = vmatprep.subr.mxu0 0.0
        %2939 = vmatpush1.msra.mxu0 0.0
        %2940 = vmatprep.subr.mxu0 0.0
        %2941 = vmatpush1.msra.mxu0 0.0
        %2942 = vmatprep.subr.mxu0 0.0
        %2943 = vmatpush1.msra.mxu0 0.0
        %2944 = vmatprep.subr.mxu0 0.0
        %2945 = vmatpush1.msra.mxu0 0.0
        %2946 = vmatprep.subr.mxu0 0.0
        %2947 = vmatpush1.msra.mxu0 0.0
        %2948 = vmatprep.subr.mxu0 0.0
        %2949 = vmatpush1.msra.mxu0 0.0
        %2950 = vmatprep.subr.mxu0 0.0
        %2951 = vmatpush1.msra.mxu0 0.0
        %2952 = vmatprep.subr.mxu0 0.0
        %2953 = vmatpush1.msra.mxu0 0.0
        %2954 = vmatprep.subr.mxu0 0.0
        %2955 = vmatpush1.msra.mxu0 0.0
        %2956 = vmatprep.subr.mxu0 0.0
        %2957 = vmatpush1.msra.mxu0 0.0
        %2958 = vmatprep.subr.mxu0 0.0
        %2959 = vmatpush1.msra.mxu0 0.0
        %2960 = vmatprep.subr.mxu0 0.0
        %2961 = vmatpush1.msra.mxu0 0.0
        %2962 = vmatprep.subr.mxu0 0.0
        %2963 = vmatpush1.msra.mxu0 0.0
        %2964 = vmatprep.subr.mxu0 0.0
        %2965 = vmatpush1.msra.mxu0 0.0
        %2966 = vmatprep.subr.mxu0 0.0
        %2967 = vmatpush1.msra.mxu0 0.0
        %2968 = vmatprep.subr.mxu0 0.0
        %2969 = vmatpush1.msra.mxu0 0.0
        %2970 = vmatprep.subr.mxu0 0.0
        %2971 = vmatpush1.msra.mxu0 0.0
        %2972 = vmatprep.subr.mxu0 0.0
        %2973 = vmatpush1.msra.mxu0 0.0
        %2974 = vmatprep.subr.mxu0 0.0
        %2975 = vmatpush1.msra.mxu0 0.0
        %2976 = vmatprep.subr.mxu0 0.0
        %2977 = vmatpush1.msra.mxu0 0.0
        %2978 = vmatprep.subr.mxu0 0.0
        %2979 = vmatpush1.msra.mxu0 0.0
        %2980 = vmatprep.subr.mxu0 0.0
        %2981 = vmatpush1.msra.mxu0 0.0
        %2982 = vmatprep.subr.mxu0 0.0
        %2983 = vmatpush1.msra.mxu0 0.0
        %2984 = vmatprep.subr.mxu0 0.0
        %2985 = vmatpush1.msra.mxu0 0.0
        %2986 = vmatprep.subr.mxu0 0.0
        %2987 = vmatpush1.msra.mxu0 0.0
        %2988 = vmatprep.subr.mxu0 0.0
        %2989 = vmatpush1.msra.mxu0 0.0
        %2990 = vmatprep.mubr.f32.mxu0 0.0
        %2991 = vmatmul.mubr.f32.gmra.mrb[0].mxu0 %v2498
        %v2992 = vpop.f32.mrb[0].mxu0
        %v2993 = vadd.f32 %v2493, %v2992
        %v2994 = vpop.f32.mrb[0].mxu0
        %v2995 = vadd.f32 %v2494, %v2994
        %2996 = vdwg.mxu0
        %2997 = vmatprep.subr.mxu0 %v2479
        %2998 = vmatpush1.msra.mxu0 %v2478
        %2999 = vmatprep.subr.mxu0 0.0
        %3000 = vmatpush1.msra.mxu0 0.0
        %3001 = vmatprep.subr.mxu0 0.0
        %3002 = vmatpush1.msra.mxu0 0.0
        %3003 = vmatprep.subr.mxu0 0.0
        %3004 = vmatpush1.msra.mxu0 0.0
        %3005 = vmatprep.subr.mxu0 0.0
        %3006 = vmatpush1.msra.mxu0 0.0
        %3007 = vmatprep.subr.mxu0 0.0
        %3008 = vmatpush1.msra.mxu0 0.0
        %3009 = vmatprep.subr.mxu0 0.0
        %3010 = vmatpush1.msra.mxu0 0.0
        %3011 = vmatprep.subr.mxu0 0.0
        %3012 = vmatpush1.msra.mxu0 0.0
        %3013 = vmatprep.subr.mxu0 0.0
        %3014 = vmatpush1.msra.mxu0 0.0
        %3015 = vmatprep.subr.mxu0 0.0
        %3016 = vmatpush1.msra.mxu0 0.0
        %3017 = vmatprep.subr.mxu0 0.0
        %3018 = vmatpush1.msra.mxu0 0.0
        %3019 = vmatprep.subr.mxu0 0.0
        %3020 = vmatpush1.msra.mxu0 0.0
        %3021 = vmatprep.subr.mxu0 0.0
        %3022 = vmatpush1.msra.mxu0 0.0
        %3023 = vmatprep.subr.mxu0 0.0
        %3024 = vmatpush1.msra.mxu0 0.0
        %3025 = vmatprep.subr.mxu0 0.0
        %3026 = vmatpush1.msra.mxu0 0.0
        %3027 = vmatprep.subr.mxu0 0.0
        %3028 = vmatpush1.msra.mxu0 0.0
        %3029 = vmatprep.subr.mxu0 0.0
        %3030 = vmatpush1.msra.mxu0 0.0
        %3031 = vmatprep.subr.mxu0 0.0
        %3032 = vmatpush1.msra.mxu0 0.0
        %3033 = vmatprep.subr.mxu0 0.0
        %3034 = vmatpush1.msra.mxu0 0.0
        %3035 = vmatprep.subr.mxu0 0.0
        %3036 = vmatpush1.msra.mxu0 0.0
        %3037 = vmatprep.subr.mxu0 0.0
        %3038 = vmatpush1.msra.mxu0 0.0
        %3039 = vmatprep.subr.mxu0 0.0
        %3040 = vmatpush1.msra.mxu0 0.0
        %3041 = vmatprep.subr.mxu0 0.0
        %3042 = vmatpush1.msra.mxu0 0.0
        %3043 = vmatprep.subr.mxu0 0.0
        %3044 = vmatpush1.msra.mxu0 0.0
        %3045 = vmatprep.subr.mxu0 0.0
        %3046 = vmatpush1.msra.mxu0 0.0
        %3047 = vmatprep.subr.mxu0 0.0
        %3048 = vmatpush1.msra.mxu0 0.0
        %3049 = vmatprep.subr.mxu0 0.0
        %3050 = vmatpush1.msra.mxu0 0.0
        %3051 = vmatprep.subr.mxu0 0.0
        %3052 = vmatpush1.msra.mxu0 0.0
        %3053 = vmatprep.subr.mxu0 0.0
        %3054 = vmatpush1.msra.mxu0 0.0
        %3055 = vmatprep.subr.mxu0 0.0
        %3056 = vmatpush1.msra.mxu0 0.0
        %3057 = vmatprep.subr.mxu0 0.0
        %3058 = vmatpush1.msra.mxu0 0.0
        %3059 = vmatprep.subr.mxu0 0.0
        %3060 = vmatpush1.msra.mxu0 0.0
        %3061 = vmatprep.mubr.f32.mxu0 0.0
        %3062 = vmatmul.mubr.f32.gmra.mrb[0].mxu0 %v2498
        %v3063 = vpop.f32.mrb[0].mxu0
        %v3064 = vadd.f32 %v2495, %v3063
        %v3065 = vpop.f32.mrb[0].mxu0
        %v3066 = vadd.f32 %v2496, %v3065
        %3067 = vdwg.mxu0
        %v3068 = vld [vmem:[%s6] sm:$0xff]
        %3070 = vset.pattern.permute.xlu0 0
        %3071 = vperm.xlu0 %3070, %v3068
        %v3072 = vpop.permute.xlu0 %3071
        %v3074 = vadd.f32 %v2567, %v3072
        %v3075 = vadd.f32 %v2569, %v3072
        %v3076 = vadd.f32 %v2638, %v3072
        %v3077 = vadd.f32 %v2640, %v3072
        %v3078 = vadd.f32 %v2709, %v3072
        %v3079 = vadd.f32 %v2711, %v3072
        %v3080 = vadd.f32 %v2780, %v3072
        %v3081 = vadd.f32 %v2782, %v3072
        %v3082 = vadd.f32 %v2851, %v3072
        %v3083 = vadd.f32 %v2853, %v3072
        %v3084 = vadd.f32 %v2922, %v3072
        %v3085 = vadd.f32 %v2924, %v3072
        %v3086 = vadd.f32 %v2993, %v3072
        %v3087 = vadd.f32 %v2995, %v3072
        %v3088 = vadd.f32 %v3064, %v3072
        %v3089 = vadd.f32 %v3066, %v3072
        %v3090 = vmax.f32 %v3074, 0.0
        %v3091 = vmax.f32 %v3075, 0.0
        %v3092 = vmax.f32 %v3076, 0.0
        %v3093 = vmax.f32 %v3077, 0.0
        %v3094 = vmax.f32 %v3078, 0.0
        %v3095 = vmax.f32 %v3079, 0.0
        %v3096 = vmax.f32 %v3080, 0.0
        %v3097 = vmax.f32 %v3081, 0.0
        %v3098 = vmax.f32 %v3082, 0.0
        %v3099 = vmax.f32 %v3083, 0.0
        %v3100 = vmax.f32 %v3084, 0.0
        %v3101 = vmax.f32 %v3085, 0.0
        %v3102 = vmax.f32 %v3086, 0.0
        %v3103 = vmax.f32 %v3087, 0.0
        %v3104 = vmax.f32 %v3088, 0.0
        %v3105 = vmax.f32 %v3089, 0.0
        %3106 = vst [vmem:[%s294] sm:$0xff] %v3090
        %3107 = vst [vmem:[%s294 + $0x8] sm:$0xff] %v3091
        %3108 = vst [vmem:[%s294 + $0x10] sm:$0xff] %v3092
        %3109 = vst [vmem:[%s294 + $0x18] sm:$0xff] %v3093
        %3110 = vst [vmem:[%s294 + $0x20] sm:$0xff] %v3094
        %3111 = vst [vmem:[%s294 + $0x28] sm:$0xff] %v3095
        %3112 = vst [vmem:[%s294 + $0x30] sm:$0xff] %v3096
        %3113 = vst [vmem:[%s294 + $0x38] sm:$0xff] %v3097
        %3114 = vst [vmem:[%s294 + $0x40] sm:$0xff] %v3098
        %3115 = vst [vmem:[%s294 + $0x48] sm:$0xff] %v3099
        %3116 = vst [vmem:[%s294 + $0x50] sm:$0xff] %v3100
        %3117 = vst [vmem:[%s294 + $0x58] sm:$0xff] %v3101
        %3118 = vst [vmem:[%s294 + $0x60] sm:$0xff] %v3102
        %3119 = vst [vmem:[%s294 + $0x68] sm:$0xff] %v3103
        %3120 = vst [vmem:[%s294 + $0x70] sm:$0xff] %v3104
        %3121 = vst [vmem:[%s294 + $0x78] sm:$0xff] %v3105
        %s3122 = sand.u32 %s184, 1
        %s3123 = scalar_lea.sflag [#allocation7], %s3122
        %s3124 = sand.u32 %s184, 1
        %s3125 = smul.addr %s3124, 128
        %s3126 = scalar_lea.vmem [#allocation8], %s3125
        // Predicated region
        $region53: #{tpu_custom_call.1} parent=47 // pred_check
          %p3127 = pneg %p194
        $region54: #{tpu_custom_call.1} parent=47 // pred_check_branch
          %3129 = sbr.rel (%p3127) target = $region56
        $region55: #{tpu_custom_call.1} parent=47 // pred_region
          %s3131 = ssub.s32 2048, 2048
          %3132 = vsyncadd %s3123, %s3131
          %s3133 = smul.addr %s24, 16
          %s3134 = smul.addr %s3133, 128
          %s3135 = scalar_lea.hbm %s7, %s3134
          %s3137 = sshll.u32 %s3126, 4
          %s3138 = int_to_ptr.vmem [resolvable:$true] %s3137
          %3140 = dma.vmem_to_hbm [thread:$0]  %s3138, 2048, %s3135, %s3123
        $region56: #{tpu_custom_call.1} parent=47 // pred_fallthru
          _
      $region48: #{tpu_custom_call.1} parent=5 // pred_fallthru
        _
      %p3141 = scmp.le.s32.totalorder 2, %s19
      // Predicated region
      $region57: #{tpu_custom_call.1} parent=5 // pred_check
        %p3142 = pneg %p3141
      $region58: #{tpu_custom_call.1} parent=5 // pred_check_branch
        %3144 = sbr.rel (%p3142) target = $region60
      $region59: #{tpu_custom_call.1} parent=5 // pred_region
        %s3145 = ssub.s32 %s19, 2
        // Predicated region
        $region61: #{tpu_custom_call.1} parent=59 // pred_check
          %p3146 = pneg %p200
        $region62: #{tpu_custom_call.1} parent=59 // pred_check_branch
          %3148 = sbr.rel (%p3146) target = $region64
        $region63: #{tpu_custom_call.1} parent=59 // pred_region
          %s3149 = sand.u32 %s185, 1
          %s3150 = scalar_lea.sflag [#allocation7], %s3149
          %s3151 = sand.u32 %s185, 1
          %s3152 = smul.addr %s3151, 128
          %s3153 = scalar_lea.vmem [#allocation8], %s3152
          %3154 = dma.done %s3150, 2048
        $region64: #{tpu_custom_call.1} parent=59 // pred_fallthru
          _
      $region60: #{tpu_custom_call.1} parent=5 // pred_fallthru
        _
    $region6: #{tpu_custom_call.1} parent=1 // loop_footer
      %s23 = sadd.s32 1, %s19
    $region7: #{tpu_custom_call.1} parent=1 // loop_footer_branch
      %18 = sbr.rel target = $region3
    $region8: #{tpu_custom_call.1} parent=1 // loop_exit
      _
    %3155 = vsyncpa [#allocation6], 1
    %s3156 = scalar_lea.sflag [#allocation6], 1
    %3157 = vsyncpa %s3156, 1
    %3158 = vsyncpa [#allocation7], 1
    %s3159 = scalar_lea.sflag [#allocation7], 1
    %3160 = vsyncpa %s3159, 1

</llo_original>
